<compile_context>
chip_gen: v7x
topology: tpu7x:2x2x1
jax: 0.10.0
libtpu: 0.0.40
codegen_flags: <defaults>
</compile_context>

<pallas_src>
import math

import jax
import jax.numpy as jnp
import numpy as np
from jax.experimental import pallas as pl
from jax.experimental.pallas import tpu as pltpu

# ---- module hyper-parameters (small, but consistent with the module) ----
NUM_FEATS = 32                   # num_feats  -> pos feature dim = 4*NUM_FEATS = 128
NUM_WORDS = 4                    # num_words
WORD_DIMS = 128                  # word_dims
TEMPERATURE = 1.2
SCALE = 2.0 * math.pi
LN_EPS = 1e-5                    # nn.LayerNorm default

IN_DIM = 4 * NUM_FEATS           # 128
OUT_DIM = NUM_WORDS * WORD_DIMS  # 512


def sine_pos_kernel(x_ref, sd_ref, ph_ref, w1_ref, b1_ref, g_ref, beta_ref,
                    w2_ref, b2_ref, out_ref):
    # x_ref : (TN, 4) f32      sd_ref : (4, IN_DIM) f32 (one-hot scale*dim_t rows)
    # ph_ref: (1, IN_DIM) f32  (pi/2 on odd feature lanes, 0 on even)
    x = x_ref[...]                                          # (TN, 4)

    # angle[n, j] = phase[j] + scale * x[n, j // F] * dim_t[j % F]
    # sd[c, :] is nonzero only on the F lanes belonging to coordinate c, so the
    # 4 broadcast-multiply-adds implement the coordinate replication + dim_t
    # scaling without any per-step iota / compares / selects.
    angle = ph_ref[...] + x[:, 0:1] * sd_ref[0:1, :]
    angle = angle + x[:, 1:2] * sd_ref[1:2, :]
    angle = angle + x[:, 2:3] * sd_ref[2:3, :]
    angle = angle + x[:, 3:4] * sd_ref[3:4, :]

    # even feature lane -> sin, odd -> cos == sin(. + pi/2): single transcendental.
    pos = jnp.sin(angle)                                    # (TN, IN_DIM) f32

    # ---- Linear(4F -> D) on the MXU (bf16 operands, f32 accumulation) ----
    h = jnp.dot(pos.astype(jnp.bfloat16), w1_ref[...],
                preferred_element_type=jnp.float32) + b1_ref[...]

    # ---- LayerNorm(D) ----
    mu = jnp.mean(h, axis=-1, keepdims=True)
    var = jnp.mean(jnp.square(h - mu), axis=-1, keepdims=True)
    hn = (h - mu) * jax.lax.rsqrt(var + LN_EPS)
    hn = hn * g_ref[...] + beta_ref[...]

    # ---- Linear(D -> num_words*D) ----
    out = jnp.dot(hn.astype(jnp.bfloat16), w2_ref[...],
                  preferred_element_type=jnp.float32) + b2_ref[...]
    out_ref[...] = out.astype(out_ref.dtype)


def _lane_constants():
    """Host-side (numpy) lane constants: one-hot scale*dim_t table and phase."""
    f = np.arange(NUM_FEATS, dtype=np.float32)
    dim_t = TEMPERATURE ** (np.floor(f / 2.0) - NUM_FEATS // 4)        # (F,)
    sd = np.zeros((4, IN_DIM), np.float32)
    for c in range(4):
        sd[c, c * NUM_FEATS:(c + 1) * NUM_FEATS] = SCALE * dim_t
    lane_f = np.arange(IN_DIM) % NUM_FEATS
    phase = np.where(lane_f % 2 == 1, np.pi / 2.0, 0.0).astype(np.float32)
    return jnp.asarray(sd), jnp.asarray(phase.reshape(1, IN_DIM))


def sine_positional_encoding(x, w1, b1, gamma, beta, w2, b2, *, tile_n=256):
    assert tile_n % 8 == 0
    N = x.shape[0]
    n_pad = pl.cdiv(N, tile_n) * tile_n
    if n_pad != N:
        x = jnp.pad(x, ((0, n_pad - N), (0, 0)))            # padded rows sliced off below
    grid = (n_pad // tile_n,)

    sd, phase = _lane_constants()
    w1b = w1.astype(jnp.bfloat16)
    w2b = w2.astype(jnp.bfloat16)

    full = lambda i: (0, 0)
    out_flat = pl.pallas_call(
        sine_pos_kernel,
        out_shape=jax.ShapeDtypeStruct((n_pad, OUT_DIM), jnp.float32),
        grid_spec=pltpu.PrefetchScalarGridSpec(
            num_scalar_prefetch=0,
            grid=grid,
            in_specs=[
                pl.BlockSpec((tile_n, 4), lambda i: (i, 0)),          # x tile
                pl.BlockSpec((4, IN_DIM), full),                      # scale*dim_t one-hot
                pl.BlockSpec((1, IN_DIM), full),                      # phase
                pl.BlockSpec((IN_DIM, WORD_DIMS), full),              # W1 (bf16)
                pl.BlockSpec((1, WORD_DIMS), full),                   # b1
                pl.BlockSpec((1, WORD_DIMS), full),                   # LN gamma
                pl.BlockSpec((1, WORD_DIMS), full),                   # LN beta
                pl.BlockSpec((WORD_DIMS, OUT_DIM), full),             # W2 (bf16)
                pl.BlockSpec((1, OUT_DIM), full),                     # b2
            ],
            out_specs=pl.BlockSpec((tile_n, OUT_DIM), lambda i: (i, 0)),
        ),
        compiler_params=pltpu.CompilerParams(dimension_semantics=("parallel",)),
    )(x, sd, phase, w1b, b1, gamma, beta, w2b, b2)

    return out_flat[:N].reshape(N, NUM_WORDS, WORD_DIMS)


def ref_forward(x, w1, b1, gamma, beta, w2, b2):
    """Pure-JAX (f32) reference mirroring the PyTorch forward."""
    embed = x * SCALE
    dim_t = jnp.arange(NUM_FEATS, dtype=jnp.float32)
    dim_t = TEMPERATURE ** (jnp.floor(dim_t / 2.0) - NUM_FEATS // 4)
    pos = embed[:, :, None] * dim_t[None, None]
    idx = jnp.arange(NUM_FEATS)
    pos = jnp.where(idx % 2 == 0, jnp.sin(pos), jnp.cos(pos))
    pos = pos.reshape(-1, IN_DIM)
    h = pos @ w1 + b1
    mu = h.mean(-1, keepdims=True)
    var = ((h - mu) ** 2).mean(-1, keepdims=True)
    h = (h - mu) / jnp.sqrt(var + LN_EPS) * gamma + beta
    out = h @ w2 + b2
    return out.reshape(-1, NUM_WORDS, WORD_DIMS)


if __name__ == "__main__":
    key = jax.random.PRNGKey(0)
    kx, k1, k2, k3, k4, k5, k6 = jax.random.split(key, 7)

    N = 600  # number of boxes (not a tile multiple -> exercises the padded tail)
    x = jax.random.uniform(kx, (N, 4), dtype=jnp.float32)   # normalized box coords

    # deterministic synthetic parameters (pos_proj: Linear -> LayerNorm -> Linear)
    w1 = 0.05 * jax.random.normal(k1, (IN_DIM, WORD_DIMS), dtype=jnp.float32)
    b1 = 0.05 * jax.random.normal(k2, (1, WORD_DIMS), dtype=jnp.float32)
    gamma = 1.0 + 0.05 * jax.random.normal(k3, (1, WORD_DIMS), dtype=jnp.float32)
    beta = 0.05 * jax.random.normal(k4, (1, WORD_DIMS), dtype=jnp.float32)
    w2 = 0.05 * jax.random.normal(k5, (WORD_DIMS, OUT_DIM), dtype=jnp.float32)
    b2 = 0.05 * jax.random.normal(k6, (1, OUT_DIM), dtype=jnp.float32)

    out = sine_positional_encoding(x, w1, b1, gamma, beta, w2, b2, tile_n=256)
    out = jax.block_until_ready(out)

    ref = jax.block_until_ready(ref_forward(x, w1, b1, gamma, beta, w2, b2))
    # Tolerance covers the bf16 MXU operand path (f32 accumulation).
    np.testing.assert_allclose(np.asarray(out), np.asarray(ref), rtol=3e-2, atol=3e-2)
    assert out.shape == (N, NUM_WORDS, WORD_DIMS)

    print("KERNEL_OK")
</pallas_src>

<mosaic_0001>
module attributes {stable_mosaic.version = 11 : i64} {
  func.func @sine_pos_kernel(%arg0: i32, %arg1: memref<256x4xf32, #tpu.memory_space<vmem>>, %arg2: memref<4x128xf32, #tpu.memory_space<vmem>>, %arg3: memref<1x128xf32, #tpu.memory_space<vmem>>, %arg4: memref<128x128xbf16, #tpu.memory_space<vmem>>, %arg5: memref<1x128xf32, #tpu.memory_space<vmem>>, %arg6: memref<1x128xf32, #tpu.memory_space<vmem>>, %arg7: memref<1x128xf32, #tpu.memory_space<vmem>>, %arg8: memref<128x512xbf16, #tpu.memory_space<vmem>>, %arg9: memref<1x512xf32, #tpu.memory_space<vmem>>, %arg10: memref<256x512xf32, #tpu.memory_space<vmem>>) attributes {dimension_semantics = [#tpu.dimension_semantics<parallel>], iteration_bounds = array<i64: 3>, scalar_prefetch = 0 : i64, scratch_operands = 0 : i64, tpu.core_type = #tpu.core_type<tc>, window_params = [{transform_indices = @transform_0, window_bounds = array<i64: 256, 4>}, {pipeline_mode = #tpu.pipeline_mode<synchronous>, transform_indices = @transform_1, window_bounds = array<i64: 4, 128>}, {pipeline_mode = #tpu.pipeline_mode<synchronous>, transform_indices = @transform_2, window_bounds = array<i64: 1, 128>}, {pipeline_mode = #tpu.pipeline_mode<synchronous>, transform_indices = @transform_3, window_bounds = array<i64: 128, 128>}, {pipeline_mode = #tpu.pipeline_mode<synchronous>, transform_indices = @transform_4, window_bounds = array<i64: 1, 128>}, {pipeline_mode = #tpu.pipeline_mode<synchronous>, transform_indices = @transform_5, window_bounds = array<i64: 1, 128>}, {pipeline_mode = #tpu.pipeline_mode<synchronous>, transform_indices = @transform_6, window_bounds = array<i64: 1, 128>}, {pipeline_mode = #tpu.pipeline_mode<synchronous>, transform_indices = @transform_7, window_bounds = array<i64: 128, 512>}, {pipeline_mode = #tpu.pipeline_mode<synchronous>, transform_indices = @transform_8, window_bounds = array<i64: 1, 512>}, {transform_indices = @transform_9, window_bounds = array<i64: 256, 512>}]} {
    %c0 = arith.constant 0 : index
    %c0_0 = arith.constant 0 : index
    %0 = vector.load %arg1[%c0, %c0_0] : memref<256x4xf32, #tpu.memory_space<vmem>>, vector<256x4xf32>
    %c0_1 = arith.constant 0 : index
    %c0_2 = arith.constant 0 : index
    %1 = vector.load %arg3[%c0_1, %c0_2] : memref<1x128xf32, #tpu.memory_space<vmem>>, vector<1x128xf32>
    %2 = vector.extract_strided_slice %0 {offsets = [0, 0], sizes = [256, 1], strides = [1, 1]} : vector<256x4xf32> to vector<256x1xf32>
    %c0_3 = arith.constant 0 : index
    %c0_4 = arith.constant 0 : index
    %3 = vector.load %arg2[%c0_3, %c0_4] : memref<4x128xf32, #tpu.memory_space<vmem>>, vector<1x128xf32>
    %4 = vector.broadcast %2 : vector<256x1xf32> to vector<256x128xf32>
    %5 = vector.broadcast %3 : vector<1x128xf32> to vector<256x128xf32>
    %6 = arith.mulf %4, %5 : vector<256x128xf32>
    %7 = vector.broadcast %1 : vector<1x128xf32> to vector<256x128xf32>
    %8 = arith.addf %7, %6 : vector<256x128xf32>
    %9 = vector.extract_strided_slice %0 {offsets = [0, 1], sizes = [256, 1], strides = [1, 1]} : vector<256x4xf32> to vector<256x1xf32>
    %c1 = arith.constant 1 : index
    %c0_5 = arith.constant 0 : index
    %10 = vector.load %arg2[%c1, %c0_5] : memref<4x128xf32, #tpu.memory_space<vmem>>, vector<1x128xf32>
    %11 = vector.broadcast %9 : vector<256x1xf32> to vector<256x128xf32>
    %12 = vector.broadcast %10 : vector<1x128xf32> to vector<256x128xf32>
    %13 = arith.mulf %11, %12 : vector<256x128xf32>
    %14 = arith.addf %8, %13 : vector<256x128xf32>
    %15 = vector.extract_strided_slice %0 {offsets = [0, 2], sizes = [256, 1], strides = [1, 1]} : vector<256x4xf32> to vector<256x1xf32>
    %c2 = arith.constant 2 : index
    %c0_6 = arith.constant 0 : index
    %16 = vector.load %arg2[%c2, %c0_6] : memref<4x128xf32, #tpu.memory_space<vmem>>, vector<1x128xf32>
    %17 = vector.broadcast %15 : vector<256x1xf32> to vector<256x128xf32>
    %18 = vector.broadcast %16 : vector<1x128xf32> to vector<256x128xf32>
    %19 = arith.mulf %17, %18 : vector<256x128xf32>
    %20 = arith.addf %14, %19 : vector<256x128xf32>
    %21 = vector.extract_strided_slice %0 {offsets = [0, 3], sizes = [256, 1], strides = [1, 1]} : vector<256x4xf32> to vector<256x1xf32>
    %c3 = arith.constant 3 : index
    %c0_7 = arith.constant 0 : index
    %22 = vector.load %arg2[%c3, %c0_7] : memref<4x128xf32, #tpu.memory_space<vmem>>, vector<1x128xf32>
    %23 = vector.broadcast %21 : vector<256x1xf32> to vector<256x128xf32>
    %24 = vector.broadcast %22 : vector<1x128xf32> to vector<256x128xf32>
    %25 = arith.mulf %23, %24 : vector<256x128xf32>
    %26 = arith.addf %20, %25 : vector<256x128xf32>
    %27 = math.sin %26 : vector<256x128xf32>
    %28 = arith.truncf %27 : vector<256x128xf32> to vector<256x128xbf16>
    %c0_8 = arith.constant 0 : index
    %c0_9 = arith.constant 0 : index
    %29 = vector.load %arg4[%c0_8, %c0_9] : memref<128x128xbf16, #tpu.memory_space<vmem>>, vector<128x128xbf16>
    %cst = arith.constant dense<0.000000e+00> : vector<256x128xf32>
    %30 = tpu.matmul %28, %29, %cst {dimension_numbers = #tpu.dot_dimension_numbers<[1], [0], [0], [1], [0, 0, 1, 1], [], []>} : vector<256x128xbf16>, vector<128x128xbf16>, vector<256x128xf32> -> vector<256x128xf32>
    %c0_10 = arith.constant 0 : index
    %c0_11 = arith.constant 0 : index
    %31 = vector.load %arg5[%c0_10, %c0_11] : memref<1x128xf32, #tpu.memory_space<vmem>>, vector<1x128xf32>
    %32 = vector.broadcast %31 : vector<1x128xf32> to vector<256x128xf32>
    %33 = arith.addf %30, %32 : vector<256x128xf32>
    %cst_12 = arith.constant dense<0.000000e+00> : vector<256xf32>
    %34 = vector.multi_reduction <add>, %33, %cst_12 [1] : vector<256x128xf32> to vector<256xf32>
    %35 = vector.shape_cast %34 : vector<256xf32> to vector<256x1xf32>
    %cst_13 = arith.constant 1.280000e+02 : f32
    %36 = vector.broadcast %cst_13 : f32 to vector<256x1xf32>
    %37 = arith.divf %35, %36 : vector<256x1xf32>
    %38 = vector.broadcast %37 : vector<256x1xf32> to vector<256x128xf32>
    %39 = arith.subf %33, %38 : vector<256x128xf32>
    %40 = arith.mulf %39, %39 : vector<256x128xf32>
    %cst_14 = arith.constant dense<0.000000e+00> : vector<256xf32>
    %41 = vector.multi_reduction <add>, %40, %cst_14 [1] : vector<256x128xf32> to vector<256xf32>
    %42 = vector.shape_cast %41 : vector<256xf32> to vector<256x1xf32>
    %cst_15 = arith.constant 1.280000e+02 : f32
    %43 = vector.broadcast %cst_15 : f32 to vector<256x1xf32>
    %44 = arith.divf %42, %43 : vector<256x1xf32>
    %45 = vector.broadcast %37 : vector<256x1xf32> to vector<256x128xf32>
    %46 = arith.subf %33, %45 : vector<256x128xf32>
    %cst_16 = arith.constant 9.99999974E-6 : f32
    %47 = vector.broadcast %cst_16 : f32 to vector<256x1xf32>
    %48 = arith.addf %44, %47 : vector<256x1xf32>
    %49 = math.rsqrt %48 : vector<256x1xf32>
    %50 = vector.broadcast %49 : vector<256x1xf32> to vector<256x128xf32>
    %51 = arith.mulf %46, %50 : vector<256x128xf32>
    %c0_17 = arith.constant 0 : index
    %c0_18 = arith.constant 0 : index
    %52 = vector.load %arg6[%c0_17, %c0_18] : memref<1x128xf32, #tpu.memory_space<vmem>>, vector<1x128xf32>
    %53 = vector.broadcast %52 : vector<1x128xf32> to vector<256x128xf32>
    %54 = arith.mulf %51, %53 : vector<256x128xf32>
    %c0_19 = arith.constant 0 : index
    %c0_20 = arith.constant 0 : index
    %55 = vector.load %arg7[%c0_19, %c0_20] : memref<1x128xf32, #tpu.memory_space<vmem>>, vector<1x128xf32>
    %56 = vector.broadcast %55 : vector<1x128xf32> to vector<256x128xf32>
    %57 = arith.addf %54, %56 : vector<256x128xf32>
    %58 = arith.truncf %57 : vector<256x128xf32> to vector<256x128xbf16>
    %c0_21 = arith.constant 0 : index
    %c0_22 = arith.constant 0 : index
    %59 = vector.load %arg8[%c0_21, %c0_22] : memref<128x512xbf16, #tpu.memory_space<vmem>>, vector<128x512xbf16>
    %cst_23 = arith.constant dense<0.000000e+00> : vector<256x512xf32>
    %60 = tpu.matmul %58, %59, %cst_23 {dimension_numbers = #tpu.dot_dimension_numbers<[1], [0], [0], [1], [0, 0, 1, 1], [], []>} : vector<256x128xbf16>, vector<128x512xbf16>, vector<256x512xf32> -> vector<256x512xf32>
    %c0_24 = arith.constant 0 : index
    %c0_25 = arith.constant 0 : index
    %61 = vector.load %arg9[%c0_24, %c0_25] : memref<1x512xf32, #tpu.memory_space<vmem>>, vector<1x512xf32>
    %62 = vector.broadcast %61 : vector<1x512xf32> to vector<256x512xf32>
    %63 = arith.addf %60, %62 : vector<256x512xf32>
    %c0_26 = arith.constant 0 : index
    %c0_27 = arith.constant 0 : index
    %64 = vector.load %arg10[%c0_26, %c0_27] : memref<256x512xf32, #tpu.memory_space<vmem>>, vector<256x512xf32>
    tpu.vector_store %arg10[%c0_26, %c0_27], %63 {strides = array<i32>} : memref<256x512xf32, #tpu.memory_space<vmem>>, vector<256x512xf32>,
    return
  }
  func.func @transform_0(%arg0: i32) -> (i32, i32) {
    %c0_i32 = arith.constant 0 : i32
    %c0_i32_0 = arith.constant 0 : i32
    return %arg0, %c0_i32 : i32, i32
  }
  func.func @transform_1(%arg0: i32) -> (i32, i32) {
    %c0_i32 = arith.constant 0 : i32
    %c0_i32_0 = arith.constant 0 : i32
    %c0_i32_1 = arith.constant 0 : i32
    return %c0_i32, %c0_i32_0 : i32, i32
  }
  func.func @transform_2(%arg0: i32) -> (i32, i32) {
    %c0_i32 = arith.constant 0 : i32
    %c0_i32_0 = arith.constant 0 : i32
    %c0_i32_1 = arith.constant 0 : i32
    return %c0_i32, %c0_i32_0 : i32, i32
  }
  func.func @transform_3(%arg0: i32) -> (i32, i32) {
    %c0_i32 = arith.constant 0 : i32
    %c0_i32_0 = arith.constant 0 : i32
    %c0_i32_1 = arith.constant 0 : i32
    return %c0_i32, %c0_i32_0 : i32, i32
  }
  func.func @transform_4(%arg0: i32) -> (i32, i32) {
    %c0_i32 = arith.constant 0 : i32
    %c0_i32_0 = arith.constant 0 : i32
    %c0_i32_1 = arith.constant 0 : i32
    return %c0_i32, %c0_i32_0 : i32, i32
  }
  func.func @transform_5(%arg0: i32) -> (i32, i32) {
    %c0_i32 = arith.constant 0 : i32
    %c0_i32_0 = arith.constant 0 : i32
    %c0_i32_1 = arith.constant 0 : i32
    return %c0_i32, %c0_i32_0 : i32, i32
  }
  func.func @transform_6(%arg0: i32) -> (i32, i32) {
    %c0_i32 = arith.constant 0 : i32
    %c0_i32_0 = arith.constant 0 : i32
    %c0_i32_1 = arith.constant 0 : i32
    return %c0_i32, %c0_i32_0 : i32, i32
  }
  func.func @transform_7(%arg0: i32) -> (i32, i32) {
    %c0_i32 = arith.constant 0 : i32
    %c0_i32_0 = arith.constant 0 : i32
    %c0_i32_1 = arith.constant 0 : i32
    return %c0_i32, %c0_i32_0 : i32, i32
  }
  func.func @transform_8(%arg0: i32) -> (i32, i32) {
    %c0_i32 = arith.constant 0 : i32
    %c0_i32_0 = arith.constant 0 : i32
    %c0_i32_1 = arith.constant 0 : i32
    return %c0_i32, %c0_i32_0 : i32, i32
  }
  func.func @transform_9(%arg0: i32) -> (i32, i32) {
    %c0_i32 = arith.constant 0 : i32
    %c0_i32_0 = arith.constant 0 : i32
    return %arg0, %c0_i32 : i32, i32
  }
}

</mosaic_0001>

<llo_original>
// kernel: tpu_custom_call.1
$region0: #{tpu_custom_call.1}
  #allocation0 [shape = 'u32[]', space=smem, size = 0x4, offset = 0x4, fixed_abs, tag = 'smem constant byte address 0x4 - core index']
  #allocation1 [shape = 'u32[144,128]{1,0:T(1,128)}', space=vmem, size = 0x12000, scoped, tag = 'internal scratch']
  %s0 = inlined_call_operand.vmem [shape: f32[768,4], index: 0, kind: input, shape index: {}]
  %s1 = inlined_call_operand.hbm [shape: f32[4,128], index: 1, kind: input, shape index: {}]
  %s2 = inlined_call_operand.hbm [shape: f32[1,128], index: 2, kind: input, shape index: {}]
  %s3 = inlined_call_operand.hbm [shape: bf16[128,128], index: 3, kind: input, shape index: {}]
  %s4 = inlined_call_operand.hbm [shape: f32[1,128], index: 4, kind: input, shape index: {}]
  %s5 = inlined_call_operand.hbm [shape: f32[1,128], index: 5, kind: input, shape index: {}]
  %s6 = inlined_call_operand.hbm [shape: f32[1,128], index: 6, kind: input, shape index: {}]
  %s7 = inlined_call_operand.hbm [shape: bf16[128,512], index: 7, kind: input, shape index: {}]
  %s8 = inlined_call_operand.hbm [shape: f32[1,512], index: 8, kind: input, shape index: {}]
  %s9 = inlined_call_operand.hbm [shape: f32[768,512], index: 9, kind: output, shape index: {}]
  %s10 = sld [smem:[#allocation0]]
  $region101: #{tpu_custom_call.1} parent=0
    _
  %s12 = ssub.s32 1, %s10
  %s13 = scalar_select 0, %s12, %s10
  $region1: #{tpu_custom_call.1} parent=0
    #allocation2 [shape = 'u8[2048]{0}', space=vmem, size = 0x800, scoped, tag = 'input window, operand 1, single buffered']
    #allocation3 [shape = 's32[2]{0}', space=sflag, size = 0x8, scoped, tag = 'scoped memory for tpu_custom_call.1']
    #allocation4 [shape = 's32[2]{0}', space=sflag, size = 0x8, scoped, tag = 'scoped memory for tpu_custom_call.1']
    #allocation5 [shape = 'u8[512]{0}', space=vmem, size = 0x400, scoped, tag = 'input window, operand 2, single buffered']
    #allocation6 [shape = 's32[1]{0}', space=sflag, size = 0x4, scoped, tag = 'scoped memory for tpu_custom_call.1']
    #allocation7 [shape = 'u8[32768]{0}', space=vmem, size = 0x8000, scoped, tag = 'input window, operand 3, single buffered']
    #allocation8 [shape = 'u8[512]{0}', space=vmem, size = 0x400, scoped, tag = 'input window, operand 4, single buffered']
    #allocation9 [shape = 's32[1]{0}', space=sflag, size = 0x4, scoped, tag = 'scoped memory for tpu_custom_call.1']
    #allocation10 [shape = 'u8[512]{0}', space=vmem, size = 0x400, scoped, tag = 'input window, operand 5, single buffered']
    #allocation11 [shape = 'u8[512]{0}', space=vmem, size = 0x400, scoped, tag = 'input window, operand 6, single buffered']
    #allocation12 [shape = 's32[1]{0}', space=sflag, size = 0x4, scoped, tag = 'scoped memory for tpu_custom_call.1']
    #allocation13 [shape = 'u8[131072]{0}', space=vmem, size = 0x20000, scoped, tag = 'input window, operand 7, single buffered']
    #allocation14 [shape = 'u8[2048]{0}', space=vmem, size = 0x800, scoped, tag = 'input window, operand 8, single buffered']
    #allocation15 [shape = 's32[1]{0}', space=sflag, size = 0x4, scoped, tag = 'scoped memory for tpu_custom_call.1']
    #allocation16 [shape = 'u8[1048576]{0}', space=vmem, size = 0x100000, scoped, tag = 'output window, operand 0']
    %14 = vsyncpa [#allocation3], 0
    %15 = vsyncpa [#allocation6], 0
    %16 = vsyncpa [#allocation9], 0
    %17 = vsyncpa [#allocation12], 0
    %18 = vsyncpa [#allocation15], 0
    %19 = vsyncpa [#allocation4], 0
    %s20 = scalar_lea.sflag [#allocation4], 1
    %21 = vsyncpa %s20, 0
    loop: start=0, step=1, limit=5
    $region2: #{tpu_custom_call.1} parent=1 // loop_pre_header
      _
    $region3: #{tpu_custom_call.1} parent=1 // loop_header
      %s23 = sphi 0, %s27
      %p24 = scmp.ge.s32.totalorder %s23, 5
      %s33 = sphi 0, %s35
      %s36 = sphi 0, %s33
      %s37 = sphi 0, %s36
      %s53 = sphi 0, %s37
      %s57 = sphi 0, %s57
      %s59 = sphi 0, %s57
      %s60 = sphi 0, %s59
      %s74 = sphi 0, %s60
      %s78 = sphi 0, %s78
      %s80 = sphi 0, %s78
      %s81 = sphi 0, %s80
      %s95 = sphi 0, %s81
      %s99 = sphi 0, %s99
      %s101 = sphi 0, %s99
      %s102 = sphi 0, %s101
      %s116 = sphi 0, %s102
      %s120 = sphi 0, %s120
      %s122 = sphi 0, %s120
      %s123 = sphi 0, %s122
      %s137 = sphi 0, %s123
      %s141 = sphi 0, %s141
      %s143 = sphi 0, %s141
      %s144 = sphi 0, %s143
      %s158 = sphi 0, %s144
      %s162 = sphi 0, %s162
      %s164 = sphi 0, %s162
      %s165 = sphi 0, %s164
      %s179 = sphi 0, %s165
      %s183 = sphi 0, %s183
      %s185 = sphi 0, %s183
      %s186 = sphi 0, %s185
      %s200 = sphi 0, %s186
      %s204 = sphi 0, %s204
      %s206 = sphi 0, %s204
      %s207 = sphi 0, %s206
      %s221 = sphi 0, %s207
      %s227 = sphi 0, %s229
      %s230 = sphi 0, %s227
      %s231 = sphi 0, %s230
      %s247 = sphi 0, %s231
    $region4: #{tpu_custom_call.1} parent=1 // loop_header_branch
      %26 = sbr.rel (%p24) target = $region8
    $region5: #{tpu_custom_call.1} parent=1 // loop_body
      %s28 = ssub.s32 %s23, 1
      %s29 = ssub.s32 %s23, 2
      %s30 = sadd.s32 %s23, 1
      %s31 = ssub.s32 %s23, %s30
      %p32 = scmp.eq.s32.totalorder %s31, 0
      %s34 = sadd.s32 %s33, 1
      %s35 = scalar_select %p32, %s33, %s34
      %p38 = pneg %p32
      %p39 = scmp.eq.s32.totalorder %s23, 2
      %p40 = por %p38, %p39
      %p41 = scmp.ne.s32.totalorder %s33, %s36
      %p42 = scmp.eq.s32.totalorder %s23, 0
      %p43 = por %p41, %p42
      %p44 = scmp.ne.s32.totalorder %s33, %s36
      %p45 = scmp.eq.s32.totalorder %s28, 2
      %p46 = por %p44, %p45
      %p47 = scmp.ne.s32.totalorder %s36, %s37
      %p48 = scmp.eq.s32.totalorder %s28, 0
      %p49 = por %p47, %p48
      %p50 = scmp.ne.s32.totalorder %s36, %s37
      %p51 = scmp.eq.s32.totalorder %s29, 2
      %p52 = por %p50, %p51
      %p54 = scmp.ne.s32.totalorder %s37, %s53
      %p55 = scmp.eq.s32.totalorder %s29, 0
      %p56 = por %p54, %p55
      %s58 = sadd.s32 %s57, 1
      %p61 = scmp.eq.s32.totalorder %s23, 2
      %p62 = scmp.ne.s32.totalorder %s57, %s59
      %p63 = scmp.eq.s32.totalorder %s23, 0
      %p64 = por %p62, %p63
      %p65 = scmp.ne.s32.totalorder %s57, %s59
      %p66 = scmp.eq.s32.totalorder %s28, 2
      %p67 = por %p65, %p66
      %p68 = scmp.ne.s32.totalorder %s59, %s60
      %p69 = scmp.eq.s32.totalorder %s28, 0
      %p70 = por %p68, %p69
      %p71 = scmp.ne.s32.totalorder %s59, %s60
      %p72 = scmp.eq.s32.totalorder %s29, 2
      %p73 = por %p71, %p72
      %p75 = scmp.ne.s32.totalorder %s60, %s74
      %p76 = scmp.eq.s32.totalorder %s29, 0
      %p77 = por %p75, %p76
      %s79 = sadd.s32 %s78, 1
      %p82 = scmp.eq.s32.totalorder %s23, 2
      %p83 = scmp.ne.s32.totalorder %s78, %s80
      %p84 = scmp.eq.s32.totalorder %s23, 0
      %p85 = por %p83, %p84
      %p86 = scmp.ne.s32.totalorder %s78, %s80
      %p87 = scmp.eq.s32.totalorder %s28, 2
      %p88 = por %p86, %p87
      %p89 = scmp.ne.s32.totalorder %s80, %s81
      %p90 = scmp.eq.s32.totalorder %s28, 0
      %p91 = por %p89, %p90
      %p92 = scmp.ne.s32.totalorder %s80, %s81
      %p93 = scmp.eq.s32.totalorder %s29, 2
      %p94 = por %p92, %p93
      %p96 = scmp.ne.s32.totalorder %s81, %s95
      %p97 = scmp.eq.s32.totalorder %s29, 0
      %p98 = por %p96, %p97
      %s100 = sadd.s32 %s99, 1
      %p103 = scmp.eq.s32.totalorder %s23, 2
      %p104 = scmp.ne.s32.totalorder %s99, %s101
      %p105 = scmp.eq.s32.totalorder %s23, 0
      %p106 = por %p104, %p105
      %p107 = scmp.ne.s32.totalorder %s99, %s101
      %p108 = scmp.eq.s32.totalorder %s28, 2
      %p109 = por %p107, %p108
      %p110 = scmp.ne.s32.totalorder %s101, %s102
      %p111 = scmp.eq.s32.totalorder %s28, 0
      %p112 = por %p110, %p111
      %p113 = scmp.ne.s32.totalorder %s101, %s102
      %p114 = scmp.eq.s32.totalorder %s29, 2
      %p115 = por %p113, %p114
      %p117 = scmp.ne.s32.totalorder %s102, %s116
      %p118 = scmp.eq.s32.totalorder %s29, 0
      %p119 = por %p117, %p118
      %s121 = sadd.s32 %s120, 1
      %p124 = scmp.eq.s32.totalorder %s23, 2
      %p125 = scmp.ne.s32.totalorder %s120, %s122
      %p126 = scmp.eq.s32.totalorder %s23, 0
      %p127 = por %p125, %p126
      %p128 = scmp.ne.s32.totalorder %s120, %s122
      %p129 = scmp.eq.s32.totalorder %s28, 2
      %p130 = por %p128, %p129
      %p131 = scmp.ne.s32.totalorder %s122, %s123
      %p132 = scmp.eq.s32.totalorder %s28, 0
      %p133 = por %p131, %p132
      %p134 = scmp.ne.s32.totalorder %s122, %s123
      %p135 = scmp.eq.s32.totalorder %s29, 2
      %p136 = por %p134, %p135
      %p138 = scmp.ne.s32.totalorder %s123, %s137
      %p139 = scmp.eq.s32.totalorder %s29, 0
      %p140 = por %p138, %p139
      %s142 = sadd.s32 %s141, 1
      %p145 = scmp.eq.s32.totalorder %s23, 2
      %p146 = scmp.ne.s32.totalorder %s141, %s143
      %p147 = scmp.eq.s32.totalorder %s23, 0
      %p148 = por %p146, %p147
      %p149 = scmp.ne.s32.totalorder %s141, %s143
      %p150 = scmp.eq.s32.totalorder %s28, 2
      %p151 = por %p149, %p150
      %p152 = scmp.ne.s32.totalorder %s143, %s144
      %p153 = scmp.eq.s32.totalorder %s28, 0
      %p154 = por %p152, %p153
      %p155 = scmp.ne.s32.totalorder %s143, %s144
      %p156 = scmp.eq.s32.totalorder %s29, 2
      %p157 = por %p155, %p156
      %p159 = scmp.ne.s32.totalorder %s144, %s158
      %p160 = scmp.eq.s32.totalorder %s29, 0
      %p161 = por %p159, %p160
      %s163 = sadd.s32 %s162, 1
      %p166 = scmp.eq.s32.totalorder %s23, 2
      %p167 = scmp.ne.s32.totalorder %s162, %s164
      %p168 = scmp.eq.s32.totalorder %s23, 0
      %p169 = por %p167, %p168
      %p170 = scmp.ne.s32.totalorder %s162, %s164
      %p171 = scmp.eq.s32.totalorder %s28, 2
      %p172 = por %p170, %p171
      %p173 = scmp.ne.s32.totalorder %s164, %s165
      %p174 = scmp.eq.s32.totalorder %s28, 0
      %p175 = por %p173, %p174
      %p176 = scmp.ne.s32.totalorder %s164, %s165
      %p177 = scmp.eq.s32.totalorder %s29, 2
      %p178 = por %p176, %p177
      %p180 = scmp.ne.s32.totalorder %s165, %s179
      %p181 = scmp.eq.s32.totalorder %s29, 0
      %p182 = por %p180, %p181
      %s184 = sadd.s32 %s183, 1
      %p187 = scmp.eq.s32.totalorder %s23, 2
      %p188 = scmp.ne.s32.totalorder %s183, %s185
      %p189 = scmp.eq.s32.totalorder %s23, 0
      %p190 = por %p188, %p189
      %p191 = scmp.ne.s32.totalorder %s183, %s185
      %p192 = scmp.eq.s32.totalorder %s28, 2
      %p193 = por %p191, %p192
      %p194 = scmp.ne.s32.totalorder %s185, %s186
      %p195 = scmp.eq.s32.totalorder %s28, 0
      %p196 = por %p194, %p195
      %p197 = scmp.ne.s32.totalorder %s185, %s186
      %p198 = scmp.eq.s32.totalorder %s29, 2
      %p199 = por %p197, %p198
      %p201 = scmp.ne.s32.totalorder %s186, %s200
      %p202 = scmp.eq.s32.totalorder %s29, 0
      %p203 = por %p201, %p202
      %s205 = sadd.s32 %s204, 1
      %p208 = scmp.eq.s32.totalorder %s23, 2
      %p209 = scmp.ne.s32.totalorder %s204, %s206
      %p210 = scmp.eq.s32.totalorder %s23, 0
      %p211 = por %p209, %p210
      %p212 = scmp.ne.s32.totalorder %s204, %s206
      %p213 = scmp.eq.s32.totalorder %s28, 2
      %p214 = por %p212, %p213
      %p215 = scmp.ne.s32.totalorder %s206, %s207
      %p216 = scmp.eq.s32.totalorder %s28, 0
      %p217 = por %p215, %p216
      %p218 = scmp.ne.s32.totalorder %s206, %s207
      %p219 = scmp.eq.s32.totalorder %s29, 2
      %p220 = por %p218, %p219
      %p222 = scmp.ne.s32.totalorder %s207, %s221
      %p223 = scmp.eq.s32.totalorder %s29, 0
      %p224 = por %p222, %p223
      %s225 = ssub.s32 %s23, %s30
      %p226 = scmp.eq.s32.totalorder %s225, 0
      %s228 = sadd.s32 %s227, 1
      %s229 = scalar_select %p226, %s227, %s228
      %p232 = pneg %p226
      %p233 = scmp.eq.s32.totalorder %s23, 2
      %p234 = por %p232, %p233
      %p235 = scmp.ne.s32.totalorder %s227, %s230
      %p236 = scmp.eq.s32.totalorder %s23, 0
      %p237 = por %p235, %p236
      %p238 = scmp.ne.s32.totalorder %s227, %s230
      %p239 = scmp.eq.s32.totalorder %s28, 2
      %p240 = por %p238, %p239
      %p241 = scmp.ne.s32.totalorder %s230, %s231
      %p242 = scmp.eq.s32.totalorder %s28, 0
      %p243 = por %p241, %p242
      %p244 = scmp.ne.s32.totalorder %s230, %s231
      %p245 = scmp.eq.s32.totalorder %s29, 2
      %p246 = por %p244, %p245
      %p248 = scmp.ne.s32.totalorder %s231, %s247
      %p249 = scmp.eq.s32.totalorder %s29, 0
      %p250 = por %p248, %p249
      %p251 = scmp.le.s32.totalorder 1, %s23
      %p252 = scmp.lt.s32.totalorder %s23, 4
      %p253 = pnand %p251, %p252
      %p254 = pneg %p253
      // Predicated region
      $region9: #{tpu_custom_call.1} parent=5 // pred_check
        _
      $region10: #{tpu_custom_call.1} parent=5 // pred_check_branch
        %256 = sbr.rel (%p253) target = $region12
      $region11: #{tpu_custom_call.1} parent=5 // pred_region
        %s257 = ssub.s32 %s23, 1
        // Predicated region
        $region13: #{tpu_custom_call.1} parent=11 // pred_check
          %p258 = pneg %p70
        $region14: #{tpu_custom_call.1} parent=11 // pred_check_branch
          %260 = sbr.rel (%p258) target = $region16
        $region15: #{tpu_custom_call.1} parent=11 // pred_region
          %s262 = ssub.s32 64, 64
          %263 = vsyncadd [#allocation3], %s262
          %s265 = sshll.u32 [#allocation2], 4
          %s266 = int_to_ptr.vmem [resolvable:$true] %s265
          %268 = dma.hbm_to_vmem [thread:$0]  %s1, 64, %s266, [#allocation3]
        $region16: #{tpu_custom_call.1} parent=11 // pred_fallthru
          _
        // Predicated region
        $region17: #{tpu_custom_call.1} parent=11 // pred_check
          %p269 = pneg %p91
        $region18: #{tpu_custom_call.1} parent=11 // pred_check_branch
          %271 = sbr.rel (%p269) target = $region20
        $region19: #{tpu_custom_call.1} parent=11 // pred_region
          %s273 = ssub.s32 16, 16
          %274 = vsyncadd [#allocation6], %s273
          %s276 = sshll.u32 [#allocation5], 4
          %s277 = int_to_ptr.vmem [resolvable:$true] %s276
          %279 = dma.hbm_to_vmem [thread:$0]  %s2, 16, %s277, [#allocation6]
        $region20: #{tpu_custom_call.1} parent=11 // pred_fallthru
          _
        // Predicated region
        $region21: #{tpu_custom_call.1} parent=11 // pred_check
          %p280 = pneg %p112
        $region22: #{tpu_custom_call.1} parent=11 // pred_check_branch
          %282 = sbr.rel (%p280) target = $region24
        $region23: #{tpu_custom_call.1} parent=11 // pred_region
          %s284 = ssub.s32 1024, 1024
          %285 = vsyncadd [#allocation6], %s284
          %s286 = sshll.u32 [#allocation7], 4
          %s287 = int_to_ptr.vmem [resolvable:$true] %s286
          %292 = dma.hbm_to_vmem [thread:$0]  %s3, 1024, %s287, [#allocation6], 64, 64, 4
        $region24: #{tpu_custom_call.1} parent=11 // pred_fallthru
          _
        // Predicated region
        $region25: #{tpu_custom_call.1} parent=11 // pred_check
          %p293 = pneg %p133
        $region26: #{tpu_custom_call.1} parent=11 // pred_check_branch
          %295 = sbr.rel (%p293) target = $region28
        $region27: #{tpu_custom_call.1} parent=11 // pred_region
          %s297 = ssub.s32 16, 16
          %298 = vsyncadd [#allocation9], %s297
          %s300 = sshll.u32 [#allocation8], 4
          %s301 = int_to_ptr.vmem [resolvable:$true] %s300
          %303 = dma.hbm_to_vmem [thread:$0]  %s4, 16, %s301, [#allocation9]
        $region28: #{tpu_custom_call.1} parent=11 // pred_fallthru
          _
        // Predicated region
        $region29: #{tpu_custom_call.1} parent=11 // pred_check
          %p304 = pneg %p154
        $region30: #{tpu_custom_call.1} parent=11 // pred_check_branch
          %306 = sbr.rel (%p304) target = $region32
        $region31: #{tpu_custom_call.1} parent=11 // pred_region
          %s308 = ssub.s32 16, 16
          %309 = vsyncadd [#allocation9], %s308
          %s311 = sshll.u32 [#allocation10], 4
          %s312 = int_to_ptr.vmem [resolvable:$true] %s311
          %314 = dma.hbm_to_vmem [thread:$0]  %s5, 16, %s312, [#allocation9]
        $region32: #{tpu_custom_call.1} parent=11 // pred_fallthru
          _
        // Predicated region
        $region33: #{tpu_custom_call.1} parent=11 // pred_check
          %p315 = pneg %p175
        $region34: #{tpu_custom_call.1} parent=11 // pred_check_branch
          %317 = sbr.rel (%p315) target = $region36
        $region35: #{tpu_custom_call.1} parent=11 // pred_region
          %s319 = ssub.s32 16, 16
          %320 = vsyncadd [#allocation12], %s319
          %s322 = sshll.u32 [#allocation11], 4
          %s323 = int_to_ptr.vmem [resolvable:$true] %s322
          %325 = dma.hbm_to_vmem [thread:$0]  %s6, 16, %s323, [#allocation12]
        $region36: #{tpu_custom_call.1} parent=11 // pred_fallthru
          _
        // Predicated region
        $region37: #{tpu_custom_call.1} parent=11 // pred_check
          %p326 = pneg %p196
        $region38: #{tpu_custom_call.1} parent=11 // pred_check_branch
          %328 = sbr.rel (%p326) target = $region40
        $region39: #{tpu_custom_call.1} parent=11 // pred_region
          %s330 = ssub.s32 4096, 4096
          %331 = vsyncadd [#allocation12], %s330
          %s332 = sshll.u32 [#allocation13], 4
          %s333 = int_to_ptr.vmem [resolvable:$true] %s332
          %338 = dma.hbm_to_vmem [thread:$0]  %s7, 4096, %s333, [#allocation12], 256, 256, 16
        $region40: #{tpu_custom_call.1} parent=11 // pred_fallthru
          _
        // Predicated region
        $region41: #{tpu_custom_call.1} parent=11 // pred_check
          %p339 = pneg %p217
        $region42: #{tpu_custom_call.1} parent=11 // pred_check_branch
          %341 = sbr.rel (%p339) target = $region44
        $region43: #{tpu_custom_call.1} parent=11 // pred_region
          %s343 = ssub.s32 64, 64
          %344 = vsyncadd [#allocation15], %s343
          %s346 = sshll.u32 [#allocation14], 4
          %s347 = int_to_ptr.vmem [resolvable:$true] %s346
          %349 = dma.hbm_to_vmem [thread:$0]  %s8, 64, %s347, [#allocation15]
        $region44: #{tpu_custom_call.1} parent=11 // pred_fallthru
          _
      $region12: #{tpu_custom_call.1} parent=5 // pred_fallthru
        _
      %p350 = scmp.lt.s32.totalorder %s23, 3
      // Predicated region
      $region45: #{tpu_custom_call.1} parent=5 // pred_check
        %p351 = pneg %p350
      $region46: #{tpu_custom_call.1} parent=5 // pred_check_branch
        %353 = sbr.rel (%p351) target = $region48
      $region47: #{tpu_custom_call.1} parent=5 // pred_region
        // Predicated region
        $region49: #{tpu_custom_call.1} parent=47 // pred_check
          %p354 = pneg %p43
        $region50: #{tpu_custom_call.1} parent=47 // pred_check_branch
          %356 = sbr.rel (%p354) target = $region52
        $region51: #{tpu_custom_call.1} parent=47 // pred_region
          %s357 = smul.u32 32, %s23
          %p358 = scmp.lt.s32.totalorder %s357, 95
          %s359 = scalar_select %p358, %s357, 95
          %s360 = smul.addr %s359, 8
          %s361 = scalar_lea.vmem %s0, %s360
          %s362 = smul.u32 32, %s23
        $region52: #{tpu_custom_call.1} parent=47 // pred_fallthru
          _
      $region48: #{tpu_custom_call.1} parent=5 // pred_fallthru
        _
      %p363 = scmp.le.s32.totalorder 1, %s23
      %p364 = scmp.lt.s32.totalorder %s23, 4
      %p365 = pnand %p363, %p364
      %p366 = pneg %p365
      // Predicated region
      $region53: #{tpu_custom_call.1} parent=5 // pred_check
        _
      $region54: #{tpu_custom_call.1} parent=5 // pred_check_branch
        %368 = sbr.rel (%p365) target = $region56
      $region55: #{tpu_custom_call.1} parent=5 // pred_region
        %s369 = ssub.s32 %s23, 1
        // Predicated region
        $region57: #{tpu_custom_call.1} parent=55 // pred_check
          %p370 = pneg %p70
        $region58: #{tpu_custom_call.1} parent=55 // pred_check_branch
          %372 = sbr.rel (%p370) target = $region60
        $region59: #{tpu_custom_call.1} parent=55 // pred_region
          %373 = dma.done [#allocation3], 64
        $region60: #{tpu_custom_call.1} parent=55 // pred_fallthru
          _
        // Predicated region
        $region61: #{tpu_custom_call.1} parent=55 // pred_check
          %p374 = pneg %p91
        $region62: #{tpu_custom_call.1} parent=55 // pred_check_branch
          %376 = sbr.rel (%p374) target = $region64
        $region63: #{tpu_custom_call.1} parent=55 // pred_region
          %377 = dma.done [#allocation6], 16
        $region64: #{tpu_custom_call.1} parent=55 // pred_fallthru
          _
        // Predicated region
        $region65: #{tpu_custom_call.1} parent=55 // pred_check
          %p378 = pneg %p112
        $region66: #{tpu_custom_call.1} parent=55 // pred_check_branch
          %380 = sbr.rel (%p378) target = $region68
        $region67: #{tpu_custom_call.1} parent=55 // pred_region
          %381 = dma.done [#allocation6], 1024
        $region68: #{tpu_custom_call.1} parent=55 // pred_fallthru
          _
        // Predicated region
        $region69: #{tpu_custom_call.1} parent=55 // pred_check
          %p382 = pneg %p133
        $region70: #{tpu_custom_call.1} parent=55 // pred_check_branch
          %384 = sbr.rel (%p382) target = $region72
        $region71: #{tpu_custom_call.1} parent=55 // pred_region
          %385 = dma.done [#allocation9], 16
        $region72: #{tpu_custom_call.1} parent=55 // pred_fallthru
          _
        // Predicated region
        $region73: #{tpu_custom_call.1} parent=55 // pred_check
          %p386 = pneg %p154
        $region74: #{tpu_custom_call.1} parent=55 // pred_check_branch
          %388 = sbr.rel (%p386) target = $region76
        $region75: #{tpu_custom_call.1} parent=55 // pred_region
          %389 = dma.done [#allocation9], 16
        $region76: #{tpu_custom_call.1} parent=55 // pred_fallthru
          _
        // Predicated region
        $region77: #{tpu_custom_call.1} parent=55 // pred_check
          %p390 = pneg %p175
        $region78: #{tpu_custom_call.1} parent=55 // pred_check_branch
          %392 = sbr.rel (%p390) target = $region80
        $region79: #{tpu_custom_call.1} parent=55 // pred_region
          %393 = dma.done [#allocation12], 16
        $region80: #{tpu_custom_call.1} parent=55 // pred_fallthru
          _
        // Predicated region
        $region81: #{tpu_custom_call.1} parent=55 // pred_check
          %p394 = pneg %p196
        $region82: #{tpu_custom_call.1} parent=55 // pred_check_branch
          %396 = sbr.rel (%p394) target = $region84
        $region83: #{tpu_custom_call.1} parent=55 // pred_region
          %397 = dma.done [#allocation12], 4096
        $region84: #{tpu_custom_call.1} parent=55 // pred_fallthru
          _
        // Predicated region
        $region85: #{tpu_custom_call.1} parent=55 // pred_check
          %p398 = pneg %p217
        $region86: #{tpu_custom_call.1} parent=55 // pred_check_branch
          %400 = sbr.rel (%p398) target = $region88
        $region87: #{tpu_custom_call.1} parent=55 // pred_region
          %401 = dma.done [#allocation15], 64
        $region88: #{tpu_custom_call.1} parent=55 // pred_fallthru
          _
        %s402 = smul.u32 32, %s28
        %p403 = scmp.lt.s32.totalorder %s402, 95
        %s404 = scalar_select %p403, %s402, 95
        %s405 = smul.addr %s404, 8
        %s406 = scalar_lea.vmem %s0, %s405
        %p407 = pneg %p49
        %p408 = pneg %p46
        %p409 = pneg %p70
        %p410 = pneg %p67
        %p411 = pneg %p91
        %p412 = pneg %p88
        %p413 = pneg %p112
        %p414 = pneg %p109
        %p415 = pneg %p133
        %p416 = pneg %p130
        %p417 = pneg %p154
        %p418 = pneg %p151
        %p419 = pneg %p175
        %p420 = pneg %p172
        %p421 = pneg %p196
        %p422 = pneg %p193
        %p423 = pneg %p217
        %p424 = pneg %p214
        %p425 = pneg %p243
        %p426 = pneg %p240
        %s427 = sand.u32 %s230, 1
        %s428 = scalar_lea.sflag [#allocation4], %s427
        %s429 = sand.u32 %s230, 1
        %s430 = smul.addr %s429, 1024
        %s431 = scalar_lea.vmem [#allocation16], %s430
        %s432 = smul.u32 32, %s28
        %p433 = scmp.lt.s32.totalorder %s432, 95
        %s434 = scalar_select %p433, %s432, 95
        %s435 = smul.addr %s434, 8
        %s436 = scalar_lea.vmem %s0, %s435
        %s437 = smul.u32 32, %s28
        %s438 = smul.u32 32, %s28
        %v440 = vld [vmem:[%s436] sm:$0xff]
        %v441 = vld [vmem:[%s436 + $0x8] sm:$0xff]
        %v442 = vld [vmem:[%s436 + $0x10] sm:$0xff]
        %v443 = vld [vmem:[%s436 + $0x18] sm:$0xff]
        %v444 = vld [vmem:[%s436 + $0x20] sm:$0xff]
        %v445 = vld [vmem:[%s436 + $0x28] sm:$0xff]
        %v446 = vld [vmem:[%s436 + $0x30] sm:$0xff]
        %v447 = vld [vmem:[%s436 + $0x38] sm:$0xff]
        %v448 = vld [vmem:[%s436 + $0x40] sm:$0xff]
        %v449 = vld [vmem:[%s436 + $0x48] sm:$0xff]
        %v450 = vld [vmem:[%s436 + $0x50] sm:$0xff]
        %v451 = vld [vmem:[%s436 + $0x58] sm:$0xff]
        %v452 = vld [vmem:[%s436 + $0x60] sm:$0xff]
        %v453 = vld [vmem:[%s436 + $0x68] sm:$0xff]
        %v454 = vld [vmem:[%s436 + $0x70] sm:$0xff]
        %v455 = vld [vmem:[%s436 + $0x78] sm:$0xff]
        %v456 = vld [vmem:[%s436 + $0x80] sm:$0xff]
        %v457 = vld [vmem:[%s436 + $0x88] sm:$0xff]
        %v458 = vld [vmem:[%s436 + $0x90] sm:$0xff]
        %v459 = vld [vmem:[%s436 + $0x98] sm:$0xff]
        %v460 = vld [vmem:[%s436 + $0xa0] sm:$0xff]
        %v461 = vld [vmem:[%s436 + $0xa8] sm:$0xff]
        %v462 = vld [vmem:[%s436 + $0xb0] sm:$0xff]
        %v463 = vld [vmem:[%s436 + $0xb8] sm:$0xff]
        %v464 = vld [vmem:[%s436 + $0xc0] sm:$0xff]
        %v465 = vld [vmem:[%s436 + $0xc8] sm:$0xff]
        %v466 = vld [vmem:[%s436 + $0xd0] sm:$0xff]
        %v467 = vld [vmem:[%s436 + $0xd8] sm:$0xff]
        %v468 = vld [vmem:[%s436 + $0xe0] sm:$0xff]
        %v469 = vld [vmem:[%s436 + $0xe8] sm:$0xff]
        %v470 = vld [vmem:[%s436 + $0xf0] sm:$0xff]
        %v471 = vld [vmem:[%s436 + $0xf8] sm:$0xff]
        %v472 = vld [vmem:[#allocation5] sm:$0x1]
        %v473 = vld [vmem:[#allocation2] sm:$0x1]
        %475 = vset.pattern.permute.xlu0 0
        %476 = vperm.xlu0 %475, %v440
        %v477 = vpop.permute.xlu0 %476
        %480 = vset.pattern.permute.xlu0 0
        %481 = vperm.xlu0 %480, %v441
        %v482 = vpop.permute.xlu0 %481
        %485 = vset.pattern.permute.xlu0 0
        %486 = vperm.xlu0 %485, %v442
        %v487 = vpop.permute.xlu0 %486
        %490 = vset.pattern.permute.xlu0 0
        %491 = vperm.xlu0 %490, %v443
        %v492 = vpop.permute.xlu0 %491
        %495 = vset.pattern.permute.xlu0 0
        %496 = vperm.xlu0 %495, %v444
        %v497 = vpop.permute.xlu0 %496
        %500 = vset.pattern.permute.xlu0 0
        %501 = vperm.xlu0 %500, %v445
        %v502 = vpop.permute.xlu0 %501
        %505 = vset.pattern.permute.xlu0 0
        %506 = vperm.xlu0 %505, %v446
        %v507 = vpop.permute.xlu0 %506
        %510 = vset.pattern.permute.xlu0 0
        %511 = vperm.xlu0 %510, %v447
        %v512 = vpop.permute.xlu0 %511
        %515 = vset.pattern.permute.xlu0 0
        %516 = vperm.xlu0 %515, %v448
        %v517 = vpop.permute.xlu0 %516
        %520 = vset.pattern.permute.xlu0 0
        %521 = vperm.xlu0 %520, %v449
        %v522 = vpop.permute.xlu0 %521
        %525 = vset.pattern.permute.xlu0 0
        %526 = vperm.xlu0 %525, %v450
        %v527 = vpop.permute.xlu0 %526
        %530 = vset.pattern.permute.xlu0 0
        %531 = vperm.xlu0 %530, %v451
        %v532 = vpop.permute.xlu0 %531
        %535 = vset.pattern.permute.xlu0 0
        %536 = vperm.xlu0 %535, %v452
        %v537 = vpop.permute.xlu0 %536
        %540 = vset.pattern.permute.xlu0 0
        %541 = vperm.xlu0 %540, %v453
        %v542 = vpop.permute.xlu0 %541
        %545 = vset.pattern.permute.xlu0 0
        %546 = vperm.xlu0 %545, %v454
        %v547 = vpop.permute.xlu0 %546
        %550 = vset.pattern.permute.xlu0 0
        %551 = vperm.xlu0 %550, %v455
        %v552 = vpop.permute.xlu0 %551
        %555 = vset.pattern.permute.xlu0 0
        %556 = vperm.xlu0 %555, %v456
        %v557 = vpop.permute.xlu0 %556
        %560 = vset.pattern.permute.xlu0 0
        %561 = vperm.xlu0 %560, %v457
        %v562 = vpop.permute.xlu0 %561
        %565 = vset.pattern.permute.xlu0 0
        %566 = vperm.xlu0 %565, %v458
        %v567 = vpop.permute.xlu0 %566
        %570 = vset.pattern.permute.xlu0 0
        %571 = vperm.xlu0 %570, %v459
        %v572 = vpop.permute.xlu0 %571
        %575 = vset.pattern.permute.xlu0 0
        %576 = vperm.xlu0 %575, %v460
        %v577 = vpop.permute.xlu0 %576
        %580 = vset.pattern.permute.xlu0 0
        %581 = vperm.xlu0 %580, %v461
        %v582 = vpop.permute.xlu0 %581
        %585 = vset.pattern.permute.xlu0 0
        %586 = vperm.xlu0 %585, %v462
        %v587 = vpop.permute.xlu0 %586
        %590 = vset.pattern.permute.xlu0 0
        %591 = vperm.xlu0 %590, %v463
        %v592 = vpop.permute.xlu0 %591
        %595 = vset.pattern.permute.xlu0 0
        %596 = vperm.xlu0 %595, %v464
        %v597 = vpop.permute.xlu0 %596
        %600 = vset.pattern.permute.xlu0 0
        %601 = vperm.xlu0 %600, %v465
        %v602 = vpop.permute.xlu0 %601
        %605 = vset.pattern.permute.xlu0 0
        %606 = vperm.xlu0 %605, %v466
        %v607 = vpop.permute.xlu0 %606
        %610 = vset.pattern.permute.xlu0 0
        %611 = vperm.xlu0 %610, %v467
        %v612 = vpop.permute.xlu0 %611
        %615 = vset.pattern.permute.xlu0 0
        %616 = vperm.xlu0 %615, %v468
        %v617 = vpop.permute.xlu0 %616
        %620 = vset.pattern.permute.xlu0 0
        %621 = vperm.xlu0 %620, %v469
        %v622 = vpop.permute.xlu0 %621
        %625 = vset.pattern.permute.xlu0 0
        %626 = vperm.xlu0 %625, %v470
        %v627 = vpop.permute.xlu0 %626
        %630 = vset.pattern.permute.xlu0 0
        %631 = vperm.xlu0 %630, %v471
        %v632 = vpop.permute.xlu0 %631
        %v634 = vlaneseq
        %v635 = vshrl.u32 %v634, 7
        %v636 = vsub.s32 0, %v635
        %v637 = vrot.slane %v473, %v636
        %v638 = vmul.f32 %v477, %v637
        %v639 = vmul.f32 %v482, %v637
        %v640 = vmul.f32 %v487, %v637
        %v641 = vmul.f32 %v492, %v637
        %v642 = vmul.f32 %v497, %v637
        %v643 = vmul.f32 %v502, %v637
        %v644 = vmul.f32 %v507, %v637
        %v645 = vmul.f32 %v512, %v637
        %v646 = vmul.f32 %v517, %v637
        %v647 = vmul.f32 %v522, %v637
        %v648 = vmul.f32 %v527, %v637
        %v649 = vmul.f32 %v532, %v637
        %v650 = vmul.f32 %v537, %v637
        %v651 = vmul.f32 %v542, %v637
        %v652 = vmul.f32 %v547, %v637
        %v653 = vmul.f32 %v552, %v637
        %v654 = vmul.f32 %v557, %v637
        %v655 = vmul.f32 %v562, %v637
        %v656 = vmul.f32 %v567, %v637
        %v657 = vmul.f32 %v572, %v637
        %v658 = vmul.f32 %v577, %v637
        %v659 = vmul.f32 %v582, %v637
        %v660 = vmul.f32 %v587, %v637
        %v661 = vmul.f32 %v592, %v637
        %v662 = vmul.f32 %v597, %v637
        %v663 = vmul.f32 %v602, %v637
        %v664 = vmul.f32 %v607, %v637
        %v665 = vmul.f32 %v612, %v637
        %v666 = vmul.f32 %v617, %v637
        %v667 = vmul.f32 %v622, %v637
        %v668 = vmul.f32 %v627, %v637
        %v669 = vmul.f32 %v632, %v637
        %v671 = vlaneseq
        %v672 = vshrl.u32 %v671, 7
        %v673 = vsub.s32 0, %v672
        %v674 = vrot.slane %v472, %v673
        %v676 = vadd.f32 %v674, %v638
        %v677 = vadd.f32 %v674, %v639
        %v678 = vadd.f32 %v674, %v640
        %v679 = vadd.f32 %v674, %v641
        %v680 = vadd.f32 %v674, %v642
        %v681 = vadd.f32 %v674, %v643
        %v682 = vadd.f32 %v674, %v644
        %v683 = vadd.f32 %v674, %v645
        %v684 = vadd.f32 %v674, %v646
        %v685 = vadd.f32 %v674, %v647
        %v686 = vadd.f32 %v674, %v648
        %v687 = vadd.f32 %v674, %v649
        %v688 = vadd.f32 %v674, %v650
        %v689 = vadd.f32 %v674, %v651
        %v690 = vadd.f32 %v674, %v652
        %v691 = vadd.f32 %v674, %v653
        %v692 = vadd.f32 %v674, %v654
        %v693 = vadd.f32 %v674, %v655
        %v694 = vadd.f32 %v674, %v656
        %v695 = vadd.f32 %v674, %v657
        %v696 = vadd.f32 %v674, %v658
        %v697 = vadd.f32 %v674, %v659
        %v698 = vadd.f32 %v674, %v660
        %v699 = vadd.f32 %v674, %v661
        %v700 = vadd.f32 %v674, %v662
        %v701 = vadd.f32 %v674, %v663
        %v702 = vadd.f32 %v674, %v664
        %v703 = vadd.f32 %v674, %v665
        %v704 = vadd.f32 %v674, %v666
        %v705 = vadd.f32 %v674, %v667
        %v706 = vadd.f32 %v674, %v668
        %v707 = vadd.f32 %v674, %v669
        %v708 = vld [vmem:[#allocation2 + $0x1] sm:$0x1]
        %709 = vset.pattern.permute.xlu0 1
        %710 = vperm.xlu0 %709, %v440
        %v711 = vpop.permute.xlu0 %710
        %713 = vset.pattern.permute.xlu0 1
        %714 = vperm.xlu0 %713, %v441
        %v715 = vpop.permute.xlu0 %714
        %717 = vset.pattern.permute.xlu0 1
        %718 = vperm.xlu0 %717, %v442
        %v719 = vpop.permute.xlu0 %718
        %721 = vset.pattern.permute.xlu0 1
        %722 = vperm.xlu0 %721, %v443
        %v723 = vpop.permute.xlu0 %722
        %725 = vset.pattern.permute.xlu0 1
        %726 = vperm.xlu0 %725, %v444
        %v727 = vpop.permute.xlu0 %726
        %729 = vset.pattern.permute.xlu0 1
        %730 = vperm.xlu0 %729, %v445
        %v731 = vpop.permute.xlu0 %730
        %733 = vset.pattern.permute.xlu0 1
        %734 = vperm.xlu0 %733, %v446
        %v735 = vpop.permute.xlu0 %734
        %737 = vset.pattern.permute.xlu0 1
        %738 = vperm.xlu0 %737, %v447
        %v739 = vpop.permute.xlu0 %738
        %741 = vset.pattern.permute.xlu0 1
        %742 = vperm.xlu0 %741, %v448
        %v743 = vpop.permute.xlu0 %742
        %745 = vset.pattern.permute.xlu0 1
        %746 = vperm.xlu0 %745, %v449
        %v747 = vpop.permute.xlu0 %746
        %749 = vset.pattern.permute.xlu0 1
        %750 = vperm.xlu0 %749, %v450
        %v751 = vpop.permute.xlu0 %750
        %753 = vset.pattern.permute.xlu0 1
        %754 = vperm.xlu0 %753, %v451
        %v755 = vpop.permute.xlu0 %754
        %757 = vset.pattern.permute.xlu0 1
        %758 = vperm.xlu0 %757, %v452
        %v759 = vpop.permute.xlu0 %758
        %761 = vset.pattern.permute.xlu0 1
        %762 = vperm.xlu0 %761, %v453
        %v763 = vpop.permute.xlu0 %762
        %765 = vset.pattern.permute.xlu0 1
        %766 = vperm.xlu0 %765, %v454
        %v767 = vpop.permute.xlu0 %766
        %769 = vset.pattern.permute.xlu0 1
        %770 = vperm.xlu0 %769, %v455
        %v771 = vpop.permute.xlu0 %770
        %773 = vset.pattern.permute.xlu0 1
        %774 = vperm.xlu0 %773, %v456
        %v775 = vpop.permute.xlu0 %774
        %777 = vset.pattern.permute.xlu0 1
        %778 = vperm.xlu0 %777, %v457
        %v779 = vpop.permute.xlu0 %778
        %781 = vset.pattern.permute.xlu0 1
        %782 = vperm.xlu0 %781, %v458
        %v783 = vpop.permute.xlu0 %782
        %785 = vset.pattern.permute.xlu0 1
        %786 = vperm.xlu0 %785, %v459
        %v787 = vpop.permute.xlu0 %786
        %789 = vset.pattern.permute.xlu0 1
        %790 = vperm.xlu0 %789, %v460
        %v791 = vpop.permute.xlu0 %790
        %793 = vset.pattern.permute.xlu0 1
        %794 = vperm.xlu0 %793, %v461
        %v795 = vpop.permute.xlu0 %794
        %797 = vset.pattern.permute.xlu0 1
        %798 = vperm.xlu0 %797, %v462
        %v799 = vpop.permute.xlu0 %798
        %801 = vset.pattern.permute.xlu0 1
        %802 = vperm.xlu0 %801, %v463
        %v803 = vpop.permute.xlu0 %802
        %805 = vset.pattern.permute.xlu0 1
        %806 = vperm.xlu0 %805, %v464
        %v807 = vpop.permute.xlu0 %806
        %809 = vset.pattern.permute.xlu0 1
        %810 = vperm.xlu0 %809, %v465
        %v811 = vpop.permute.xlu0 %810
        %813 = vset.pattern.permute.xlu0 1
        %814 = vperm.xlu0 %813, %v466
        %v815 = vpop.permute.xlu0 %814
        %817 = vset.pattern.permute.xlu0 1
        %818 = vperm.xlu0 %817, %v467
        %v819 = vpop.permute.xlu0 %818
        %821 = vset.pattern.permute.xlu0 1
        %822 = vperm.xlu0 %821, %v468
        %v823 = vpop.permute.xlu0 %822
        %825 = vset.pattern.permute.xlu0 1
        %826 = vperm.xlu0 %825, %v469
        %v827 = vpop.permute.xlu0 %826
        %829 = vset.pattern.permute.xlu0 1
        %830 = vperm.xlu0 %829, %v470
        %v831 = vpop.permute.xlu0 %830
        %833 = vset.pattern.permute.xlu0 1
        %834 = vperm.xlu0 %833, %v471
        %v835 = vpop.permute.xlu0 %834
        %v837 = vlaneseq
        %v838 = vshrl.u32 %v837, 7
        %v839 = vsub.s32 0, %v838
        %v840 = vrot.slane %v708, %v839
        %v841 = vmul.f32 %v711, %v840
        %v842 = vmul.f32 %v715, %v840
        %v843 = vmul.f32 %v719, %v840
        %v844 = vmul.f32 %v723, %v840
        %v845 = vmul.f32 %v727, %v840
        %v846 = vmul.f32 %v731, %v840
        %v847 = vmul.f32 %v735, %v840
        %v848 = vmul.f32 %v739, %v840
        %v849 = vmul.f32 %v743, %v840
        %v850 = vmul.f32 %v747, %v840
        %v851 = vmul.f32 %v751, %v840
        %v852 = vmul.f32 %v755, %v840
        %v853 = vmul.f32 %v759, %v840
        %v854 = vmul.f32 %v763, %v840
        %v855 = vmul.f32 %v767, %v840
        %v856 = vmul.f32 %v771, %v840
        %v857 = vmul.f32 %v775, %v840
        %v858 = vmul.f32 %v779, %v840
        %v859 = vmul.f32 %v783, %v840
        %v860 = vmul.f32 %v787, %v840
        %v861 = vmul.f32 %v791, %v840
        %v862 = vmul.f32 %v795, %v840
        %v863 = vmul.f32 %v799, %v840
        %v864 = vmul.f32 %v803, %v840
        %v865 = vmul.f32 %v807, %v840
        %v866 = vmul.f32 %v811, %v840
        %v867 = vmul.f32 %v815, %v840
        %v868 = vmul.f32 %v819, %v840
        %v869 = vmul.f32 %v823, %v840
        %v870 = vmul.f32 %v827, %v840
        %v871 = vmul.f32 %v831, %v840
        %v872 = vmul.f32 %v835, %v840
        %v873 = vadd.f32 %v676, %v841
        %v874 = vadd.f32 %v677, %v842
        %v875 = vadd.f32 %v678, %v843
        %v876 = vadd.f32 %v679, %v844
        %v877 = vadd.f32 %v680, %v845
        %v878 = vadd.f32 %v681, %v846
        %v879 = vadd.f32 %v682, %v847
        %v880 = vadd.f32 %v683, %v848
        %v881 = vadd.f32 %v684, %v849
        %v882 = vadd.f32 %v685, %v850
        %v883 = vadd.f32 %v686, %v851
        %v884 = vadd.f32 %v687, %v852
        %v885 = vadd.f32 %v688, %v853
        %v886 = vadd.f32 %v689, %v854
        %v887 = vadd.f32 %v690, %v855
        %v888 = vadd.f32 %v691, %v856
        %v889 = vadd.f32 %v692, %v857
        %v890 = vadd.f32 %v693, %v858
        %v891 = vadd.f32 %v694, %v859
        %v892 = vadd.f32 %v695, %v860
        %v893 = vadd.f32 %v696, %v861
        %v894 = vadd.f32 %v697, %v862
        %v895 = vadd.f32 %v698, %v863
        %v896 = vadd.f32 %v699, %v864
        %v897 = vadd.f32 %v700, %v865
        %v898 = vadd.f32 %v701, %v866
        %v899 = vadd.f32 %v702, %v867
        %v900 = vadd.f32 %v703, %v868
        %v901 = vadd.f32 %v704, %v869
        %v902 = vadd.f32 %v705, %v870
        %v903 = vadd.f32 %v706, %v871
        %v904 = vadd.f32 %v707, %v872
        %v905 = vld [vmem:[#allocation2 + $0x2] sm:$0x1]
        %906 = vset.pattern.permute.xlu0 2
        %907 = vperm.xlu0 %906, %v440
        %v908 = vpop.permute.xlu0 %907
        %910 = vset.pattern.permute.xlu0 2
        %911 = vperm.xlu0 %910, %v441
        %v912 = vpop.permute.xlu0 %911
        %914 = vset.pattern.permute.xlu0 2
        %915 = vperm.xlu0 %914, %v442
        %v916 = vpop.permute.xlu0 %915
        %918 = vset.pattern.permute.xlu0 2
        %919 = vperm.xlu0 %918, %v443
        %v920 = vpop.permute.xlu0 %919
        %922 = vset.pattern.permute.xlu0 2
        %923 = vperm.xlu0 %922, %v444
        %v924 = vpop.permute.xlu0 %923
        %926 = vset.pattern.permute.xlu0 2
        %927 = vperm.xlu0 %926, %v445
        %v928 = vpop.permute.xlu0 %927
        %930 = vset.pattern.permute.xlu0 2
        %931 = vperm.xlu0 %930, %v446
        %v932 = vpop.permute.xlu0 %931
        %934 = vset.pattern.permute.xlu0 2
        %935 = vperm.xlu0 %934, %v447
        %v936 = vpop.permute.xlu0 %935
        %938 = vset.pattern.permute.xlu0 2
        %939 = vperm.xlu0 %938, %v448
        %v940 = vpop.permute.xlu0 %939
        %942 = vset.pattern.permute.xlu0 2
        %943 = vperm.xlu0 %942, %v449
        %v944 = vpop.permute.xlu0 %943
        %946 = vset.pattern.permute.xlu0 2
        %947 = vperm.xlu0 %946, %v450
        %v948 = vpop.permute.xlu0 %947
        %950 = vset.pattern.permute.xlu0 2
        %951 = vperm.xlu0 %950, %v451
        %v952 = vpop.permute.xlu0 %951
        %954 = vset.pattern.permute.xlu0 2
        %955 = vperm.xlu0 %954, %v452
        %v956 = vpop.permute.xlu0 %955
        %958 = vset.pattern.permute.xlu0 2
        %959 = vperm.xlu0 %958, %v453
        %v960 = vpop.permute.xlu0 %959
        %962 = vset.pattern.permute.xlu0 2
        %963 = vperm.xlu0 %962, %v454
        %v964 = vpop.permute.xlu0 %963
        %966 = vset.pattern.permute.xlu0 2
        %967 = vperm.xlu0 %966, %v455
        %v968 = vpop.permute.xlu0 %967
        %970 = vset.pattern.permute.xlu0 2
        %971 = vperm.xlu0 %970, %v456
        %v972 = vpop.permute.xlu0 %971
        %974 = vset.pattern.permute.xlu0 2
        %975 = vperm.xlu0 %974, %v457
        %v976 = vpop.permute.xlu0 %975
        %978 = vset.pattern.permute.xlu0 2
        %979 = vperm.xlu0 %978, %v458
        %v980 = vpop.permute.xlu0 %979
        %982 = vset.pattern.permute.xlu0 2
        %983 = vperm.xlu0 %982, %v459
        %v984 = vpop.permute.xlu0 %983
        %986 = vset.pattern.permute.xlu0 2
        %987 = vperm.xlu0 %986, %v460
        %v988 = vpop.permute.xlu0 %987
        %990 = vset.pattern.permute.xlu0 2
        %991 = vperm.xlu0 %990, %v461
        %v992 = vpop.permute.xlu0 %991
        %994 = vset.pattern.permute.xlu0 2
        %995 = vperm.xlu0 %994, %v462
        %v996 = vpop.permute.xlu0 %995
        %998 = vset.pattern.permute.xlu0 2
        %999 = vperm.xlu0 %998, %v463
        %v1000 = vpop.permute.xlu0 %999
        %1002 = vset.pattern.permute.xlu0 2
        %1003 = vperm.xlu0 %1002, %v464
        %v1004 = vpop.permute.xlu0 %1003
        %1006 = vset.pattern.permute.xlu0 2
        %1007 = vperm.xlu0 %1006, %v465
        %v1008 = vpop.permute.xlu0 %1007
        %1010 = vset.pattern.permute.xlu0 2
        %1011 = vperm.xlu0 %1010, %v466
        %v1012 = vpop.permute.xlu0 %1011
        %1014 = vset.pattern.permute.xlu0 2
        %1015 = vperm.xlu0 %1014, %v467
        %v1016 = vpop.permute.xlu0 %1015
        %1018 = vset.pattern.permute.xlu0 2
        %1019 = vperm.xlu0 %1018, %v468
        %v1020 = vpop.permute.xlu0 %1019
        %1022 = vset.pattern.permute.xlu0 2
        %1023 = vperm.xlu0 %1022, %v469
        %v1024 = vpop.permute.xlu0 %1023
        %1026 = vset.pattern.permute.xlu0 2
        %1027 = vperm.xlu0 %1026, %v470
        %v1028 = vpop.permute.xlu0 %1027
        %1030 = vset.pattern.permute.xlu0 2
        %1031 = vperm.xlu0 %1030, %v471
        %v1032 = vpop.permute.xlu0 %1031
        %v1034 = vlaneseq
        %v1035 = vshrl.u32 %v1034, 7
        %v1036 = vsub.s32 0, %v1035
        %v1037 = vrot.slane %v905, %v1036
        %v1038 = vmul.f32 %v908, %v1037
        %v1039 = vmul.f32 %v912, %v1037
        %v1040 = vmul.f32 %v916, %v1037
        %v1041 = vmul.f32 %v920, %v1037
        %v1042 = vmul.f32 %v924, %v1037
        %v1043 = vmul.f32 %v928, %v1037
        %v1044 = vmul.f32 %v932, %v1037
        %v1045 = vmul.f32 %v936, %v1037
        %v1046 = vmul.f32 %v940, %v1037
        %v1047 = vmul.f32 %v944, %v1037
        %v1048 = vmul.f32 %v948, %v1037
        %v1049 = vmul.f32 %v952, %v1037
        %v1050 = vmul.f32 %v956, %v1037
        %v1051 = vmul.f32 %v960, %v1037
        %v1052 = vmul.f32 %v964, %v1037
        %v1053 = vmul.f32 %v968, %v1037
        %v1054 = vmul.f32 %v972, %v1037
        %v1055 = vmul.f32 %v976, %v1037
        %v1056 = vmul.f32 %v980, %v1037
        %v1057 = vmul.f32 %v984, %v1037
        %v1058 = vmul.f32 %v988, %v1037
        %v1059 = vmul.f32 %v992, %v1037
        %v1060 = vmul.f32 %v996, %v1037
        %v1061 = vmul.f32 %v1000, %v1037
        %v1062 = vmul.f32 %v1004, %v1037
        %v1063 = vmul.f32 %v1008, %v1037
        %v1064 = vmul.f32 %v1012, %v1037
        %v1065 = vmul.f32 %v1016, %v1037
        %v1066 = vmul.f32 %v1020, %v1037
        %v1067 = vmul.f32 %v1024, %v1037
        %v1068 = vmul.f32 %v1028, %v1037
        %v1069 = vmul.f32 %v1032, %v1037
        %v1070 = vadd.f32 %v873, %v1038
        %v1071 = vadd.f32 %v874, %v1039
        %v1072 = vadd.f32 %v875, %v1040
        %v1073 = vadd.f32 %v876, %v1041
        %v1074 = vadd.f32 %v877, %v1042
        %v1075 = vadd.f32 %v878, %v1043
        %v1076 = vadd.f32 %v879, %v1044
        %v1077 = vadd.f32 %v880, %v1045
        %v1078 = vadd.f32 %v881, %v1046
        %v1079 = vadd.f32 %v882, %v1047
        %v1080 = vadd.f32 %v883, %v1048
        %v1081 = vadd.f32 %v884, %v1049
        %v1082 = vadd.f32 %v885, %v1050
        %v1083 = vadd.f32 %v886, %v1051
        %v1084 = vadd.f32 %v887, %v1052
        %v1085 = vadd.f32 %v888, %v1053
        %v1086 = vadd.f32 %v889, %v1054
        %v1087 = vadd.f32 %v890, %v1055
        %v1088 = vadd.f32 %v891, %v1056
        %v1089 = vadd.f32 %v892, %v1057
        %v1090 = vadd.f32 %v893, %v1058
        %v1091 = vadd.f32 %v894, %v1059
        %v1092 = vadd.f32 %v895, %v1060
        %v1093 = vadd.f32 %v896, %v1061
        %v1094 = vadd.f32 %v897, %v1062
        %v1095 = vadd.f32 %v898, %v1063
        %v1096 = vadd.f32 %v899, %v1064
        %v1097 = vadd.f32 %v900, %v1065
        %v1098 = vadd.f32 %v901, %v1066
        %v1099 = vadd.f32 %v902, %v1067
        %v1100 = vadd.f32 %v903, %v1068
        %v1101 = vadd.f32 %v904, %v1069
        %v1102 = vld [vmem:[#allocation2 + $0x3] sm:$0x1]
        %1103 = vset.pattern.permute.xlu0 3
        %1104 = vperm.xlu0 %1103, %v440
        %v1105 = vpop.permute.xlu0 %1104
        %1107 = vset.pattern.permute.xlu0 3
        %1108 = vperm.xlu0 %1107, %v441
        %v1109 = vpop.permute.xlu0 %1108
        %1111 = vset.pattern.permute.xlu0 3
        %1112 = vperm.xlu0 %1111, %v442
        %v1113 = vpop.permute.xlu0 %1112
        %1115 = vset.pattern.permute.xlu0 3
        %1116 = vperm.xlu0 %1115, %v443
        %v1117 = vpop.permute.xlu0 %1116
        %1119 = vset.pattern.permute.xlu0 3
        %1120 = vperm.xlu0 %1119, %v444
        %v1121 = vpop.permute.xlu0 %1120
        %1123 = vset.pattern.permute.xlu0 3
        %1124 = vperm.xlu0 %1123, %v445
        %v1125 = vpop.permute.xlu0 %1124
        %1127 = vset.pattern.permute.xlu0 3
        %1128 = vperm.xlu0 %1127, %v446
        %v1129 = vpop.permute.xlu0 %1128
        %1131 = vset.pattern.permute.xlu0 3
        %1132 = vperm.xlu0 %1131, %v447
        %v1133 = vpop.permute.xlu0 %1132
        %1135 = vset.pattern.permute.xlu0 3
        %1136 = vperm.xlu0 %1135, %v448
        %v1137 = vpop.permute.xlu0 %1136
        %1139 = vset.pattern.permute.xlu0 3
        %1140 = vperm.xlu0 %1139, %v449
        %v1141 = vpop.permute.xlu0 %1140
        %1143 = vset.pattern.permute.xlu0 3
        %1144 = vperm.xlu0 %1143, %v450
        %v1145 = vpop.permute.xlu0 %1144
        %1147 = vset.pattern.permute.xlu0 3
        %1148 = vperm.xlu0 %1147, %v451
        %v1149 = vpop.permute.xlu0 %1148
        %1151 = vset.pattern.permute.xlu0 3
        %1152 = vperm.xlu0 %1151, %v452
        %v1153 = vpop.permute.xlu0 %1152
        %1155 = vset.pattern.permute.xlu0 3
        %1156 = vperm.xlu0 %1155, %v453
        %v1157 = vpop.permute.xlu0 %1156
        %1159 = vset.pattern.permute.xlu0 3
        %1160 = vperm.xlu0 %1159, %v454
        %v1161 = vpop.permute.xlu0 %1160
        %1163 = vset.pattern.permute.xlu0 3
        %1164 = vperm.xlu0 %1163, %v455
        %v1165 = vpop.permute.xlu0 %1164
        %1167 = vset.pattern.permute.xlu0 3
        %1168 = vperm.xlu0 %1167, %v456
        %v1169 = vpop.permute.xlu0 %1168
        %1171 = vset.pattern.permute.xlu0 3
        %1172 = vperm.xlu0 %1171, %v457
        %v1173 = vpop.permute.xlu0 %1172
        %1175 = vset.pattern.permute.xlu0 3
        %1176 = vperm.xlu0 %1175, %v458
        %v1177 = vpop.permute.xlu0 %1176
        %1179 = vset.pattern.permute.xlu0 3
        %1180 = vperm.xlu0 %1179, %v459
        %v1181 = vpop.permute.xlu0 %1180
        %1183 = vset.pattern.permute.xlu0 3
        %1184 = vperm.xlu0 %1183, %v460
        %v1185 = vpop.permute.xlu0 %1184
        %1187 = vset.pattern.permute.xlu0 3
        %1188 = vperm.xlu0 %1187, %v461
        %v1189 = vpop.permute.xlu0 %1188
        %1191 = vset.pattern.permute.xlu0 3
        %1192 = vperm.xlu0 %1191, %v462
        %v1193 = vpop.permute.xlu0 %1192
        %1195 = vset.pattern.permute.xlu0 3
        %1196 = vperm.xlu0 %1195, %v463
        %v1197 = vpop.permute.xlu0 %1196
        %1199 = vset.pattern.permute.xlu0 3
        %1200 = vperm.xlu0 %1199, %v464
        %v1201 = vpop.permute.xlu0 %1200
        %1203 = vset.pattern.permute.xlu0 3
        %1204 = vperm.xlu0 %1203, %v465
        %v1205 = vpop.permute.xlu0 %1204
        %1207 = vset.pattern.permute.xlu0 3
        %1208 = vperm.xlu0 %1207, %v466
        %v1209 = vpop.permute.xlu0 %1208
        %1211 = vset.pattern.permute.xlu0 3
        %1212 = vperm.xlu0 %1211, %v467
        %v1213 = vpop.permute.xlu0 %1212
        %1215 = vset.pattern.permute.xlu0 3
        %1216 = vperm.xlu0 %1215, %v468
        %v1217 = vpop.permute.xlu0 %1216
        %1219 = vset.pattern.permute.xlu0 3
        %1220 = vperm.xlu0 %1219, %v469
        %v1221 = vpop.permute.xlu0 %1220
        %1223 = vset.pattern.permute.xlu0 3
        %1224 = vperm.xlu0 %1223, %v470
        %v1225 = vpop.permute.xlu0 %1224
        %1227 = vset.pattern.permute.xlu0 3
        %1228 = vperm.xlu0 %1227, %v471
        %v1229 = vpop.permute.xlu0 %1228
        %v1231 = vlaneseq
        %v1232 = vshrl.u32 %v1231, 7
        %v1233 = vsub.s32 0, %v1232
        %v1234 = vrot.slane %v1102, %v1233
        %v1235 = vmul.f32 %v1105, %v1234
        %v1236 = vmul.f32 %v1109, %v1234
        %v1237 = vmul.f32 %v1113, %v1234
        %v1238 = vmul.f32 %v1117, %v1234
        %v1239 = vmul.f32 %v1121, %v1234
        %v1240 = vmul.f32 %v1125, %v1234
        %v1241 = vmul.f32 %v1129, %v1234
        %v1242 = vmul.f32 %v1133, %v1234
        %v1243 = vmul.f32 %v1137, %v1234
        %v1244 = vmul.f32 %v1141, %v1234
        %v1245 = vmul.f32 %v1145, %v1234
        %v1246 = vmul.f32 %v1149, %v1234
        %v1247 = vmul.f32 %v1153, %v1234
        %v1248 = vmul.f32 %v1157, %v1234
        %v1249 = vmul.f32 %v1161, %v1234
        %v1250 = vmul.f32 %v1165, %v1234
        %v1251 = vmul.f32 %v1169, %v1234
        %v1252 = vmul.f32 %v1173, %v1234
        %v1253 = vmul.f32 %v1177, %v1234
        %v1254 = vmul.f32 %v1181, %v1234
        %v1255 = vmul.f32 %v1185, %v1234
        %v1256 = vmul.f32 %v1189, %v1234
        %v1257 = vmul.f32 %v1193, %v1234
        %v1258 = vmul.f32 %v1197, %v1234
        %v1259 = vmul.f32 %v1201, %v1234
        %v1260 = vmul.f32 %v1205, %v1234
        %v1261 = vmul.f32 %v1209, %v1234
        %v1262 = vmul.f32 %v1213, %v1234
        %v1263 = vmul.f32 %v1217, %v1234
        %v1264 = vmul.f32 %v1221, %v1234
        %v1265 = vmul.f32 %v1225, %v1234
        %v1266 = vmul.f32 %v1229, %v1234
        %v1267 = vadd.f32 %v1070, %v1235
        %v1268 = vadd.f32 %v1071, %v1236
        %v1269 = vadd.f32 %v1072, %v1237
        %v1270 = vadd.f32 %v1073, %v1238
        %v1271 = vadd.f32 %v1074, %v1239
        %v1272 = vadd.f32 %v1075, %v1240
        %v1273 = vadd.f32 %v1076, %v1241
        %v1274 = vadd.f32 %v1077, %v1242
        %v1275 = vadd.f32 %v1078, %v1243
        %v1276 = vadd.f32 %v1079, %v1244
        %v1277 = vadd.f32 %v1080, %v1245
        %v1278 = vadd.f32 %v1081, %v1246
        %v1279 = vadd.f32 %v1082, %v1247
        %v1280 = vadd.f32 %v1083, %v1248
        %v1281 = vadd.f32 %v1084, %v1249
        %v1282 = vadd.f32 %v1085, %v1250
        %v1283 = vadd.f32 %v1086, %v1251
        %v1284 = vadd.f32 %v1087, %v1252
        %v1285 = vadd.f32 %v1088, %v1253
        %v1286 = vadd.f32 %v1089, %v1254
        %v1287 = vadd.f32 %v1090, %v1255
        %v1288 = vadd.f32 %v1091, %v1256
        %v1289 = vadd.f32 %v1092, %v1257
        %v1290 = vadd.f32 %v1093, %v1258
        %v1291 = vadd.f32 %v1094, %v1259
        %v1292 = vadd.f32 %v1095, %v1260
        %v1293 = vadd.f32 %v1096, %v1261
        %v1294 = vadd.f32 %v1097, %v1262
        %v1295 = vadd.f32 %v1098, %v1263
        %v1296 = vadd.f32 %v1099, %v1264
        %v1297 = vadd.f32 %v1100, %v1265
        %v1298 = vadd.f32 %v1101, %v1266
        %v1299 = vand.u32 2147483647, %v1267
        %vm1300 = vcmp.le.f32.partialorder %v1299, 0.7853982
        %vm1301 = vcmp.lt.s32.totalorder %v1267, 0
        %v1302 = vand.u32 %v1267, 2139095040
        %v1303 = vshrl.u32 %v1302, 23
        %v1304 = vsub.s32 %v1303, 127
        %v1305 = vand.u32 2147483647, %v1267
        %v1306 = vand.u32 %v1305, 8388607
        %v1307 = vor.u32 %v1306, 8388608
        %v1308 = vsub.s32 0, %v1307
        %v1309 = vadd.s32 %v1304, 1
        %vm1310 = vcmp.gt.s32.totalorder %v1309, 0
        %v1311 = vsel %vm1310, %v1309, 0
        %v1312 = vshrl.u32 %v1311, 5
        %v1313 = vand.u32 %v1311, 31
        %v1314 = vsub.s32 32, %v1313
        %v1315 = vshrl.u32 683565275, %v1314
        %v1316 = vshll.u32 683565275, %v1313
        %v1317 = vshrl.u32 2475754826, %v1314
        %v1318 = vor.u32 %v1316, %v1317
        %v1319 = vshll.u32 2475754826, %v1313
        %v1320 = vshrl.u32 2131351028, %v1314
        %v1321 = vor.u32 %v1319, %v1320
        %v1322 = vshll.u32 2131351028, %v1313
        %v1323 = vshrl.u32 2102212464, %v1314
        %v1324 = vor.u32 %v1322, %v1323
        %v1325 = vshll.u32 2102212464, %v1313
        %v1326 = vshrl.u32 920167782, %v1314
        %v1327 = vor.u32 %v1325, %v1326
        %v1328 = vshll.u32 920167782, %v1313
        %v1329 = vshrl.u32 1326507024, %v1314
        %v1330 = vor.u32 %v1328, %v1329
        %vm1331 = vcmp.lt.s32.totalorder %v1312, 1
        %vm1332 = vcmp.lt.s32.totalorder %v1312, 2
        %vm1333 = vcmp.lt.s32.totalorder %v1312, 3
        %vm1334 = vcmp.lt.s32.totalorder %v1312, 4
        %v1335 = vsel %vm1331, %v1315, %v1318
        %v1336 = vsel %vm1334, %v1324, 2102212464
        %v1337 = vsel %vm1333, %v1321, %v1336
        %v1338 = vsel %vm1332, %v1335, %v1337
        %v1339 = vsel %vm1331, %v1318, %v1321
        %v1340 = vsel %vm1334, %v1327, 920167782
        %v1341 = vsel %vm1333, %v1324, %v1340
        %v1342 = vsel %vm1332, %v1339, %v1341
        %v1343 = vsel %vm1331, %v1321, %v1324
        %v1344 = vsel %vm1334, %v1330, 1326507024
        %v1345 = vsel %vm1333, %v1327, %v1344
        %v1346 = vsel %vm1332, %v1343, %v1345
        %v1347 = vshll.u32 %v1307, 8
        %v1348 = vmul.u32.u64.compose %v1347, %v1346
        %v1349 = vextract.low.u32 %v1348
        %v1350 = vextract.high.u32 %v1348
        %v1351 = vmul.u32.u64.compose %v1347, %v1342
        %v1352 = vextract.low.u32 %v1351
        %v1353 = vextract.high.u32 %v1351
        %v1354 = vmul.u32 %v1347, %v1338
        %v1355 = vadd.s32 %v1350, %v1352
        %vm1356 = vc.u32 %v1350, %v1352
        %v1357 = vadd.s32 %v1353, 1
        %v1358 = vsel %vm1356, %v1357, %v1353
        %v1359 = vadd.s32 %v1354, %v1358
        %v1360 = vadd.s32 %v1359, 536870912
        %v1361 = vshrl.u32 %v1360, 30
        %v1362 = vshll.u32 %v1361, 30
        %v1363 = vsub.s32 %v1359, %v1362
        %vm1364 = vcmp.lt.s32.totalorder %v1363, 0
        %v1365 = vsub.s32 0, %v1363
        %v1366 = vsel %vm1364, %v1365, %v1363
        %v1367 = vclz %v1366
        %v1368 = vsub.s32 %v1367, 2
        %vm1369 = vcmp.gt.s32.totalorder 0, %v1368
        %v1370 = vsel %vm1369, 0, %v1368
        %v1371 = vsub.s32 32, %v1370
        %v1372 = vshll.u32 %v1363, %v1370
        %v1373 = vshrl.u32 %v1355, %v1371
        %v1374 = vor.u32 %v1372, %v1373
        %v1375 = vsub.s32 4294967266, %v1370
        %v1376 = vadd.s32 %v1375, 127
        %v1377 = vshll.u32 %v1376, 23
        %v1378 = vor.u32 4788187, %v1377
        %v1379 = vand.u32 2147483647, %v1378
        %v1381 = vcvt.s32.f32 %v1374
        %v1382 = vmul.f32 %v1381, %v1379
        %v1383 = vxor.u32 %v1382, 2147483648
        %v1384 = vsel %vm1301, %v1383, %v1382
        %v1385 = vsub.s32 4, %v1361
        %v1386 = vsel %vm1301, %v1385, %v1361
        %v1387 = vsel %vm1300, %v1267, %v1384
        %v1388 = vsel %vm1300, 0, %v1386
        %v1389 = vcosq.f32.pop %v1387
        %v1390 = vsinq.f32.pop %v1387
        %vm1391 = vweird.f32 %v1267
        %v1392 = vadd.s32 %v1388, 3
        %v1393 = vand.u32 %v1392, 3
        %vm1394 = vcmp.lt.s32.totalorder %v1393, 2
        %vm1395 = vcmp.eq.s32.totalorder %v1393, 0
        %v1396 = vxor.u32 %v1390, 2147483648
        %v1397 = vsel %vm1395, %v1389, %v1396
        %vm1398 = vcmp.eq.s32.totalorder %v1393, 2
        %v1399 = vxor.u32 %v1389, 2147483648
        %v1400 = vsel %vm1398, %v1399, %v1390
        %v1401 = vsel %vm1394, %v1397, %v1400
        %v1402 = vsel %vm1391, nan, %v1401
        %v1403 = vand.u32 2147483647, %v1268
        %vm1404 = vcmp.le.f32.partialorder %v1403, 0.7853982
        %vm1405 = vcmp.lt.s32.totalorder %v1268, 0
        %v1406 = vand.u32 %v1268, 2139095040
        %v1407 = vshrl.u32 %v1406, 23
        %v1408 = vsub.s32 %v1407, 127
        %v1409 = vand.u32 2147483647, %v1268
        %v1410 = vand.u32 %v1409, 8388607
        %v1411 = vor.u32 %v1410, 8388608
        %v1412 = vsub.s32 0, %v1411
        %v1413 = vadd.s32 %v1408, 1
        %vm1414 = vcmp.gt.s32.totalorder %v1413, 0
        %v1415 = vsel %vm1414, %v1413, 0
        %v1416 = vshrl.u32 %v1415, 5
        %v1417 = vand.u32 %v1415, 31
        %v1418 = vsub.s32 32, %v1417
        %v1419 = vshrl.u32 683565275, %v1418
        %v1420 = vshll.u32 683565275, %v1417
        %v1421 = vshrl.u32 2475754826, %v1418
        %v1422 = vor.u32 %v1420, %v1421
        %v1423 = vshll.u32 2475754826, %v1417
        %v1424 = vshrl.u32 2131351028, %v1418
        %v1425 = vor.u32 %v1423, %v1424
        %v1426 = vshll.u32 2131351028, %v1417
        %v1427 = vshrl.u32 2102212464, %v1418
        %v1428 = vor.u32 %v1426, %v1427
        %v1429 = vshll.u32 2102212464, %v1417
        %v1430 = vshrl.u32 920167782, %v1418
        %v1431 = vor.u32 %v1429, %v1430
        %v1432 = vshll.u32 920167782, %v1417
        %v1433 = vshrl.u32 1326507024, %v1418
        %v1434 = vor.u32 %v1432, %v1433
        %vm1435 = vcmp.lt.s32.totalorder %v1416, 1
        %vm1436 = vcmp.lt.s32.totalorder %v1416, 2
        %vm1437 = vcmp.lt.s32.totalorder %v1416, 3
        %vm1438 = vcmp.lt.s32.totalorder %v1416, 4
        %v1439 = vsel %vm1435, %v1419, %v1422
        %v1440 = vsel %vm1438, %v1428, 2102212464
        %v1441 = vsel %vm1437, %v1425, %v1440
        %v1442 = vsel %vm1436, %v1439, %v1441
        %v1443 = vsel %vm1435, %v1422, %v1425
        %v1444 = vsel %vm1438, %v1431, 920167782
        %v1445 = vsel %vm1437, %v1428, %v1444
        %v1446 = vsel %vm1436, %v1443, %v1445
        %v1447 = vsel %vm1435, %v1425, %v1428
        %v1448 = vsel %vm1438, %v1434, 1326507024
        %v1449 = vsel %vm1437, %v1431, %v1448
        %v1450 = vsel %vm1436, %v1447, %v1449
        %v1451 = vshll.u32 %v1411, 8
        %v1452 = vmul.u32.u64.compose %v1451, %v1450
        %v1453 = vextract.low.u32 %v1452
        %v1454 = vextract.high.u32 %v1452
        %v1455 = vmul.u32.u64.compose %v1451, %v1446
        %v1456 = vextract.low.u32 %v1455
        %v1457 = vextract.high.u32 %v1455
        %v1458 = vmul.u32 %v1451, %v1442
        %v1459 = vadd.s32 %v1454, %v1456
        %vm1460 = vc.u32 %v1454, %v1456
        %v1461 = vadd.s32 %v1457, 1
        %v1462 = vsel %vm1460, %v1461, %v1457
        %v1463 = vadd.s32 %v1458, %v1462
        %v1464 = vadd.s32 %v1463, 536870912
        %v1465 = vshrl.u32 %v1464, 30
        %v1466 = vshll.u32 %v1465, 30
        %v1467 = vsub.s32 %v1463, %v1466
        %vm1468 = vcmp.lt.s32.totalorder %v1467, 0
        %v1469 = vsub.s32 0, %v1467
        %v1470 = vsel %vm1468, %v1469, %v1467
        %v1471 = vclz %v1470
        %v1472 = vsub.s32 %v1471, 2
        %vm1473 = vcmp.gt.s32.totalorder 0, %v1472
        %v1474 = vsel %vm1473, 0, %v1472
        %v1475 = vsub.s32 32, %v1474
        %v1476 = vshll.u32 %v1467, %v1474
        %v1477 = vshrl.u32 %v1459, %v1475
        %v1478 = vor.u32 %v1476, %v1477
        %v1479 = vsub.s32 4294967266, %v1474
        %v1480 = vadd.s32 %v1479, 127
        %v1481 = vshll.u32 %v1480, 23
        %v1482 = vor.u32 4788187, %v1481
        %v1483 = vand.u32 2147483647, %v1482
        %v1485 = vcvt.s32.f32 %v1478
        %v1486 = vmul.f32 %v1485, %v1483
        %v1487 = vxor.u32 %v1486, 2147483648
        %v1488 = vsel %vm1405, %v1487, %v1486
        %v1489 = vsub.s32 4, %v1465
        %v1490 = vsel %vm1405, %v1489, %v1465
        %v1491 = vsel %vm1404, %v1268, %v1488
        %v1492 = vsel %vm1404, 0, %v1490
        %v1493 = vcosq.f32.pop %v1491
        %v1494 = vsinq.f32.pop %v1491
        %vm1495 = vweird.f32 %v1268
        %v1496 = vadd.s32 %v1492, 3
        %v1497 = vand.u32 %v1496, 3
        %vm1498 = vcmp.lt.s32.totalorder %v1497, 2
        %vm1499 = vcmp.eq.s32.totalorder %v1497, 0
        %v1500 = vxor.u32 %v1494, 2147483648
        %v1501 = vsel %vm1499, %v1493, %v1500
        %vm1502 = vcmp.eq.s32.totalorder %v1497, 2
        %v1503 = vxor.u32 %v1493, 2147483648
        %v1504 = vsel %vm1502, %v1503, %v1494
        %v1505 = vsel %vm1498, %v1501, %v1504
        %v1506 = vsel %vm1495, nan, %v1505
        %v1507 = vand.u32 2147483647, %v1269
        %vm1508 = vcmp.le.f32.partialorder %v1507, 0.7853982
        %vm1509 = vcmp.lt.s32.totalorder %v1269, 0
        %v1510 = vand.u32 %v1269, 2139095040
        %v1511 = vshrl.u32 %v1510, 23
        %v1512 = vsub.s32 %v1511, 127
        %v1513 = vand.u32 2147483647, %v1269
        %v1514 = vand.u32 %v1513, 8388607
        %v1515 = vor.u32 %v1514, 8388608
        %v1516 = vsub.s32 0, %v1515
        %v1517 = vadd.s32 %v1512, 1
        %vm1518 = vcmp.gt.s32.totalorder %v1517, 0
        %v1519 = vsel %vm1518, %v1517, 0
        %v1520 = vshrl.u32 %v1519, 5
        %v1521 = vand.u32 %v1519, 31
        %v1522 = vsub.s32 32, %v1521
        %v1523 = vshrl.u32 683565275, %v1522
        %v1524 = vshll.u32 683565275, %v1521
        %v1525 = vshrl.u32 2475754826, %v1522
        %v1526 = vor.u32 %v1524, %v1525
        %v1527 = vshll.u32 2475754826, %v1521
        %v1528 = vshrl.u32 2131351028, %v1522
        %v1529 = vor.u32 %v1527, %v1528
        %v1530 = vshll.u32 2131351028, %v1521
        %v1531 = vshrl.u32 2102212464, %v1522
        %v1532 = vor.u32 %v1530, %v1531
        %v1533 = vshll.u32 2102212464, %v1521
        %v1534 = vshrl.u32 920167782, %v1522
        %v1535 = vor.u32 %v1533, %v1534
        %v1536 = vshll.u32 920167782, %v1521
        %v1537 = vshrl.u32 1326507024, %v1522
        %v1538 = vor.u32 %v1536, %v1537
        %vm1539 = vcmp.lt.s32.totalorder %v1520, 1
        %vm1540 = vcmp.lt.s32.totalorder %v1520, 2
        %vm1541 = vcmp.lt.s32.totalorder %v1520, 3
        %vm1542 = vcmp.lt.s32.totalorder %v1520, 4
        %v1543 = vsel %vm1539, %v1523, %v1526
        %v1544 = vsel %vm1542, %v1532, 2102212464
        %v1545 = vsel %vm1541, %v1529, %v1544
        %v1546 = vsel %vm1540, %v1543, %v1545
        %v1547 = vsel %vm1539, %v1526, %v1529
        %v1548 = vsel %vm1542, %v1535, 920167782
        %v1549 = vsel %vm1541, %v1532, %v1548
        %v1550 = vsel %vm1540, %v1547, %v1549
        %v1551 = vsel %vm1539, %v1529, %v1532
        %v1552 = vsel %vm1542, %v1538, 1326507024
        %v1553 = vsel %vm1541, %v1535, %v1552
        %v1554 = vsel %vm1540, %v1551, %v1553
        %v1555 = vshll.u32 %v1515, 8
        %v1556 = vmul.u32.u64.compose %v1555, %v1554
        %v1557 = vextract.low.u32 %v1556
        %v1558 = vextract.high.u32 %v1556
        %v1559 = vmul.u32.u64.compose %v1555, %v1550
        %v1560 = vextract.low.u32 %v1559
        %v1561 = vextract.high.u32 %v1559
        %v1562 = vmul.u32 %v1555, %v1546
        %v1563 = vadd.s32 %v1558, %v1560
        %vm1564 = vc.u32 %v1558, %v1560
        %v1565 = vadd.s32 %v1561, 1
        %v1566 = vsel %vm1564, %v1565, %v1561
        %v1567 = vadd.s32 %v1562, %v1566
        %v1568 = vadd.s32 %v1567, 536870912
        %v1569 = vshrl.u32 %v1568, 30
        %v1570 = vshll.u32 %v1569, 30
        %v1571 = vsub.s32 %v1567, %v1570
        %vm1572 = vcmp.lt.s32.totalorder %v1571, 0
        %v1573 = vsub.s32 0, %v1571
        %v1574 = vsel %vm1572, %v1573, %v1571
        %v1575 = vclz %v1574
        %v1576 = vsub.s32 %v1575, 2
        %vm1577 = vcmp.gt.s32.totalorder 0, %v1576
        %v1578 = vsel %vm1577, 0, %v1576
        %v1579 = vsub.s32 32, %v1578
        %v1580 = vshll.u32 %v1571, %v1578
        %v1581 = vshrl.u32 %v1563, %v1579
        %v1582 = vor.u32 %v1580, %v1581
        %v1583 = vsub.s32 4294967266, %v1578
        %v1584 = vadd.s32 %v1583, 127
        %v1585 = vshll.u32 %v1584, 23
        %v1586 = vor.u32 4788187, %v1585
        %v1587 = vand.u32 2147483647, %v1586
        %v1589 = vcvt.s32.f32 %v1582
        %v1590 = vmul.f32 %v1589, %v1587
        %v1591 = vxor.u32 %v1590, 2147483648
        %v1592 = vsel %vm1509, %v1591, %v1590
        %v1593 = vsub.s32 4, %v1569
        %v1594 = vsel %vm1509, %v1593, %v1569
        %v1595 = vsel %vm1508, %v1269, %v1592
        %v1596 = vsel %vm1508, 0, %v1594
        %v1597 = vcosq.f32.pop %v1595
        %v1598 = vsinq.f32.pop %v1595
        %vm1599 = vweird.f32 %v1269
        %v1600 = vadd.s32 %v1596, 3
        %v1601 = vand.u32 %v1600, 3
        %vm1602 = vcmp.lt.s32.totalorder %v1601, 2
        %vm1603 = vcmp.eq.s32.totalorder %v1601, 0
        %v1604 = vxor.u32 %v1598, 2147483648
        %v1605 = vsel %vm1603, %v1597, %v1604
        %vm1606 = vcmp.eq.s32.totalorder %v1601, 2
        %v1607 = vxor.u32 %v1597, 2147483648
        %v1608 = vsel %vm1606, %v1607, %v1598
        %v1609 = vsel %vm1602, %v1605, %v1608
        %v1610 = vsel %vm1599, nan, %v1609
        %v1611 = vand.u32 2147483647, %v1270
        %vm1612 = vcmp.le.f32.partialorder %v1611, 0.7853982
        %vm1613 = vcmp.lt.s32.totalorder %v1270, 0
        %v1614 = vand.u32 %v1270, 2139095040
        %v1615 = vshrl.u32 %v1614, 23
        %v1616 = vsub.s32 %v1615, 127
        %v1617 = vand.u32 2147483647, %v1270
        %v1618 = vand.u32 %v1617, 8388607
        %v1619 = vor.u32 %v1618, 8388608
        %v1620 = vsub.s32 0, %v1619
        %v1621 = vadd.s32 %v1616, 1
        %vm1622 = vcmp.gt.s32.totalorder %v1621, 0
        %v1623 = vsel %vm1622, %v1621, 0
        %v1624 = vshrl.u32 %v1623, 5
        %v1625 = vand.u32 %v1623, 31
        %v1626 = vsub.s32 32, %v1625
        %v1627 = vshrl.u32 683565275, %v1626
        %v1628 = vshll.u32 683565275, %v1625
        %v1629 = vshrl.u32 2475754826, %v1626
        %v1630 = vor.u32 %v1628, %v1629
        %v1631 = vshll.u32 2475754826, %v1625
        %v1632 = vshrl.u32 2131351028, %v1626
        %v1633 = vor.u32 %v1631, %v1632
        %v1634 = vshll.u32 2131351028, %v1625
        %v1635 = vshrl.u32 2102212464, %v1626
        %v1636 = vor.u32 %v1634, %v1635
        %v1637 = vshll.u32 2102212464, %v1625
        %v1638 = vshrl.u32 920167782, %v1626
        %v1639 = vor.u32 %v1637, %v1638
        %v1640 = vshll.u32 920167782, %v1625
        %v1641 = vshrl.u32 1326507024, %v1626
        %v1642 = vor.u32 %v1640, %v1641
        %vm1643 = vcmp.lt.s32.totalorder %v1624, 1
        %vm1644 = vcmp.lt.s32.totalorder %v1624, 2
        %vm1645 = vcmp.lt.s32.totalorder %v1624, 3
        %vm1646 = vcmp.lt.s32.totalorder %v1624, 4
        %v1647 = vsel %vm1643, %v1627, %v1630
        %v1648 = vsel %vm1646, %v1636, 2102212464
        %v1649 = vsel %vm1645, %v1633, %v1648
        %v1650 = vsel %vm1644, %v1647, %v1649
        %v1651 = vsel %vm1643, %v1630, %v1633
        %v1652 = vsel %vm1646, %v1639, 920167782
        %v1653 = vsel %vm1645, %v1636, %v1652
        %v1654 = vsel %vm1644, %v1651, %v1653
        %v1655 = vsel %vm1643, %v1633, %v1636
        %v1656 = vsel %vm1646, %v1642, 1326507024
        %v1657 = vsel %vm1645, %v1639, %v1656
        %v1658 = vsel %vm1644, %v1655, %v1657
        %v1659 = vshll.u32 %v1619, 8
        %v1660 = vmul.u32.u64.compose %v1659, %v1658
        %v1661 = vextract.low.u32 %v1660
        %v1662 = vextract.high.u32 %v1660
        %v1663 = vmul.u32.u64.compose %v1659, %v1654
        %v1664 = vextract.low.u32 %v1663
        %v1665 = vextract.high.u32 %v1663
        %v1666 = vmul.u32 %v1659, %v1650
        %v1667 = vadd.s32 %v1662, %v1664
        %vm1668 = vc.u32 %v1662, %v1664
        %v1669 = vadd.s32 %v1665, 1
        %v1670 = vsel %vm1668, %v1669, %v1665
        %v1671 = vadd.s32 %v1666, %v1670
        %v1672 = vadd.s32 %v1671, 536870912
        %v1673 = vshrl.u32 %v1672, 30
        %v1674 = vshll.u32 %v1673, 30
        %v1675 = vsub.s32 %v1671, %v1674
        %vm1676 = vcmp.lt.s32.totalorder %v1675, 0
        %v1677 = vsub.s32 0, %v1675
        %v1678 = vsel %vm1676, %v1677, %v1675
        %v1679 = vclz %v1678
        %v1680 = vsub.s32 %v1679, 2
        %vm1681 = vcmp.gt.s32.totalorder 0, %v1680
        %v1682 = vsel %vm1681, 0, %v1680
        %v1683 = vsub.s32 32, %v1682
        %v1684 = vshll.u32 %v1675, %v1682
        %v1685 = vshrl.u32 %v1667, %v1683
        %v1686 = vor.u32 %v1684, %v1685
        %v1687 = vsub.s32 4294967266, %v1682
        %v1688 = vadd.s32 %v1687, 127
        %v1689 = vshll.u32 %v1688, 23
        %v1690 = vor.u32 4788187, %v1689
        %v1691 = vand.u32 2147483647, %v1690
        %v1693 = vcvt.s32.f32 %v1686
        %v1694 = vmul.f32 %v1693, %v1691
        %v1695 = vxor.u32 %v1694, 2147483648
        %v1696 = vsel %vm1613, %v1695, %v1694
        %v1697 = vsub.s32 4, %v1673
        %v1698 = vsel %vm1613, %v1697, %v1673
        %v1699 = vsel %vm1612, %v1270, %v1696
        %v1700 = vsel %vm1612, 0, %v1698
        %v1701 = vcosq.f32.pop %v1699
        %v1702 = vsinq.f32.pop %v1699
        %vm1703 = vweird.f32 %v1270
        %v1704 = vadd.s32 %v1700, 3
        %v1705 = vand.u32 %v1704, 3
        %vm1706 = vcmp.lt.s32.totalorder %v1705, 2
        %vm1707 = vcmp.eq.s32.totalorder %v1705, 0
        %v1708 = vxor.u32 %v1702, 2147483648
        %v1709 = vsel %vm1707, %v1701, %v1708
        %vm1710 = vcmp.eq.s32.totalorder %v1705, 2
        %v1711 = vxor.u32 %v1701, 2147483648
        %v1712 = vsel %vm1710, %v1711, %v1702
        %v1713 = vsel %vm1706, %v1709, %v1712
        %v1714 = vsel %vm1703, nan, %v1713
        %v1715 = vand.u32 2147483647, %v1271
        %vm1716 = vcmp.le.f32.partialorder %v1715, 0.7853982
        %vm1717 = vcmp.lt.s32.totalorder %v1271, 0
        %v1718 = vand.u32 %v1271, 2139095040
        %v1719 = vshrl.u32 %v1718, 23
        %v1720 = vsub.s32 %v1719, 127
        %v1721 = vand.u32 2147483647, %v1271
        %v1722 = vand.u32 %v1721, 8388607
        %v1723 = vor.u32 %v1722, 8388608
        %v1724 = vsub.s32 0, %v1723
        %v1725 = vadd.s32 %v1720, 1
        %vm1726 = vcmp.gt.s32.totalorder %v1725, 0
        %v1727 = vsel %vm1726, %v1725, 0
        %v1728 = vshrl.u32 %v1727, 5
        %v1729 = vand.u32 %v1727, 31
        %v1730 = vsub.s32 32, %v1729
        %v1731 = vshrl.u32 683565275, %v1730
        %v1732 = vshll.u32 683565275, %v1729
        %v1733 = vshrl.u32 2475754826, %v1730
        %v1734 = vor.u32 %v1732, %v1733
        %v1735 = vshll.u32 2475754826, %v1729
        %v1736 = vshrl.u32 2131351028, %v1730
        %v1737 = vor.u32 %v1735, %v1736
        %v1738 = vshll.u32 2131351028, %v1729
        %v1739 = vshrl.u32 2102212464, %v1730
        %v1740 = vor.u32 %v1738, %v1739
        %v1741 = vshll.u32 2102212464, %v1729
        %v1742 = vshrl.u32 920167782, %v1730
        %v1743 = vor.u32 %v1741, %v1742
        %v1744 = vshll.u32 920167782, %v1729
        %v1745 = vshrl.u32 1326507024, %v1730
        %v1746 = vor.u32 %v1744, %v1745
        %vm1747 = vcmp.lt.s32.totalorder %v1728, 1
        %vm1748 = vcmp.lt.s32.totalorder %v1728, 2
        %vm1749 = vcmp.lt.s32.totalorder %v1728, 3
        %vm1750 = vcmp.lt.s32.totalorder %v1728, 4
        %v1751 = vsel %vm1747, %v1731, %v1734
        %v1752 = vsel %vm1750, %v1740, 2102212464
        %v1753 = vsel %vm1749, %v1737, %v1752
        %v1754 = vsel %vm1748, %v1751, %v1753
        %v1755 = vsel %vm1747, %v1734, %v1737
        %v1756 = vsel %vm1750, %v1743, 920167782
        %v1757 = vsel %vm1749, %v1740, %v1756
        %v1758 = vsel %vm1748, %v1755, %v1757
        %v1759 = vsel %vm1747, %v1737, %v1740
        %v1760 = vsel %vm1750, %v1746, 1326507024
        %v1761 = vsel %vm1749, %v1743, %v1760
        %v1762 = vsel %vm1748, %v1759, %v1761
        %v1763 = vshll.u32 %v1723, 8
        %v1764 = vmul.u32.u64.compose %v1763, %v1762
        %v1765 = vextract.low.u32 %v1764
        %v1766 = vextract.high.u32 %v1764
        %v1767 = vmul.u32.u64.compose %v1763, %v1758
        %v1768 = vextract.low.u32 %v1767
        %v1769 = vextract.high.u32 %v1767
        %v1770 = vmul.u32 %v1763, %v1754
        %v1771 = vadd.s32 %v1766, %v1768
        %vm1772 = vc.u32 %v1766, %v1768
        %v1773 = vadd.s32 %v1769, 1
        %v1774 = vsel %vm1772, %v1773, %v1769
        %v1775 = vadd.s32 %v1770, %v1774
        %v1776 = vadd.s32 %v1775, 536870912
        %v1777 = vshrl.u32 %v1776, 30
        %v1778 = vshll.u32 %v1777, 30
        %v1779 = vsub.s32 %v1775, %v1778
        %vm1780 = vcmp.lt.s32.totalorder %v1779, 0
        %v1781 = vsub.s32 0, %v1779
        %v1782 = vsel %vm1780, %v1781, %v1779
        %v1783 = vclz %v1782
        %v1784 = vsub.s32 %v1783, 2
        %vm1785 = vcmp.gt.s32.totalorder 0, %v1784
        %v1786 = vsel %vm1785, 0, %v1784
        %v1787 = vsub.s32 32, %v1786
        %v1788 = vshll.u32 %v1779, %v1786
        %v1789 = vshrl.u32 %v1771, %v1787
        %v1790 = vor.u32 %v1788, %v1789
        %v1791 = vsub.s32 4294967266, %v1786
        %v1792 = vadd.s32 %v1791, 127
        %v1793 = vshll.u32 %v1792, 23
        %v1794 = vor.u32 4788187, %v1793
        %v1795 = vand.u32 2147483647, %v1794
        %v1797 = vcvt.s32.f32 %v1790
        %v1798 = vmul.f32 %v1797, %v1795
        %v1799 = vxor.u32 %v1798, 2147483648
        %v1800 = vsel %vm1717, %v1799, %v1798
        %v1801 = vsub.s32 4, %v1777
        %v1802 = vsel %vm1717, %v1801, %v1777
        %v1803 = vsel %vm1716, %v1271, %v1800
        %v1804 = vsel %vm1716, 0, %v1802
        %v1805 = vcosq.f32.pop %v1803
        %v1806 = vsinq.f32.pop %v1803
        %vm1807 = vweird.f32 %v1271
        %v1808 = vadd.s32 %v1804, 3
        %v1809 = vand.u32 %v1808, 3
        %vm1810 = vcmp.lt.s32.totalorder %v1809, 2
        %vm1811 = vcmp.eq.s32.totalorder %v1809, 0
        %v1812 = vxor.u32 %v1806, 2147483648
        %v1813 = vsel %vm1811, %v1805, %v1812
        %vm1814 = vcmp.eq.s32.totalorder %v1809, 2
        %v1815 = vxor.u32 %v1805, 2147483648
        %v1816 = vsel %vm1814, %v1815, %v1806
        %v1817 = vsel %vm1810, %v1813, %v1816
        %v1818 = vsel %vm1807, nan, %v1817
        %v1819 = vand.u32 2147483647, %v1272
        %vm1820 = vcmp.le.f32.partialorder %v1819, 0.7853982
        %vm1821 = vcmp.lt.s32.totalorder %v1272, 0
        %v1822 = vand.u32 %v1272, 2139095040
        %v1823 = vshrl.u32 %v1822, 23
        %v1824 = vsub.s32 %v1823, 127
        %v1825 = vand.u32 2147483647, %v1272
        %v1826 = vand.u32 %v1825, 8388607
        %v1827 = vor.u32 %v1826, 8388608
        %v1828 = vsub.s32 0, %v1827
        %v1829 = vadd.s32 %v1824, 1
        %vm1830 = vcmp.gt.s32.totalorder %v1829, 0
        %v1831 = vsel %vm1830, %v1829, 0
        %v1832 = vshrl.u32 %v1831, 5
        %v1833 = vand.u32 %v1831, 31
        %v1834 = vsub.s32 32, %v1833
        %v1835 = vshrl.u32 683565275, %v1834
        %v1836 = vshll.u32 683565275, %v1833
        %v1837 = vshrl.u32 2475754826, %v1834
        %v1838 = vor.u32 %v1836, %v1837
        %v1839 = vshll.u32 2475754826, %v1833
        %v1840 = vshrl.u32 2131351028, %v1834
        %v1841 = vor.u32 %v1839, %v1840
        %v1842 = vshll.u32 2131351028, %v1833
        %v1843 = vshrl.u32 2102212464, %v1834
        %v1844 = vor.u32 %v1842, %v1843
        %v1845 = vshll.u32 2102212464, %v1833
        %v1846 = vshrl.u32 920167782, %v1834
        %v1847 = vor.u32 %v1845, %v1846
        %v1848 = vshll.u32 920167782, %v1833
        %v1849 = vshrl.u32 1326507024, %v1834
        %v1850 = vor.u32 %v1848, %v1849
        %vm1851 = vcmp.lt.s32.totalorder %v1832, 1
        %vm1852 = vcmp.lt.s32.totalorder %v1832, 2
        %vm1853 = vcmp.lt.s32.totalorder %v1832, 3
        %vm1854 = vcmp.lt.s32.totalorder %v1832, 4
        %v1855 = vsel %vm1851, %v1835, %v1838
        %v1856 = vsel %vm1854, %v1844, 2102212464
        %v1857 = vsel %vm1853, %v1841, %v1856
        %v1858 = vsel %vm1852, %v1855, %v1857
        %v1859 = vsel %vm1851, %v1838, %v1841
        %v1860 = vsel %vm1854, %v1847, 920167782
        %v1861 = vsel %vm1853, %v1844, %v1860
        %v1862 = vsel %vm1852, %v1859, %v1861
        %v1863 = vsel %vm1851, %v1841, %v1844
        %v1864 = vsel %vm1854, %v1850, 1326507024
        %v1865 = vsel %vm1853, %v1847, %v1864
        %v1866 = vsel %vm1852, %v1863, %v1865
        %v1867 = vshll.u32 %v1827, 8
        %v1868 = vmul.u32.u64.compose %v1867, %v1866
        %v1869 = vextract.low.u32 %v1868
        %v1870 = vextract.high.u32 %v1868
        %v1871 = vmul.u32.u64.compose %v1867, %v1862
        %v1872 = vextract.low.u32 %v1871
        %v1873 = vextract.high.u32 %v1871
        %v1874 = vmul.u32 %v1867, %v1858
        %v1875 = vadd.s32 %v1870, %v1872
        %vm1876 = vc.u32 %v1870, %v1872
        %v1877 = vadd.s32 %v1873, 1
        %v1878 = vsel %vm1876, %v1877, %v1873
        %v1879 = vadd.s32 %v1874, %v1878
        %v1880 = vadd.s32 %v1879, 536870912
        %v1881 = vshrl.u32 %v1880, 30
        %v1882 = vshll.u32 %v1881, 30
        %v1883 = vsub.s32 %v1879, %v1882
        %vm1884 = vcmp.lt.s32.totalorder %v1883, 0
        %v1885 = vsub.s32 0, %v1883
        %v1886 = vsel %vm1884, %v1885, %v1883
        %v1887 = vclz %v1886
        %v1888 = vsub.s32 %v1887, 2
        %vm1889 = vcmp.gt.s32.totalorder 0, %v1888
        %v1890 = vsel %vm1889, 0, %v1888
        %v1891 = vsub.s32 32, %v1890
        %v1892 = vshll.u32 %v1883, %v1890
        %v1893 = vshrl.u32 %v1875, %v1891
        %v1894 = vor.u32 %v1892, %v1893
        %v1895 = vsub.s32 4294967266, %v1890
        %v1896 = vadd.s32 %v1895, 127
        %v1897 = vshll.u32 %v1896, 23
        %v1898 = vor.u32 4788187, %v1897
        %v1899 = vand.u32 2147483647, %v1898
        %v1901 = vcvt.s32.f32 %v1894
        %v1902 = vmul.f32 %v1901, %v1899
        %v1903 = vxor.u32 %v1902, 2147483648
        %v1904 = vsel %vm1821, %v1903, %v1902
        %v1905 = vsub.s32 4, %v1881
        %v1906 = vsel %vm1821, %v1905, %v1881
        %v1907 = vsel %vm1820, %v1272, %v1904
        %v1908 = vsel %vm1820, 0, %v1906
        %v1909 = vcosq.f32.pop %v1907
        %v1910 = vsinq.f32.pop %v1907
        %vm1911 = vweird.f32 %v1272
        %v1912 = vadd.s32 %v1908, 3
        %v1913 = vand.u32 %v1912, 3
        %vm1914 = vcmp.lt.s32.totalorder %v1913, 2
        %vm1915 = vcmp.eq.s32.totalorder %v1913, 0
        %v1916 = vxor.u32 %v1910, 2147483648
        %v1917 = vsel %vm1915, %v1909, %v1916
        %vm1918 = vcmp.eq.s32.totalorder %v1913, 2
        %v1919 = vxor.u32 %v1909, 2147483648
        %v1920 = vsel %vm1918, %v1919, %v1910
        %v1921 = vsel %vm1914, %v1917, %v1920
        %v1922 = vsel %vm1911, nan, %v1921
        %v1923 = vand.u32 2147483647, %v1273
        %vm1924 = vcmp.le.f32.partialorder %v1923, 0.7853982
        %vm1925 = vcmp.lt.s32.totalorder %v1273, 0
        %v1926 = vand.u32 %v1273, 2139095040
        %v1927 = vshrl.u32 %v1926, 23
        %v1928 = vsub.s32 %v1927, 127
        %v1929 = vand.u32 2147483647, %v1273
        %v1930 = vand.u32 %v1929, 8388607
        %v1931 = vor.u32 %v1930, 8388608
        %v1932 = vsub.s32 0, %v1931
        %v1933 = vadd.s32 %v1928, 1
        %vm1934 = vcmp.gt.s32.totalorder %v1933, 0
        %v1935 = vsel %vm1934, %v1933, 0
        %v1936 = vshrl.u32 %v1935, 5
        %v1937 = vand.u32 %v1935, 31
        %v1938 = vsub.s32 32, %v1937
        %v1939 = vshrl.u32 683565275, %v1938
        %v1940 = vshll.u32 683565275, %v1937
        %v1941 = vshrl.u32 2475754826, %v1938
        %v1942 = vor.u32 %v1940, %v1941
        %v1943 = vshll.u32 2475754826, %v1937
        %v1944 = vshrl.u32 2131351028, %v1938
        %v1945 = vor.u32 %v1943, %v1944
        %v1946 = vshll.u32 2131351028, %v1937
        %v1947 = vshrl.u32 2102212464, %v1938
        %v1948 = vor.u32 %v1946, %v1947
        %v1949 = vshll.u32 2102212464, %v1937
        %v1950 = vshrl.u32 920167782, %v1938
        %v1951 = vor.u32 %v1949, %v1950
        %v1952 = vshll.u32 920167782, %v1937
        %v1953 = vshrl.u32 1326507024, %v1938
        %v1954 = vor.u32 %v1952, %v1953
        %vm1955 = vcmp.lt.s32.totalorder %v1936, 1
        %vm1956 = vcmp.lt.s32.totalorder %v1936, 2
        %vm1957 = vcmp.lt.s32.totalorder %v1936, 3
        %vm1958 = vcmp.lt.s32.totalorder %v1936, 4
        %v1959 = vsel %vm1955, %v1939, %v1942
        %v1960 = vsel %vm1958, %v1948, 2102212464
        %v1961 = vsel %vm1957, %v1945, %v1960
        %v1962 = vsel %vm1956, %v1959, %v1961
        %v1963 = vsel %vm1955, %v1942, %v1945
        %v1964 = vsel %vm1958, %v1951, 920167782
        %v1965 = vsel %vm1957, %v1948, %v1964
        %v1966 = vsel %vm1956, %v1963, %v1965
        %v1967 = vsel %vm1955, %v1945, %v1948
        %v1968 = vsel %vm1958, %v1954, 1326507024
        %v1969 = vsel %vm1957, %v1951, %v1968
        %v1970 = vsel %vm1956, %v1967, %v1969
        %v1971 = vshll.u32 %v1931, 8
        %v1972 = vmul.u32.u64.compose %v1971, %v1970
        %v1973 = vextract.low.u32 %v1972
        %v1974 = vextract.high.u32 %v1972
        %v1975 = vmul.u32.u64.compose %v1971, %v1966
        %v1976 = vextract.low.u32 %v1975
        %v1977 = vextract.high.u32 %v1975
        %v1978 = vmul.u32 %v1971, %v1962
        %v1979 = vadd.s32 %v1974, %v1976
        %vm1980 = vc.u32 %v1974, %v1976
        %v1981 = vadd.s32 %v1977, 1
        %v1982 = vsel %vm1980, %v1981, %v1977
        %v1983 = vadd.s32 %v1978, %v1982
        %v1984 = vadd.s32 %v1983, 536870912
        %v1985 = vshrl.u32 %v1984, 30
        %v1986 = vshll.u32 %v1985, 30
        %v1987 = vsub.s32 %v1983, %v1986
        %vm1988 = vcmp.lt.s32.totalorder %v1987, 0
        %v1989 = vsub.s32 0, %v1987
        %v1990 = vsel %vm1988, %v1989, %v1987
        %v1991 = vclz %v1990
        %v1992 = vsub.s32 %v1991, 2
        %vm1993 = vcmp.gt.s32.totalorder 0, %v1992
        %v1994 = vsel %vm1993, 0, %v1992
        %v1995 = vsub.s32 32, %v1994
        %v1996 = vshll.u32 %v1987, %v1994
        %v1997 = vshrl.u32 %v1979, %v1995
        %v1998 = vor.u32 %v1996, %v1997
        %v1999 = vsub.s32 4294967266, %v1994
        %v2000 = vadd.s32 %v1999, 127
        %v2001 = vshll.u32 %v2000, 23
        %v2002 = vor.u32 4788187, %v2001
        %v2003 = vand.u32 2147483647, %v2002
        %v2005 = vcvt.s32.f32 %v1998
        %v2006 = vmul.f32 %v2005, %v2003
        %v2007 = vxor.u32 %v2006, 2147483648
        %v2008 = vsel %vm1925, %v2007, %v2006
        %v2009 = vsub.s32 4, %v1985
        %v2010 = vsel %vm1925, %v2009, %v1985
        %v2011 = vsel %vm1924, %v1273, %v2008
        %v2012 = vsel %vm1924, 0, %v2010
        %v2013 = vcosq.f32.pop %v2011
        %v2014 = vsinq.f32.pop %v2011
        %vm2015 = vweird.f32 %v1273
        %v2016 = vadd.s32 %v2012, 3
        %v2017 = vand.u32 %v2016, 3
        %vm2018 = vcmp.lt.s32.totalorder %v2017, 2
        %vm2019 = vcmp.eq.s32.totalorder %v2017, 0
        %v2020 = vxor.u32 %v2014, 2147483648
        %v2021 = vsel %vm2019, %v2013, %v2020
        %vm2022 = vcmp.eq.s32.totalorder %v2017, 2
        %v2023 = vxor.u32 %v2013, 2147483648
        %v2024 = vsel %vm2022, %v2023, %v2014
        %v2025 = vsel %vm2018, %v2021, %v2024
        %v2026 = vsel %vm2015, nan, %v2025
        %v2027 = vand.u32 2147483647, %v1274
        %vm2028 = vcmp.le.f32.partialorder %v2027, 0.7853982
        %vm2029 = vcmp.lt.s32.totalorder %v1274, 0
        %v2030 = vand.u32 %v1274, 2139095040
        %v2031 = vshrl.u32 %v2030, 23
        %v2032 = vsub.s32 %v2031, 127
        %v2033 = vand.u32 2147483647, %v1274
        %v2034 = vand.u32 %v2033, 8388607
        %v2035 = vor.u32 %v2034, 8388608
        %v2036 = vsub.s32 0, %v2035
        %v2037 = vadd.s32 %v2032, 1
        %vm2038 = vcmp.gt.s32.totalorder %v2037, 0
        %v2039 = vsel %vm2038, %v2037, 0
        %v2040 = vshrl.u32 %v2039, 5
        %v2041 = vand.u32 %v2039, 31
        %v2042 = vsub.s32 32, %v2041
        %v2043 = vshrl.u32 683565275, %v2042
        %v2044 = vshll.u32 683565275, %v2041
        %v2045 = vshrl.u32 2475754826, %v2042
        %v2046 = vor.u32 %v2044, %v2045
        %v2047 = vshll.u32 2475754826, %v2041
        %v2048 = vshrl.u32 2131351028, %v2042
        %v2049 = vor.u32 %v2047, %v2048
        %v2050 = vshll.u32 2131351028, %v2041
        %v2051 = vshrl.u32 2102212464, %v2042
        %v2052 = vor.u32 %v2050, %v2051
        %v2053 = vshll.u32 2102212464, %v2041
        %v2054 = vshrl.u32 920167782, %v2042
        %v2055 = vor.u32 %v2053, %v2054
        %v2056 = vshll.u32 920167782, %v2041
        %v2057 = vshrl.u32 1326507024, %v2042
        %v2058 = vor.u32 %v2056, %v2057
        %vm2059 = vcmp.lt.s32.totalorder %v2040, 1
        %vm2060 = vcmp.lt.s32.totalorder %v2040, 2
        %vm2061 = vcmp.lt.s32.totalorder %v2040, 3
        %vm2062 = vcmp.lt.s32.totalorder %v2040, 4
        %v2063 = vsel %vm2059, %v2043, %v2046
        %v2064 = vsel %vm2062, %v2052, 2102212464
        %v2065 = vsel %vm2061, %v2049, %v2064
        %v2066 = vsel %vm2060, %v2063, %v2065
        %v2067 = vsel %vm2059, %v2046, %v2049
        %v2068 = vsel %vm2062, %v2055, 920167782
        %v2069 = vsel %vm2061, %v2052, %v2068
        %v2070 = vsel %vm2060, %v2067, %v2069
        %v2071 = vsel %vm2059, %v2049, %v2052
        %v2072 = vsel %vm2062, %v2058, 1326507024
        %v2073 = vsel %vm2061, %v2055, %v2072
        %v2074 = vsel %vm2060, %v2071, %v2073
        %v2075 = vshll.u32 %v2035, 8
        %v2076 = vmul.u32.u64.compose %v2075, %v2074
        %v2077 = vextract.low.u32 %v2076
        %v2078 = vextract.high.u32 %v2076
        %v2079 = vmul.u32.u64.compose %v2075, %v2070
        %v2080 = vextract.low.u32 %v2079
        %v2081 = vextract.high.u32 %v2079
        %v2082 = vmul.u32 %v2075, %v2066
        %v2083 = vadd.s32 %v2078, %v2080
        %vm2084 = vc.u32 %v2078, %v2080
        %v2085 = vadd.s32 %v2081, 1
        %v2086 = vsel %vm2084, %v2085, %v2081
        %v2087 = vadd.s32 %v2082, %v2086
        %v2088 = vadd.s32 %v2087, 536870912
        %v2089 = vshrl.u32 %v2088, 30
        %v2090 = vshll.u32 %v2089, 30
        %v2091 = vsub.s32 %v2087, %v2090
        %vm2092 = vcmp.lt.s32.totalorder %v2091, 0
        %v2093 = vsub.s32 0, %v2091
        %v2094 = vsel %vm2092, %v2093, %v2091
        %v2095 = vclz %v2094
        %v2096 = vsub.s32 %v2095, 2
        %vm2097 = vcmp.gt.s32.totalorder 0, %v2096
        %v2098 = vsel %vm2097, 0, %v2096
        %v2099 = vsub.s32 32, %v2098
        %v2100 = vshll.u32 %v2091, %v2098
        %v2101 = vshrl.u32 %v2083, %v2099
        %v2102 = vor.u32 %v2100, %v2101
        %v2103 = vsub.s32 4294967266, %v2098
        %v2104 = vadd.s32 %v2103, 127
        %v2105 = vshll.u32 %v2104, 23
        %v2106 = vor.u32 4788187, %v2105
        %v2107 = vand.u32 2147483647, %v2106
        %v2109 = vcvt.s32.f32 %v2102
        %v2110 = vmul.f32 %v2109, %v2107
        %v2111 = vxor.u32 %v2110, 2147483648
        %v2112 = vsel %vm2029, %v2111, %v2110
        %v2113 = vsub.s32 4, %v2089
        %v2114 = vsel %vm2029, %v2113, %v2089
        %v2115 = vsel %vm2028, %v1274, %v2112
        %v2116 = vsel %vm2028, 0, %v2114
        %v2117 = vcosq.f32.pop %v2115
        %v2118 = vsinq.f32.pop %v2115
        %vm2119 = vweird.f32 %v1274
        %v2120 = vadd.s32 %v2116, 3
        %v2121 = vand.u32 %v2120, 3
        %vm2122 = vcmp.lt.s32.totalorder %v2121, 2
        %vm2123 = vcmp.eq.s32.totalorder %v2121, 0
        %v2124 = vxor.u32 %v2118, 2147483648
        %v2125 = vsel %vm2123, %v2117, %v2124
        %vm2126 = vcmp.eq.s32.totalorder %v2121, 2
        %v2127 = vxor.u32 %v2117, 2147483648
        %v2128 = vsel %vm2126, %v2127, %v2118
        %v2129 = vsel %vm2122, %v2125, %v2128
        %v2130 = vsel %vm2119, nan, %v2129
        %v2131 = vand.u32 2147483647, %v1275
        %vm2132 = vcmp.le.f32.partialorder %v2131, 0.7853982
        %vm2133 = vcmp.lt.s32.totalorder %v1275, 0
        %v2134 = vand.u32 %v1275, 2139095040
        %v2135 = vshrl.u32 %v2134, 23
        %v2136 = vsub.s32 %v2135, 127
        %v2137 = vand.u32 2147483647, %v1275
        %v2138 = vand.u32 %v2137, 8388607
        %v2139 = vor.u32 %v2138, 8388608
        %v2140 = vsub.s32 0, %v2139
        %v2141 = vadd.s32 %v2136, 1
        %vm2142 = vcmp.gt.s32.totalorder %v2141, 0
        %v2143 = vsel %vm2142, %v2141, 0
        %v2144 = vshrl.u32 %v2143, 5
        %v2145 = vand.u32 %v2143, 31
        %v2146 = vsub.s32 32, %v2145
        %v2147 = vshrl.u32 683565275, %v2146
        %v2148 = vshll.u32 683565275, %v2145
        %v2149 = vshrl.u32 2475754826, %v2146
        %v2150 = vor.u32 %v2148, %v2149
        %v2151 = vshll.u32 2475754826, %v2145
        %v2152 = vshrl.u32 2131351028, %v2146
        %v2153 = vor.u32 %v2151, %v2152
        %v2154 = vshll.u32 2131351028, %v2145
        %v2155 = vshrl.u32 2102212464, %v2146
        %v2156 = vor.u32 %v2154, %v2155
        %v2157 = vshll.u32 2102212464, %v2145
        %v2158 = vshrl.u32 920167782, %v2146
        %v2159 = vor.u32 %v2157, %v2158
        %v2160 = vshll.u32 920167782, %v2145
        %v2161 = vshrl.u32 1326507024, %v2146
        %v2162 = vor.u32 %v2160, %v2161
        %vm2163 = vcmp.lt.s32.totalorder %v2144, 1
        %vm2164 = vcmp.lt.s32.totalorder %v2144, 2
        %vm2165 = vcmp.lt.s32.totalorder %v2144, 3
        %vm2166 = vcmp.lt.s32.totalorder %v2144, 4
        %v2167 = vsel %vm2163, %v2147, %v2150
        %v2168 = vsel %vm2166, %v2156, 2102212464
        %v2169 = vsel %vm2165, %v2153, %v2168
        %v2170 = vsel %vm2164, %v2167, %v2169
        %v2171 = vsel %vm2163, %v2150, %v2153
        %v2172 = vsel %vm2166, %v2159, 920167782
        %v2173 = vsel %vm2165, %v2156, %v2172
        %v2174 = vsel %vm2164, %v2171, %v2173
        %v2175 = vsel %vm2163, %v2153, %v2156
        %v2176 = vsel %vm2166, %v2162, 1326507024
        %v2177 = vsel %vm2165, %v2159, %v2176
        %v2178 = vsel %vm2164, %v2175, %v2177
        %v2179 = vshll.u32 %v2139, 8
        %v2180 = vmul.u32.u64.compose %v2179, %v2178
        %v2181 = vextract.low.u32 %v2180
        %v2182 = vextract.high.u32 %v2180
        %v2183 = vmul.u32.u64.compose %v2179, %v2174
        %v2184 = vextract.low.u32 %v2183
        %v2185 = vextract.high.u32 %v2183
        %v2186 = vmul.u32 %v2179, %v2170
        %v2187 = vadd.s32 %v2182, %v2184
        %vm2188 = vc.u32 %v2182, %v2184
        %v2189 = vadd.s32 %v2185, 1
        %v2190 = vsel %vm2188, %v2189, %v2185
        %v2191 = vadd.s32 %v2186, %v2190
        %v2192 = vadd.s32 %v2191, 536870912
        %v2193 = vshrl.u32 %v2192, 30
        %v2194 = vshll.u32 %v2193, 30
        %v2195 = vsub.s32 %v2191, %v2194
        %vm2196 = vcmp.lt.s32.totalorder %v2195, 0
        %v2197 = vsub.s32 0, %v2195
        %v2198 = vsel %vm2196, %v2197, %v2195
        %v2199 = vclz %v2198
        %v2200 = vsub.s32 %v2199, 2
        %vm2201 = vcmp.gt.s32.totalorder 0, %v2200
        %v2202 = vsel %vm2201, 0, %v2200
        %v2203 = vsub.s32 32, %v2202
        %v2204 = vshll.u32 %v2195, %v2202
        %v2205 = vshrl.u32 %v2187, %v2203
        %v2206 = vor.u32 %v2204, %v2205
        %v2207 = vsub.s32 4294967266, %v2202
        %v2208 = vadd.s32 %v2207, 127
        %v2209 = vshll.u32 %v2208, 23
        %v2210 = vor.u32 4788187, %v2209
        %v2211 = vand.u32 2147483647, %v2210
        %v2213 = vcvt.s32.f32 %v2206
        %v2214 = vmul.f32 %v2213, %v2211
        %v2215 = vxor.u32 %v2214, 2147483648
        %v2216 = vsel %vm2133, %v2215, %v2214
        %v2217 = vsub.s32 4, %v2193
        %v2218 = vsel %vm2133, %v2217, %v2193
        %v2219 = vsel %vm2132, %v1275, %v2216
        %v2220 = vsel %vm2132, 0, %v2218
        %v2221 = vcosq.f32.pop %v2219
        %v2222 = vsinq.f32.pop %v2219
        %vm2223 = vweird.f32 %v1275
        %v2224 = vadd.s32 %v2220, 3
        %v2225 = vand.u32 %v2224, 3
        %vm2226 = vcmp.lt.s32.totalorder %v2225, 2
        %vm2227 = vcmp.eq.s32.totalorder %v2225, 0
        %v2228 = vxor.u32 %v2222, 2147483648
        %v2229 = vsel %vm2227, %v2221, %v2228
        %vm2230 = vcmp.eq.s32.totalorder %v2225, 2
        %v2231 = vxor.u32 %v2221, 2147483648
        %v2232 = vsel %vm2230, %v2231, %v2222
        %v2233 = vsel %vm2226, %v2229, %v2232
        %v2234 = vsel %vm2223, nan, %v2233
        %v2235 = vand.u32 2147483647, %v1276
        %vm2236 = vcmp.le.f32.partialorder %v2235, 0.7853982
        %vm2237 = vcmp.lt.s32.totalorder %v1276, 0
        %v2238 = vand.u32 %v1276, 2139095040
        %v2239 = vshrl.u32 %v2238, 23
        %v2240 = vsub.s32 %v2239, 127
        %v2241 = vand.u32 2147483647, %v1276
        %v2242 = vand.u32 %v2241, 8388607
        %v2243 = vor.u32 %v2242, 8388608
        %v2244 = vsub.s32 0, %v2243
        %v2245 = vadd.s32 %v2240, 1
        %vm2246 = vcmp.gt.s32.totalorder %v2245, 0
        %v2247 = vsel %vm2246, %v2245, 0
        %v2248 = vshrl.u32 %v2247, 5
        %v2249 = vand.u32 %v2247, 31
        %v2250 = vsub.s32 32, %v2249
        %v2251 = vshrl.u32 683565275, %v2250
        %v2252 = vshll.u32 683565275, %v2249
        %v2253 = vshrl.u32 2475754826, %v2250
        %v2254 = vor.u32 %v2252, %v2253
        %v2255 = vshll.u32 2475754826, %v2249
        %v2256 = vshrl.u32 2131351028, %v2250
        %v2257 = vor.u32 %v2255, %v2256
        %v2258 = vshll.u32 2131351028, %v2249
        %v2259 = vshrl.u32 2102212464, %v2250
        %v2260 = vor.u32 %v2258, %v2259
        %v2261 = vshll.u32 2102212464, %v2249
        %v2262 = vshrl.u32 920167782, %v2250
        %v2263 = vor.u32 %v2261, %v2262
        %v2264 = vshll.u32 920167782, %v2249
        %v2265 = vshrl.u32 1326507024, %v2250
        %v2266 = vor.u32 %v2264, %v2265
        %vm2267 = vcmp.lt.s32.totalorder %v2248, 1
        %vm2268 = vcmp.lt.s32.totalorder %v2248, 2
        %vm2269 = vcmp.lt.s32.totalorder %v2248, 3
        %vm2270 = vcmp.lt.s32.totalorder %v2248, 4
        %v2271 = vsel %vm2267, %v2251, %v2254
        %v2272 = vsel %vm2270, %v2260, 2102212464
        %v2273 = vsel %vm2269, %v2257, %v2272
        %v2274 = vsel %vm2268, %v2271, %v2273
        %v2275 = vsel %vm2267, %v2254, %v2257
        %v2276 = vsel %vm2270, %v2263, 920167782
        %v2277 = vsel %vm2269, %v2260, %v2276
        %v2278 = vsel %vm2268, %v2275, %v2277
        %v2279 = vsel %vm2267, %v2257, %v2260
        %v2280 = vsel %vm2270, %v2266, 1326507024
        %v2281 = vsel %vm2269, %v2263, %v2280
        %v2282 = vsel %vm2268, %v2279, %v2281
        %v2283 = vshll.u32 %v2243, 8
        %v2284 = vmul.u32.u64.compose %v2283, %v2282
        %v2285 = vextract.low.u32 %v2284
        %v2286 = vextract.high.u32 %v2284
        %v2287 = vmul.u32.u64.compose %v2283, %v2278
        %v2288 = vextract.low.u32 %v2287
        %v2289 = vextract.high.u32 %v2287
        %v2290 = vmul.u32 %v2283, %v2274
        %v2291 = vadd.s32 %v2286, %v2288
        %vm2292 = vc.u32 %v2286, %v2288
        %v2293 = vadd.s32 %v2289, 1
        %v2294 = vsel %vm2292, %v2293, %v2289
        %v2295 = vadd.s32 %v2290, %v2294
        %v2296 = vadd.s32 %v2295, 536870912
        %v2297 = vshrl.u32 %v2296, 30
        %v2298 = vshll.u32 %v2297, 30
        %v2299 = vsub.s32 %v2295, %v2298
        %vm2300 = vcmp.lt.s32.totalorder %v2299, 0
        %v2301 = vsub.s32 0, %v2299
        %v2302 = vsel %vm2300, %v2301, %v2299
        %v2303 = vclz %v2302
        %v2304 = vsub.s32 %v2303, 2
        %vm2305 = vcmp.gt.s32.totalorder 0, %v2304
        %v2306 = vsel %vm2305, 0, %v2304
        %v2307 = vsub.s32 32, %v2306
        %v2308 = vshll.u32 %v2299, %v2306
        %v2309 = vshrl.u32 %v2291, %v2307
        %v2310 = vor.u32 %v2308, %v2309
        %v2311 = vsub.s32 4294967266, %v2306
        %v2312 = vadd.s32 %v2311, 127
        %v2313 = vshll.u32 %v2312, 23
        %v2314 = vor.u32 4788187, %v2313
        %v2315 = vand.u32 2147483647, %v2314
        %v2317 = vcvt.s32.f32 %v2310
        %v2318 = vmul.f32 %v2317, %v2315
        %v2319 = vxor.u32 %v2318, 2147483648
        %v2320 = vsel %vm2237, %v2319, %v2318
        %v2321 = vsub.s32 4, %v2297
        %v2322 = vsel %vm2237, %v2321, %v2297
        %v2323 = vsel %vm2236, %v1276, %v2320
        %v2324 = vsel %vm2236, 0, %v2322
        %v2325 = vcosq.f32.pop %v2323
        %v2326 = vsinq.f32.pop %v2323
        %vm2327 = vweird.f32 %v1276
        %v2328 = vadd.s32 %v2324, 3
        %v2329 = vand.u32 %v2328, 3
        %vm2330 = vcmp.lt.s32.totalorder %v2329, 2
        %vm2331 = vcmp.eq.s32.totalorder %v2329, 0
        %v2332 = vxor.u32 %v2326, 2147483648
        %v2333 = vsel %vm2331, %v2325, %v2332
        %vm2334 = vcmp.eq.s32.totalorder %v2329, 2
        %v2335 = vxor.u32 %v2325, 2147483648
        %v2336 = vsel %vm2334, %v2335, %v2326
        %v2337 = vsel %vm2330, %v2333, %v2336
        %v2338 = vsel %vm2327, nan, %v2337
        %v2339 = vand.u32 2147483647, %v1277
        %vm2340 = vcmp.le.f32.partialorder %v2339, 0.7853982
        %vm2341 = vcmp.lt.s32.totalorder %v1277, 0
        %v2342 = vand.u32 %v1277, 2139095040
        %v2343 = vshrl.u32 %v2342, 23
        %v2344 = vsub.s32 %v2343, 127
        %v2345 = vand.u32 2147483647, %v1277
        %v2346 = vand.u32 %v2345, 8388607
        %v2347 = vor.u32 %v2346, 8388608
        %v2348 = vsub.s32 0, %v2347
        %v2349 = vadd.s32 %v2344, 1
        %vm2350 = vcmp.gt.s32.totalorder %v2349, 0
        %v2351 = vsel %vm2350, %v2349, 0
        %v2352 = vshrl.u32 %v2351, 5
        %v2353 = vand.u32 %v2351, 31
        %v2354 = vsub.s32 32, %v2353
        %v2355 = vshrl.u32 683565275, %v2354
        %v2356 = vshll.u32 683565275, %v2353
        %v2357 = vshrl.u32 2475754826, %v2354
        %v2358 = vor.u32 %v2356, %v2357
        %v2359 = vshll.u32 2475754826, %v2353
        %v2360 = vshrl.u32 2131351028, %v2354
        %v2361 = vor.u32 %v2359, %v2360
        %v2362 = vshll.u32 2131351028, %v2353
        %v2363 = vshrl.u32 2102212464, %v2354
        %v2364 = vor.u32 %v2362, %v2363
        %v2365 = vshll.u32 2102212464, %v2353
        %v2366 = vshrl.u32 920167782, %v2354
        %v2367 = vor.u32 %v2365, %v2366
        %v2368 = vshll.u32 920167782, %v2353
        %v2369 = vshrl.u32 1326507024, %v2354
        %v2370 = vor.u32 %v2368, %v2369
        %vm2371 = vcmp.lt.s32.totalorder %v2352, 1
        %vm2372 = vcmp.lt.s32.totalorder %v2352, 2
        %vm2373 = vcmp.lt.s32.totalorder %v2352, 3
        %vm2374 = vcmp.lt.s32.totalorder %v2352, 4
        %v2375 = vsel %vm2371, %v2355, %v2358
        %v2376 = vsel %vm2374, %v2364, 2102212464
        %v2377 = vsel %vm2373, %v2361, %v2376
        %v2378 = vsel %vm2372, %v2375, %v2377
        %v2379 = vsel %vm2371, %v2358, %v2361
        %v2380 = vsel %vm2374, %v2367, 920167782
        %v2381 = vsel %vm2373, %v2364, %v2380
        %v2382 = vsel %vm2372, %v2379, %v2381
        %v2383 = vsel %vm2371, %v2361, %v2364
        %v2384 = vsel %vm2374, %v2370, 1326507024
        %v2385 = vsel %vm2373, %v2367, %v2384
        %v2386 = vsel %vm2372, %v2383, %v2385
        %v2387 = vshll.u32 %v2347, 8
        %v2388 = vmul.u32.u64.compose %v2387, %v2386
        %v2389 = vextract.low.u32 %v2388
        %v2390 = vextract.high.u32 %v2388
        %v2391 = vmul.u32.u64.compose %v2387, %v2382
        %v2392 = vextract.low.u32 %v2391
        %v2393 = vextract.high.u32 %v2391
        %v2394 = vmul.u32 %v2387, %v2378
        %v2395 = vadd.s32 %v2390, %v2392
        %vm2396 = vc.u32 %v2390, %v2392
        %v2397 = vadd.s32 %v2393, 1
        %v2398 = vsel %vm2396, %v2397, %v2393
        %v2399 = vadd.s32 %v2394, %v2398
        %v2400 = vadd.s32 %v2399, 536870912
        %v2401 = vshrl.u32 %v2400, 30
        %v2402 = vshll.u32 %v2401, 30
        %v2403 = vsub.s32 %v2399, %v2402
        %vm2404 = vcmp.lt.s32.totalorder %v2403, 0
        %v2405 = vsub.s32 0, %v2403
        %v2406 = vsel %vm2404, %v2405, %v2403
        %v2407 = vclz %v2406
        %v2408 = vsub.s32 %v2407, 2
        %vm2409 = vcmp.gt.s32.totalorder 0, %v2408
        %v2410 = vsel %vm2409, 0, %v2408
        %v2411 = vsub.s32 32, %v2410
        %v2412 = vshll.u32 %v2403, %v2410
        %v2413 = vshrl.u32 %v2395, %v2411
        %v2414 = vor.u32 %v2412, %v2413
        %v2415 = vsub.s32 4294967266, %v2410
        %v2416 = vadd.s32 %v2415, 127
        %v2417 = vshll.u32 %v2416, 23
        %v2418 = vor.u32 4788187, %v2417
        %v2419 = vand.u32 2147483647, %v2418
        %v2421 = vcvt.s32.f32 %v2414
        %v2422 = vmul.f32 %v2421, %v2419
        %v2423 = vxor.u32 %v2422, 2147483648
        %v2424 = vsel %vm2341, %v2423, %v2422
        %v2425 = vsub.s32 4, %v2401
        %v2426 = vsel %vm2341, %v2425, %v2401
        %v2427 = vsel %vm2340, %v1277, %v2424
        %v2428 = vsel %vm2340, 0, %v2426
        %v2429 = vcosq.f32.pop %v2427
        %v2430 = vsinq.f32.pop %v2427
        %vm2431 = vweird.f32 %v1277
        %v2432 = vadd.s32 %v2428, 3
        %v2433 = vand.u32 %v2432, 3
        %vm2434 = vcmp.lt.s32.totalorder %v2433, 2
        %vm2435 = vcmp.eq.s32.totalorder %v2433, 0
        %v2436 = vxor.u32 %v2430, 2147483648
        %v2437 = vsel %vm2435, %v2429, %v2436
        %vm2438 = vcmp.eq.s32.totalorder %v2433, 2
        %v2439 = vxor.u32 %v2429, 2147483648
        %v2440 = vsel %vm2438, %v2439, %v2430
        %v2441 = vsel %vm2434, %v2437, %v2440
        %v2442 = vsel %vm2431, nan, %v2441
        %v2443 = vand.u32 2147483647, %v1278
        %vm2444 = vcmp.le.f32.partialorder %v2443, 0.7853982
        %vm2445 = vcmp.lt.s32.totalorder %v1278, 0
        %v2446 = vand.u32 %v1278, 2139095040
        %v2447 = vshrl.u32 %v2446, 23
        %v2448 = vsub.s32 %v2447, 127
        %v2449 = vand.u32 2147483647, %v1278
        %v2450 = vand.u32 %v2449, 8388607
        %v2451 = vor.u32 %v2450, 8388608
        %v2452 = vsub.s32 0, %v2451
        %v2453 = vadd.s32 %v2448, 1
        %vm2454 = vcmp.gt.s32.totalorder %v2453, 0
        %v2455 = vsel %vm2454, %v2453, 0
        %v2456 = vshrl.u32 %v2455, 5
        %v2457 = vand.u32 %v2455, 31
        %v2458 = vsub.s32 32, %v2457
        %v2459 = vshrl.u32 683565275, %v2458
        %v2460 = vshll.u32 683565275, %v2457
        %v2461 = vshrl.u32 2475754826, %v2458
        %v2462 = vor.u32 %v2460, %v2461
        %v2463 = vshll.u32 2475754826, %v2457
        %v2464 = vshrl.u32 2131351028, %v2458
        %v2465 = vor.u32 %v2463, %v2464
        %v2466 = vshll.u32 2131351028, %v2457
        %v2467 = vshrl.u32 2102212464, %v2458
        %v2468 = vor.u32 %v2466, %v2467
        %v2469 = vshll.u32 2102212464, %v2457
        %v2470 = vshrl.u32 920167782, %v2458
        %v2471 = vor.u32 %v2469, %v2470
        %v2472 = vshll.u32 920167782, %v2457
        %v2473 = vshrl.u32 1326507024, %v2458
        %v2474 = vor.u32 %v2472, %v2473
        %vm2475 = vcmp.lt.s32.totalorder %v2456, 1
        %vm2476 = vcmp.lt.s32.totalorder %v2456, 2
        %vm2477 = vcmp.lt.s32.totalorder %v2456, 3
        %vm2478 = vcmp.lt.s32.totalorder %v2456, 4
        %v2479 = vsel %vm2475, %v2459, %v2462
        %v2480 = vsel %vm2478, %v2468, 2102212464
        %v2481 = vsel %vm2477, %v2465, %v2480
        %v2482 = vsel %vm2476, %v2479, %v2481
        %v2483 = vsel %vm2475, %v2462, %v2465
        %v2484 = vsel %vm2478, %v2471, 920167782
        %v2485 = vsel %vm2477, %v2468, %v2484
        %v2486 = vsel %vm2476, %v2483, %v2485
        %v2487 = vsel %vm2475, %v2465, %v2468
        %v2488 = vsel %vm2478, %v2474, 1326507024
        %v2489 = vsel %vm2477, %v2471, %v2488
        %v2490 = vsel %vm2476, %v2487, %v2489
        %v2491 = vshll.u32 %v2451, 8
        %v2492 = vmul.u32.u64.compose %v2491, %v2490
        %v2493 = vextract.low.u32 %v2492
        %v2494 = vextract.high.u32 %v2492
        %v2495 = vmul.u32.u64.compose %v2491, %v2486
        %v2496 = vextract.low.u32 %v2495
        %v2497 = vextract.high.u32 %v2495
        %v2498 = vmul.u32 %v2491, %v2482
        %v2499 = vadd.s32 %v2494, %v2496
        %vm2500 = vc.u32 %v2494, %v2496
        %v2501 = vadd.s32 %v2497, 1
        %v2502 = vsel %vm2500, %v2501, %v2497
        %v2503 = vadd.s32 %v2498, %v2502
        %v2504 = vadd.s32 %v2503, 536870912
        %v2505 = vshrl.u32 %v2504, 30
        %v2506 = vshll.u32 %v2505, 30
        %v2507 = vsub.s32 %v2503, %v2506
        %vm2508 = vcmp.lt.s32.totalorder %v2507, 0
        %v2509 = vsub.s32 0, %v2507
        %v2510 = vsel %vm2508, %v2509, %v2507
        %v2511 = vclz %v2510
        %v2512 = vsub.s32 %v2511, 2
        %vm2513 = vcmp.gt.s32.totalorder 0, %v2512
        %v2514 = vsel %vm2513, 0, %v2512
        %v2515 = vsub.s32 32, %v2514
        %v2516 = vshll.u32 %v2507, %v2514
        %v2517 = vshrl.u32 %v2499, %v2515
        %v2518 = vor.u32 %v2516, %v2517
        %v2519 = vsub.s32 4294967266, %v2514
        %v2520 = vadd.s32 %v2519, 127
        %v2521 = vshll.u32 %v2520, 23
        %v2522 = vor.u32 4788187, %v2521
        %v2523 = vand.u32 2147483647, %v2522
        %v2525 = vcvt.s32.f32 %v2518
        %v2526 = vmul.f32 %v2525, %v2523
        %v2527 = vxor.u32 %v2526, 2147483648
        %v2528 = vsel %vm2445, %v2527, %v2526
        %v2529 = vsub.s32 4, %v2505
        %v2530 = vsel %vm2445, %v2529, %v2505
        %v2531 = vsel %vm2444, %v1278, %v2528
        %v2532 = vsel %vm2444, 0, %v2530
        %v2533 = vcosq.f32.pop %v2531
        %v2534 = vsinq.f32.pop %v2531
        %vm2535 = vweird.f32 %v1278
        %v2536 = vadd.s32 %v2532, 3
        %v2537 = vand.u32 %v2536, 3
        %vm2538 = vcmp.lt.s32.totalorder %v2537, 2
        %vm2539 = vcmp.eq.s32.totalorder %v2537, 0
        %v2540 = vxor.u32 %v2534, 2147483648
        %v2541 = vsel %vm2539, %v2533, %v2540
        %vm2542 = vcmp.eq.s32.totalorder %v2537, 2
        %v2543 = vxor.u32 %v2533, 2147483648
        %v2544 = vsel %vm2542, %v2543, %v2534
        %v2545 = vsel %vm2538, %v2541, %v2544
        %v2546 = vsel %vm2535, nan, %v2545
        %v2547 = vand.u32 2147483647, %v1279
        %vm2548 = vcmp.le.f32.partialorder %v2547, 0.7853982
        %vm2549 = vcmp.lt.s32.totalorder %v1279, 0
        %v2550 = vand.u32 %v1279, 2139095040
        %v2551 = vshrl.u32 %v2550, 23
        %v2552 = vsub.s32 %v2551, 127
        %v2553 = vand.u32 2147483647, %v1279
        %v2554 = vand.u32 %v2553, 8388607
        %v2555 = vor.u32 %v2554, 8388608
        %v2556 = vsub.s32 0, %v2555
        %v2557 = vadd.s32 %v2552, 1
        %vm2558 = vcmp.gt.s32.totalorder %v2557, 0
        %v2559 = vsel %vm2558, %v2557, 0
        %v2560 = vshrl.u32 %v2559, 5
        %v2561 = vand.u32 %v2559, 31
        %v2562 = vsub.s32 32, %v2561
        %v2563 = vshrl.u32 683565275, %v2562
        %v2564 = vshll.u32 683565275, %v2561
        %v2565 = vshrl.u32 2475754826, %v2562
        %v2566 = vor.u32 %v2564, %v2565
        %v2567 = vshll.u32 2475754826, %v2561
        %v2568 = vshrl.u32 2131351028, %v2562
        %v2569 = vor.u32 %v2567, %v2568
        %v2570 = vshll.u32 2131351028, %v2561
        %v2571 = vshrl.u32 2102212464, %v2562
        %v2572 = vor.u32 %v2570, %v2571
        %v2573 = vshll.u32 2102212464, %v2561
        %v2574 = vshrl.u32 920167782, %v2562
        %v2575 = vor.u32 %v2573, %v2574
        %v2576 = vshll.u32 920167782, %v2561
        %v2577 = vshrl.u32 1326507024, %v2562
        %v2578 = vor.u32 %v2576, %v2577
        %vm2579 = vcmp.lt.s32.totalorder %v2560, 1
        %vm2580 = vcmp.lt.s32.totalorder %v2560, 2
        %vm2581 = vcmp.lt.s32.totalorder %v2560, 3
        %vm2582 = vcmp.lt.s32.totalorder %v2560, 4
        %v2583 = vsel %vm2579, %v2563, %v2566
        %v2584 = vsel %vm2582, %v2572, 2102212464
        %v2585 = vsel %vm2581, %v2569, %v2584
        %v2586 = vsel %vm2580, %v2583, %v2585
        %v2587 = vsel %vm2579, %v2566, %v2569
        %v2588 = vsel %vm2582, %v2575, 920167782
        %v2589 = vsel %vm2581, %v2572, %v2588
        %v2590 = vsel %vm2580, %v2587, %v2589
        %v2591 = vsel %vm2579, %v2569, %v2572
        %v2592 = vsel %vm2582, %v2578, 1326507024
        %v2593 = vsel %vm2581, %v2575, %v2592
        %v2594 = vsel %vm2580, %v2591, %v2593
        %v2595 = vshll.u32 %v2555, 8
        %v2596 = vmul.u32.u64.compose %v2595, %v2594
        %v2597 = vextract.low.u32 %v2596
        %v2598 = vextract.high.u32 %v2596
        %v2599 = vmul.u32.u64.compose %v2595, %v2590
        %v2600 = vextract.low.u32 %v2599
        %v2601 = vextract.high.u32 %v2599
        %v2602 = vmul.u32 %v2595, %v2586
        %v2603 = vadd.s32 %v2598, %v2600
        %vm2604 = vc.u32 %v2598, %v2600
        %v2605 = vadd.s32 %v2601, 1
        %v2606 = vsel %vm2604, %v2605, %v2601
        %v2607 = vadd.s32 %v2602, %v2606
        %v2608 = vadd.s32 %v2607, 536870912
        %v2609 = vshrl.u32 %v2608, 30
        %v2610 = vshll.u32 %v2609, 30
        %v2611 = vsub.s32 %v2607, %v2610
        %vm2612 = vcmp.lt.s32.totalorder %v2611, 0
        %v2613 = vsub.s32 0, %v2611
        %v2614 = vsel %vm2612, %v2613, %v2611
        %v2615 = vclz %v2614
        %v2616 = vsub.s32 %v2615, 2
        %vm2617 = vcmp.gt.s32.totalorder 0, %v2616
        %v2618 = vsel %vm2617, 0, %v2616
        %v2619 = vsub.s32 32, %v2618
        %v2620 = vshll.u32 %v2611, %v2618
        %v2621 = vshrl.u32 %v2603, %v2619
        %v2622 = vor.u32 %v2620, %v2621
        %v2623 = vsub.s32 4294967266, %v2618
        %v2624 = vadd.s32 %v2623, 127
        %v2625 = vshll.u32 %v2624, 23
        %v2626 = vor.u32 4788187, %v2625
        %v2627 = vand.u32 2147483647, %v2626
        %v2629 = vcvt.s32.f32 %v2622
        %v2630 = vmul.f32 %v2629, %v2627
        %v2631 = vxor.u32 %v2630, 2147483648
        %v2632 = vsel %vm2549, %v2631, %v2630
        %v2633 = vsub.s32 4, %v2609
        %v2634 = vsel %vm2549, %v2633, %v2609
        %v2635 = vsel %vm2548, %v1279, %v2632
        %v2636 = vsel %vm2548, 0, %v2634
        %v2637 = vcosq.f32.pop %v2635
        %v2638 = vsinq.f32.pop %v2635
        %vm2639 = vweird.f32 %v1279
        %v2640 = vadd.s32 %v2636, 3
        %v2641 = vand.u32 %v2640, 3
        %vm2642 = vcmp.lt.s32.totalorder %v2641, 2
        %vm2643 = vcmp.eq.s32.totalorder %v2641, 0
        %v2644 = vxor.u32 %v2638, 2147483648
        %v2645 = vsel %vm2643, %v2637, %v2644
        %vm2646 = vcmp.eq.s32.totalorder %v2641, 2
        %v2647 = vxor.u32 %v2637, 2147483648
        %v2648 = vsel %vm2646, %v2647, %v2638
        %v2649 = vsel %vm2642, %v2645, %v2648
        %v2650 = vsel %vm2639, nan, %v2649
        %v2651 = vand.u32 2147483647, %v1280
        %vm2652 = vcmp.le.f32.partialorder %v2651, 0.7853982
        %vm2653 = vcmp.lt.s32.totalorder %v1280, 0
        %v2654 = vand.u32 %v1280, 2139095040
        %v2655 = vshrl.u32 %v2654, 23
        %v2656 = vsub.s32 %v2655, 127
        %v2657 = vand.u32 2147483647, %v1280
        %v2658 = vand.u32 %v2657, 8388607
        %v2659 = vor.u32 %v2658, 8388608
        %v2660 = vsub.s32 0, %v2659
        %v2661 = vadd.s32 %v2656, 1
        %vm2662 = vcmp.gt.s32.totalorder %v2661, 0
        %v2663 = vsel %vm2662, %v2661, 0
        %v2664 = vshrl.u32 %v2663, 5
        %v2665 = vand.u32 %v2663, 31
        %v2666 = vsub.s32 32, %v2665
        %v2667 = vshrl.u32 683565275, %v2666
        %v2668 = vshll.u32 683565275, %v2665
        %v2669 = vshrl.u32 2475754826, %v2666
        %v2670 = vor.u32 %v2668, %v2669
        %v2671 = vshll.u32 2475754826, %v2665
        %v2672 = vshrl.u32 2131351028, %v2666
        %v2673 = vor.u32 %v2671, %v2672
        %v2674 = vshll.u32 2131351028, %v2665
        %v2675 = vshrl.u32 2102212464, %v2666
        %v2676 = vor.u32 %v2674, %v2675
        %v2677 = vshll.u32 2102212464, %v2665
        %v2678 = vshrl.u32 920167782, %v2666
        %v2679 = vor.u32 %v2677, %v2678
        %v2680 = vshll.u32 920167782, %v2665
        %v2681 = vshrl.u32 1326507024, %v2666
        %v2682 = vor.u32 %v2680, %v2681
        %vm2683 = vcmp.lt.s32.totalorder %v2664, 1
        %vm2684 = vcmp.lt.s32.totalorder %v2664, 2
        %vm2685 = vcmp.lt.s32.totalorder %v2664, 3
        %vm2686 = vcmp.lt.s32.totalorder %v2664, 4
        %v2687 = vsel %vm2683, %v2667, %v2670
        %v2688 = vsel %vm2686, %v2676, 2102212464
        %v2689 = vsel %vm2685, %v2673, %v2688
        %v2690 = vsel %vm2684, %v2687, %v2689
        %v2691 = vsel %vm2683, %v2670, %v2673
        %v2692 = vsel %vm2686, %v2679, 920167782
        %v2693 = vsel %vm2685, %v2676, %v2692
        %v2694 = vsel %vm2684, %v2691, %v2693
        %v2695 = vsel %vm2683, %v2673, %v2676
        %v2696 = vsel %vm2686, %v2682, 1326507024
        %v2697 = vsel %vm2685, %v2679, %v2696
        %v2698 = vsel %vm2684, %v2695, %v2697
        %v2699 = vshll.u32 %v2659, 8
        %v2700 = vmul.u32.u64.compose %v2699, %v2698
        %v2701 = vextract.low.u32 %v2700
        %v2702 = vextract.high.u32 %v2700
        %v2703 = vmul.u32.u64.compose %v2699, %v2694
        %v2704 = vextract.low.u32 %v2703
        %v2705 = vextract.high.u32 %v2703
        %v2706 = vmul.u32 %v2699, %v2690
        %v2707 = vadd.s32 %v2702, %v2704
        %vm2708 = vc.u32 %v2702, %v2704
        %v2709 = vadd.s32 %v2705, 1
        %v2710 = vsel %vm2708, %v2709, %v2705
        %v2711 = vadd.s32 %v2706, %v2710
        %v2712 = vadd.s32 %v2711, 536870912
        %v2713 = vshrl.u32 %v2712, 30
        %v2714 = vshll.u32 %v2713, 30
        %v2715 = vsub.s32 %v2711, %v2714
        %vm2716 = vcmp.lt.s32.totalorder %v2715, 0
        %v2717 = vsub.s32 0, %v2715
        %v2718 = vsel %vm2716, %v2717, %v2715
        %v2719 = vclz %v2718
        %v2720 = vsub.s32 %v2719, 2
        %vm2721 = vcmp.gt.s32.totalorder 0, %v2720
        %v2722 = vsel %vm2721, 0, %v2720
        %v2723 = vsub.s32 32, %v2722
        %v2724 = vshll.u32 %v2715, %v2722
        %v2725 = vshrl.u32 %v2707, %v2723
        %v2726 = vor.u32 %v2724, %v2725
        %v2727 = vsub.s32 4294967266, %v2722
        %v2728 = vadd.s32 %v2727, 127
        %v2729 = vshll.u32 %v2728, 23
        %v2730 = vor.u32 4788187, %v2729
        %v2731 = vand.u32 2147483647, %v2730
        %v2733 = vcvt.s32.f32 %v2726
        %v2734 = vmul.f32 %v2733, %v2731
        %v2735 = vxor.u32 %v2734, 2147483648
        %v2736 = vsel %vm2653, %v2735, %v2734
        %v2737 = vsub.s32 4, %v2713
        %v2738 = vsel %vm2653, %v2737, %v2713
        %v2739 = vsel %vm2652, %v1280, %v2736
        %v2740 = vsel %vm2652, 0, %v2738
        %v2741 = vcosq.f32.pop %v2739
        %v2742 = vsinq.f32.pop %v2739
        %vm2743 = vweird.f32 %v1280
        %v2744 = vadd.s32 %v2740, 3
        %v2745 = vand.u32 %v2744, 3
        %vm2746 = vcmp.lt.s32.totalorder %v2745, 2
        %vm2747 = vcmp.eq.s32.totalorder %v2745, 0
        %v2748 = vxor.u32 %v2742, 2147483648
        %v2749 = vsel %vm2747, %v2741, %v2748
        %vm2750 = vcmp.eq.s32.totalorder %v2745, 2
        %v2751 = vxor.u32 %v2741, 2147483648
        %v2752 = vsel %vm2750, %v2751, %v2742
        %v2753 = vsel %vm2746, %v2749, %v2752
        %v2754 = vsel %vm2743, nan, %v2753
        %v2755 = vand.u32 2147483647, %v1281
        %vm2756 = vcmp.le.f32.partialorder %v2755, 0.7853982
        %vm2757 = vcmp.lt.s32.totalorder %v1281, 0
        %v2758 = vand.u32 %v1281, 2139095040
        %v2759 = vshrl.u32 %v2758, 23
        %v2760 = vsub.s32 %v2759, 127
        %v2761 = vand.u32 2147483647, %v1281
        %v2762 = vand.u32 %v2761, 8388607
        %v2763 = vor.u32 %v2762, 8388608
        %v2764 = vsub.s32 0, %v2763
        %v2765 = vadd.s32 %v2760, 1
        %vm2766 = vcmp.gt.s32.totalorder %v2765, 0
        %v2767 = vsel %vm2766, %v2765, 0
        %v2768 = vshrl.u32 %v2767, 5
        %v2769 = vand.u32 %v2767, 31
        %v2770 = vsub.s32 32, %v2769
        %v2771 = vshrl.u32 683565275, %v2770
        %v2772 = vshll.u32 683565275, %v2769
        %v2773 = vshrl.u32 2475754826, %v2770
        %v2774 = vor.u32 %v2772, %v2773
        %v2775 = vshll.u32 2475754826, %v2769
        %v2776 = vshrl.u32 2131351028, %v2770
        %v2777 = vor.u32 %v2775, %v2776
        %v2778 = vshll.u32 2131351028, %v2769
        %v2779 = vshrl.u32 2102212464, %v2770
        %v2780 = vor.u32 %v2778, %v2779
        %v2781 = vshll.u32 2102212464, %v2769
        %v2782 = vshrl.u32 920167782, %v2770
        %v2783 = vor.u32 %v2781, %v2782
        %v2784 = vshll.u32 920167782, %v2769
        %v2785 = vshrl.u32 1326507024, %v2770
        %v2786 = vor.u32 %v2784, %v2785
        %vm2787 = vcmp.lt.s32.totalorder %v2768, 1
        %vm2788 = vcmp.lt.s32.totalorder %v2768, 2
        %vm2789 = vcmp.lt.s32.totalorder %v2768, 3
        %vm2790 = vcmp.lt.s32.totalorder %v2768, 4
        %v2791 = vsel %vm2787, %v2771, %v2774
        %v2792 = vsel %vm2790, %v2780, 2102212464
        %v2793 = vsel %vm2789, %v2777, %v2792
        %v2794 = vsel %vm2788, %v2791, %v2793
        %v2795 = vsel %vm2787, %v2774, %v2777
        %v2796 = vsel %vm2790, %v2783, 920167782
        %v2797 = vsel %vm2789, %v2780, %v2796
        %v2798 = vsel %vm2788, %v2795, %v2797
        %v2799 = vsel %vm2787, %v2777, %v2780
        %v2800 = vsel %vm2790, %v2786, 1326507024
        %v2801 = vsel %vm2789, %v2783, %v2800
        %v2802 = vsel %vm2788, %v2799, %v2801
        %v2803 = vshll.u32 %v2763, 8
        %v2804 = vmul.u32.u64.compose %v2803, %v2802
        %v2805 = vextract.low.u32 %v2804
        %v2806 = vextract.high.u32 %v2804
        %v2807 = vmul.u32.u64.compose %v2803, %v2798
        %v2808 = vextract.low.u32 %v2807
        %v2809 = vextract.high.u32 %v2807
        %v2810 = vmul.u32 %v2803, %v2794
        %v2811 = vadd.s32 %v2806, %v2808
        %vm2812 = vc.u32 %v2806, %v2808
        %v2813 = vadd.s32 %v2809, 1
        %v2814 = vsel %vm2812, %v2813, %v2809
        %v2815 = vadd.s32 %v2810, %v2814
        %v2816 = vadd.s32 %v2815, 536870912
        %v2817 = vshrl.u32 %v2816, 30
        %v2818 = vshll.u32 %v2817, 30
        %v2819 = vsub.s32 %v2815, %v2818
        %vm2820 = vcmp.lt.s32.totalorder %v2819, 0
        %v2821 = vsub.s32 0, %v2819
        %v2822 = vsel %vm2820, %v2821, %v2819
        %v2823 = vclz %v2822
        %v2824 = vsub.s32 %v2823, 2
        %vm2825 = vcmp.gt.s32.totalorder 0, %v2824
        %v2826 = vsel %vm2825, 0, %v2824
        %v2827 = vsub.s32 32, %v2826
        %v2828 = vshll.u32 %v2819, %v2826
        %v2829 = vshrl.u32 %v2811, %v2827
        %v2830 = vor.u32 %v2828, %v2829
        %v2831 = vsub.s32 4294967266, %v2826
        %v2832 = vadd.s32 %v2831, 127
        %v2833 = vshll.u32 %v2832, 23
        %v2834 = vor.u32 4788187, %v2833
        %v2835 = vand.u32 2147483647, %v2834
        %v2837 = vcvt.s32.f32 %v2830
        %v2838 = vmul.f32 %v2837, %v2835
        %v2839 = vxor.u32 %v2838, 2147483648
        %v2840 = vsel %vm2757, %v2839, %v2838
        %v2841 = vsub.s32 4, %v2817
        %v2842 = vsel %vm2757, %v2841, %v2817
        %v2843 = vsel %vm2756, %v1281, %v2840
        %v2844 = vsel %vm2756, 0, %v2842
        %v2845 = vcosq.f32.pop %v2843
        %v2846 = vsinq.f32.pop %v2843
        %vm2847 = vweird.f32 %v1281
        %v2848 = vadd.s32 %v2844, 3
        %v2849 = vand.u32 %v2848, 3
        %vm2850 = vcmp.lt.s32.totalorder %v2849, 2
        %vm2851 = vcmp.eq.s32.totalorder %v2849, 0
        %v2852 = vxor.u32 %v2846, 2147483648
        %v2853 = vsel %vm2851, %v2845, %v2852
        %vm2854 = vcmp.eq.s32.totalorder %v2849, 2
        %v2855 = vxor.u32 %v2845, 2147483648
        %v2856 = vsel %vm2854, %v2855, %v2846
        %v2857 = vsel %vm2850, %v2853, %v2856
        %v2858 = vsel %vm2847, nan, %v2857
        %v2859 = vand.u32 2147483647, %v1282
        %vm2860 = vcmp.le.f32.partialorder %v2859, 0.7853982
        %vm2861 = vcmp.lt.s32.totalorder %v1282, 0
        %v2862 = vand.u32 %v1282, 2139095040
        %v2863 = vshrl.u32 %v2862, 23
        %v2864 = vsub.s32 %v2863, 127
        %v2865 = vand.u32 2147483647, %v1282
        %v2866 = vand.u32 %v2865, 8388607
        %v2867 = vor.u32 %v2866, 8388608
        %v2868 = vsub.s32 0, %v2867
        %v2869 = vadd.s32 %v2864, 1
        %vm2870 = vcmp.gt.s32.totalorder %v2869, 0
        %v2871 = vsel %vm2870, %v2869, 0
        %v2872 = vshrl.u32 %v2871, 5
        %v2873 = vand.u32 %v2871, 31
        %v2874 = vsub.s32 32, %v2873
        %v2875 = vshrl.u32 683565275, %v2874
        %v2876 = vshll.u32 683565275, %v2873
        %v2877 = vshrl.u32 2475754826, %v2874
        %v2878 = vor.u32 %v2876, %v2877
        %v2879 = vshll.u32 2475754826, %v2873
        %v2880 = vshrl.u32 2131351028, %v2874
        %v2881 = vor.u32 %v2879, %v2880
        %v2882 = vshll.u32 2131351028, %v2873
        %v2883 = vshrl.u32 2102212464, %v2874
        %v2884 = vor.u32 %v2882, %v2883
        %v2885 = vshll.u32 2102212464, %v2873
        %v2886 = vshrl.u32 920167782, %v2874
        %v2887 = vor.u32 %v2885, %v2886
        %v2888 = vshll.u32 920167782, %v2873
        %v2889 = vshrl.u32 1326507024, %v2874
        %v2890 = vor.u32 %v2888, %v2889
        %vm2891 = vcmp.lt.s32.totalorder %v2872, 1
        %vm2892 = vcmp.lt.s32.totalorder %v2872, 2
        %vm2893 = vcmp.lt.s32.totalorder %v2872, 3
        %vm2894 = vcmp.lt.s32.totalorder %v2872, 4
        %v2895 = vsel %vm2891, %v2875, %v2878
        %v2896 = vsel %vm2894, %v2884, 2102212464
        %v2897 = vsel %vm2893, %v2881, %v2896
        %v2898 = vsel %vm2892, %v2895, %v2897
        %v2899 = vsel %vm2891, %v2878, %v2881
        %v2900 = vsel %vm2894, %v2887, 920167782
        %v2901 = vsel %vm2893, %v2884, %v2900
        %v2902 = vsel %vm2892, %v2899, %v2901
        %v2903 = vsel %vm2891, %v2881, %v2884
        %v2904 = vsel %vm2894, %v2890, 1326507024
        %v2905 = vsel %vm2893, %v2887, %v2904
        %v2906 = vsel %vm2892, %v2903, %v2905
        %v2907 = vshll.u32 %v2867, 8
        %v2908 = vmul.u32.u64.compose %v2907, %v2906
        %v2909 = vextract.low.u32 %v2908
        %v2910 = vextract.high.u32 %v2908
        %v2911 = vmul.u32.u64.compose %v2907, %v2902
        %v2912 = vextract.low.u32 %v2911
        %v2913 = vextract.high.u32 %v2911
        %v2914 = vmul.u32 %v2907, %v2898
        %v2915 = vadd.s32 %v2910, %v2912
        %vm2916 = vc.u32 %v2910, %v2912
        %v2917 = vadd.s32 %v2913, 1
        %v2918 = vsel %vm2916, %v2917, %v2913
        %v2919 = vadd.s32 %v2914, %v2918
        %v2920 = vadd.s32 %v2919, 536870912
        %v2921 = vshrl.u32 %v2920, 30
        %v2922 = vshll.u32 %v2921, 30
        %v2923 = vsub.s32 %v2919, %v2922
        %vm2924 = vcmp.lt.s32.totalorder %v2923, 0
        %v2925 = vsub.s32 0, %v2923
        %v2926 = vsel %vm2924, %v2925, %v2923
        %v2927 = vclz %v2926
        %v2928 = vsub.s32 %v2927, 2
        %vm2929 = vcmp.gt.s32.totalorder 0, %v2928
        %v2930 = vsel %vm2929, 0, %v2928
        %v2931 = vsub.s32 32, %v2930
        %v2932 = vshll.u32 %v2923, %v2930
        %v2933 = vshrl.u32 %v2915, %v2931
        %v2934 = vor.u32 %v2932, %v2933
        %v2935 = vsub.s32 4294967266, %v2930
        %v2936 = vadd.s32 %v2935, 127
        %v2937 = vshll.u32 %v2936, 23
        %v2938 = vor.u32 4788187, %v2937
        %v2939 = vand.u32 2147483647, %v2938
        %v2941 = vcvt.s32.f32 %v2934
        %v2942 = vmul.f32 %v2941, %v2939
        %v2943 = vxor.u32 %v2942, 2147483648
        %v2944 = vsel %vm2861, %v2943, %v2942
        %v2945 = vsub.s32 4, %v2921
        %v2946 = vsel %vm2861, %v2945, %v2921
        %v2947 = vsel %vm2860, %v1282, %v2944
        %v2948 = vsel %vm2860, 0, %v2946
        %v2949 = vcosq.f32.pop %v2947
        %v2950 = vsinq.f32.pop %v2947
        %vm2951 = vweird.f32 %v1282
        %v2952 = vadd.s32 %v2948, 3
        %v2953 = vand.u32 %v2952, 3
        %vm2954 = vcmp.lt.s32.totalorder %v2953, 2
        %vm2955 = vcmp.eq.s32.totalorder %v2953, 0
        %v2956 = vxor.u32 %v2950, 2147483648
        %v2957 = vsel %vm2955, %v2949, %v2956
        %vm2958 = vcmp.eq.s32.totalorder %v2953, 2
        %v2959 = vxor.u32 %v2949, 2147483648
        %v2960 = vsel %vm2958, %v2959, %v2950
        %v2961 = vsel %vm2954, %v2957, %v2960
        %v2962 = vsel %vm2951, nan, %v2961
        %v2963 = vand.u32 2147483647, %v1283
        %vm2964 = vcmp.le.f32.partialorder %v2963, 0.7853982
        %vm2965 = vcmp.lt.s32.totalorder %v1283, 0
        %v2966 = vand.u32 %v1283, 2139095040
        %v2967 = vshrl.u32 %v2966, 23
        %v2968 = vsub.s32 %v2967, 127
        %v2969 = vand.u32 2147483647, %v1283
        %v2970 = vand.u32 %v2969, 8388607
        %v2971 = vor.u32 %v2970, 8388608
        %v2972 = vsub.s32 0, %v2971
        %v2973 = vadd.s32 %v2968, 1
        %vm2974 = vcmp.gt.s32.totalorder %v2973, 0
        %v2975 = vsel %vm2974, %v2973, 0
        %v2976 = vshrl.u32 %v2975, 5
        %v2977 = vand.u32 %v2975, 31
        %v2978 = vsub.s32 32, %v2977
        %v2979 = vshrl.u32 683565275, %v2978
        %v2980 = vshll.u32 683565275, %v2977
        %v2981 = vshrl.u32 2475754826, %v2978
        %v2982 = vor.u32 %v2980, %v2981
        %v2983 = vshll.u32 2475754826, %v2977
        %v2984 = vshrl.u32 2131351028, %v2978
        %v2985 = vor.u32 %v2983, %v2984
        %v2986 = vshll.u32 2131351028, %v2977
        %v2987 = vshrl.u32 2102212464, %v2978
        %v2988 = vor.u32 %v2986, %v2987
        %v2989 = vshll.u32 2102212464, %v2977
        %v2990 = vshrl.u32 920167782, %v2978
        %v2991 = vor.u32 %v2989, %v2990
        %v2992 = vshll.u32 920167782, %v2977
        %v2993 = vshrl.u32 1326507024, %v2978
        %v2994 = vor.u32 %v2992, %v2993
        %vm2995 = vcmp.lt.s32.totalorder %v2976, 1
        %vm2996 = vcmp.lt.s32.totalorder %v2976, 2
        %vm2997 = vcmp.lt.s32.totalorder %v2976, 3
        %vm2998 = vcmp.lt.s32.totalorder %v2976, 4
        %v2999 = vsel %vm2995, %v2979, %v2982
        %v3000 = vsel %vm2998, %v2988, 2102212464
        %v3001 = vsel %vm2997, %v2985, %v3000
        %v3002 = vsel %vm2996, %v2999, %v3001
        %v3003 = vsel %vm2995, %v2982, %v2985
        %v3004 = vsel %vm2998, %v2991, 920167782
        %v3005 = vsel %vm2997, %v2988, %v3004
        %v3006 = vsel %vm2996, %v3003, %v3005
        %v3007 = vsel %vm2995, %v2985, %v2988
        %v3008 = vsel %vm2998, %v2994, 1326507024
        %v3009 = vsel %vm2997, %v2991, %v3008
        %v3010 = vsel %vm2996, %v3007, %v3009
        %v3011 = vshll.u32 %v2971, 8
        %v3012 = vmul.u32.u64.compose %v3011, %v3010
        %v3013 = vextract.low.u32 %v3012
        %v3014 = vextract.high.u32 %v3012
        %v3015 = vmul.u32.u64.compose %v3011, %v3006
        %v3016 = vextract.low.u32 %v3015
        %v3017 = vextract.high.u32 %v3015
        %v3018 = vmul.u32 %v3011, %v3002
        %v3019 = vadd.s32 %v3014, %v3016
        %vm3020 = vc.u32 %v3014, %v3016
        %v3021 = vadd.s32 %v3017, 1
        %v3022 = vsel %vm3020, %v3021, %v3017
        %v3023 = vadd.s32 %v3018, %v3022
        %v3024 = vadd.s32 %v3023, 536870912
        %v3025 = vshrl.u32 %v3024, 30
        %v3026 = vshll.u32 %v3025, 30
        %v3027 = vsub.s32 %v3023, %v3026
        %vm3028 = vcmp.lt.s32.totalorder %v3027, 0
        %v3029 = vsub.s32 0, %v3027
        %v3030 = vsel %vm3028, %v3029, %v3027
        %v3031 = vclz %v3030
        %v3032 = vsub.s32 %v3031, 2
        %vm3033 = vcmp.gt.s32.totalorder 0, %v3032
        %v3034 = vsel %vm3033, 0, %v3032
        %v3035 = vsub.s32 32, %v3034
        %v3036 = vshll.u32 %v3027, %v3034
        %v3037 = vshrl.u32 %v3019, %v3035
        %v3038 = vor.u32 %v3036, %v3037
        %v3039 = vsub.s32 4294967266, %v3034
        %v3040 = vadd.s32 %v3039, 127
        %v3041 = vshll.u32 %v3040, 23
        %v3042 = vor.u32 4788187, %v3041
        %v3043 = vand.u32 2147483647, %v3042
        %v3045 = vcvt.s32.f32 %v3038
        %v3046 = vmul.f32 %v3045, %v3043
        %v3047 = vxor.u32 %v3046, 2147483648
        %v3048 = vsel %vm2965, %v3047, %v3046
        %v3049 = vsub.s32 4, %v3025
        %v3050 = vsel %vm2965, %v3049, %v3025
        %v3051 = vsel %vm2964, %v1283, %v3048
        %v3052 = vsel %vm2964, 0, %v3050
        %v3053 = vcosq.f32.pop %v3051
        %v3054 = vsinq.f32.pop %v3051
        %vm3055 = vweird.f32 %v1283
        %v3056 = vadd.s32 %v3052, 3
        %v3057 = vand.u32 %v3056, 3
        %vm3058 = vcmp.lt.s32.totalorder %v3057, 2
        %vm3059 = vcmp.eq.s32.totalorder %v3057, 0
        %v3060 = vxor.u32 %v3054, 2147483648
        %v3061 = vsel %vm3059, %v3053, %v3060
        %vm3062 = vcmp.eq.s32.totalorder %v3057, 2
        %v3063 = vxor.u32 %v3053, 2147483648
        %v3064 = vsel %vm3062, %v3063, %v3054
        %v3065 = vsel %vm3058, %v3061, %v3064
        %v3066 = vsel %vm3055, nan, %v3065
        %v3067 = vand.u32 2147483647, %v1284
        %vm3068 = vcmp.le.f32.partialorder %v3067, 0.7853982
        %vm3069 = vcmp.lt.s32.totalorder %v1284, 0
        %v3070 = vand.u32 %v1284, 2139095040
        %v3071 = vshrl.u32 %v3070, 23
        %v3072 = vsub.s32 %v3071, 127
        %v3073 = vand.u32 2147483647, %v1284
        %v3074 = vand.u32 %v3073, 8388607
        %v3075 = vor.u32 %v3074, 8388608
        %v3076 = vsub.s32 0, %v3075
        %v3077 = vadd.s32 %v3072, 1
        %vm3078 = vcmp.gt.s32.totalorder %v3077, 0
        %v3079 = vsel %vm3078, %v3077, 0
        %v3080 = vshrl.u32 %v3079, 5
        %v3081 = vand.u32 %v3079, 31
        %v3082 = vsub.s32 32, %v3081
        %v3083 = vshrl.u32 683565275, %v3082
        %v3084 = vshll.u32 683565275, %v3081
        %v3085 = vshrl.u32 2475754826, %v3082
        %v3086 = vor.u32 %v3084, %v3085
        %v3087 = vshll.u32 2475754826, %v3081
        %v3088 = vshrl.u32 2131351028, %v3082
        %v3089 = vor.u32 %v3087, %v3088
        %v3090 = vshll.u32 2131351028, %v3081
        %v3091 = vshrl.u32 2102212464, %v3082
        %v3092 = vor.u32 %v3090, %v3091
        %v3093 = vshll.u32 2102212464, %v3081
        %v3094 = vshrl.u32 920167782, %v3082
        %v3095 = vor.u32 %v3093, %v3094
        %v3096 = vshll.u32 920167782, %v3081
        %v3097 = vshrl.u32 1326507024, %v3082
        %v3098 = vor.u32 %v3096, %v3097
        %vm3099 = vcmp.lt.s32.totalorder %v3080, 1
        %vm3100 = vcmp.lt.s32.totalorder %v3080, 2
        %vm3101 = vcmp.lt.s32.totalorder %v3080, 3
        %vm3102 = vcmp.lt.s32.totalorder %v3080, 4
        %v3103 = vsel %vm3099, %v3083, %v3086
        %v3104 = vsel %vm3102, %v3092, 2102212464
        %v3105 = vsel %vm3101, %v3089, %v3104
        %v3106 = vsel %vm3100, %v3103, %v3105
        %v3107 = vsel %vm3099, %v3086, %v3089
        %v3108 = vsel %vm3102, %v3095, 920167782
        %v3109 = vsel %vm3101, %v3092, %v3108
        %v3110 = vsel %vm3100, %v3107, %v3109
        %v3111 = vsel %vm3099, %v3089, %v3092
        %v3112 = vsel %vm3102, %v3098, 1326507024
        %v3113 = vsel %vm3101, %v3095, %v3112
        %v3114 = vsel %vm3100, %v3111, %v3113
        %v3115 = vshll.u32 %v3075, 8
        %v3116 = vmul.u32.u64.compose %v3115, %v3114
        %v3117 = vextract.low.u32 %v3116
        %v3118 = vextract.high.u32 %v3116
        %v3119 = vmul.u32.u64.compose %v3115, %v3110
        %v3120 = vextract.low.u32 %v3119
        %v3121 = vextract.high.u32 %v3119
        %v3122 = vmul.u32 %v3115, %v3106
        %v3123 = vadd.s32 %v3118, %v3120
        %vm3124 = vc.u32 %v3118, %v3120
        %v3125 = vadd.s32 %v3121, 1
        %v3126 = vsel %vm3124, %v3125, %v3121
        %v3127 = vadd.s32 %v3122, %v3126
        %v3128 = vadd.s32 %v3127, 536870912
        %v3129 = vshrl.u32 %v3128, 30
        %v3130 = vshll.u32 %v3129, 30
        %v3131 = vsub.s32 %v3127, %v3130
        %vm3132 = vcmp.lt.s32.totalorder %v3131, 0
        %v3133 = vsub.s32 0, %v3131
        %v3134 = vsel %vm3132, %v3133, %v3131
        %v3135 = vclz %v3134
        %v3136 = vsub.s32 %v3135, 2
        %vm3137 = vcmp.gt.s32.totalorder 0, %v3136
        %v3138 = vsel %vm3137, 0, %v3136
        %v3139 = vsub.s32 32, %v3138
        %v3140 = vshll.u32 %v3131, %v3138
        %v3141 = vshrl.u32 %v3123, %v3139
        %v3142 = vor.u32 %v3140, %v3141
        %v3143 = vsub.s32 4294967266, %v3138
        %v3144 = vadd.s32 %v3143, 127
        %v3145 = vshll.u32 %v3144, 23
        %v3146 = vor.u32 4788187, %v3145
        %v3147 = vand.u32 2147483647, %v3146
        %v3149 = vcvt.s32.f32 %v3142
        %v3150 = vmul.f32 %v3149, %v3147
        %v3151 = vxor.u32 %v3150, 2147483648
        %v3152 = vsel %vm3069, %v3151, %v3150
        %v3153 = vsub.s32 4, %v3129
        %v3154 = vsel %vm3069, %v3153, %v3129
        %v3155 = vsel %vm3068, %v1284, %v3152
        %v3156 = vsel %vm3068, 0, %v3154
        %v3157 = vcosq.f32.pop %v3155
        %v3158 = vsinq.f32.pop %v3155
        %vm3159 = vweird.f32 %v1284
        %v3160 = vadd.s32 %v3156, 3
        %v3161 = vand.u32 %v3160, 3
        %vm3162 = vcmp.lt.s32.totalorder %v3161, 2
        %vm3163 = vcmp.eq.s32.totalorder %v3161, 0
        %v3164 = vxor.u32 %v3158, 2147483648
        %v3165 = vsel %vm3163, %v3157, %v3164
        %vm3166 = vcmp.eq.s32.totalorder %v3161, 2
        %v3167 = vxor.u32 %v3157, 2147483648
        %v3168 = vsel %vm3166, %v3167, %v3158
        %v3169 = vsel %vm3162, %v3165, %v3168
        %v3170 = vsel %vm3159, nan, %v3169
        %v3171 = vand.u32 2147483647, %v1285
        %vm3172 = vcmp.le.f32.partialorder %v3171, 0.7853982
        %vm3173 = vcmp.lt.s32.totalorder %v1285, 0
        %v3174 = vand.u32 %v1285, 2139095040
        %v3175 = vshrl.u32 %v3174, 23
        %v3176 = vsub.s32 %v3175, 127
        %v3177 = vand.u32 2147483647, %v1285
        %v3178 = vand.u32 %v3177, 8388607
        %v3179 = vor.u32 %v3178, 8388608
        %v3180 = vsub.s32 0, %v3179
        %v3181 = vadd.s32 %v3176, 1
        %vm3182 = vcmp.gt.s32.totalorder %v3181, 0
        %v3183 = vsel %vm3182, %v3181, 0
        %v3184 = vshrl.u32 %v3183, 5
        %v3185 = vand.u32 %v3183, 31
        %v3186 = vsub.s32 32, %v3185
        %v3187 = vshrl.u32 683565275, %v3186
        %v3188 = vshll.u32 683565275, %v3185
        %v3189 = vshrl.u32 2475754826, %v3186
        %v3190 = vor.u32 %v3188, %v3189
        %v3191 = vshll.u32 2475754826, %v3185
        %v3192 = vshrl.u32 2131351028, %v3186
        %v3193 = vor.u32 %v3191, %v3192
        %v3194 = vshll.u32 2131351028, %v3185
        %v3195 = vshrl.u32 2102212464, %v3186
        %v3196 = vor.u32 %v3194, %v3195
        %v3197 = vshll.u32 2102212464, %v3185
        %v3198 = vshrl.u32 920167782, %v3186
        %v3199 = vor.u32 %v3197, %v3198
        %v3200 = vshll.u32 920167782, %v3185
        %v3201 = vshrl.u32 1326507024, %v3186
        %v3202 = vor.u32 %v3200, %v3201
        %vm3203 = vcmp.lt.s32.totalorder %v3184, 1
        %vm3204 = vcmp.lt.s32.totalorder %v3184, 2
        %vm3205 = vcmp.lt.s32.totalorder %v3184, 3
        %vm3206 = vcmp.lt.s32.totalorder %v3184, 4
        %v3207 = vsel %vm3203, %v3187, %v3190
        %v3208 = vsel %vm3206, %v3196, 2102212464
        %v3209 = vsel %vm3205, %v3193, %v3208
        %v3210 = vsel %vm3204, %v3207, %v3209
        %v3211 = vsel %vm3203, %v3190, %v3193
        %v3212 = vsel %vm3206, %v3199, 920167782
        %v3213 = vsel %vm3205, %v3196, %v3212
        %v3214 = vsel %vm3204, %v3211, %v3213
        %v3215 = vsel %vm3203, %v3193, %v3196
        %v3216 = vsel %vm3206, %v3202, 1326507024
        %v3217 = vsel %vm3205, %v3199, %v3216
        %v3218 = vsel %vm3204, %v3215, %v3217
        %v3219 = vshll.u32 %v3179, 8
        %v3220 = vmul.u32.u64.compose %v3219, %v3218
        %v3221 = vextract.low.u32 %v3220
        %v3222 = vextract.high.u32 %v3220
        %v3223 = vmul.u32.u64.compose %v3219, %v3214
        %v3224 = vextract.low.u32 %v3223
        %v3225 = vextract.high.u32 %v3223
        %v3226 = vmul.u32 %v3219, %v3210
        %v3227 = vadd.s32 %v3222, %v3224
        %vm3228 = vc.u32 %v3222, %v3224
        %v3229 = vadd.s32 %v3225, 1
        %v3230 = vsel %vm3228, %v3229, %v3225
        %v3231 = vadd.s32 %v3226, %v3230
        %v3232 = vadd.s32 %v3231, 536870912
        %v3233 = vshrl.u32 %v3232, 30
        %v3234 = vshll.u32 %v3233, 30
        %v3235 = vsub.s32 %v3231, %v3234
        %vm3236 = vcmp.lt.s32.totalorder %v3235, 0
        %v3237 = vsub.s32 0, %v3235
        %v3238 = vsel %vm3236, %v3237, %v3235
        %v3239 = vclz %v3238
        %v3240 = vsub.s32 %v3239, 2
        %vm3241 = vcmp.gt.s32.totalorder 0, %v3240
        %v3242 = vsel %vm3241, 0, %v3240
        %v3243 = vsub.s32 32, %v3242
        %v3244 = vshll.u32 %v3235, %v3242
        %v3245 = vshrl.u32 %v3227, %v3243
        %v3246 = vor.u32 %v3244, %v3245
        %v3247 = vsub.s32 4294967266, %v3242
        %v3248 = vadd.s32 %v3247, 127
        %v3249 = vshll.u32 %v3248, 23
        %v3250 = vor.u32 4788187, %v3249
        %v3251 = vand.u32 2147483647, %v3250
        %v3253 = vcvt.s32.f32 %v3246
        %v3254 = vmul.f32 %v3253, %v3251
        %v3255 = vxor.u32 %v3254, 2147483648
        %v3256 = vsel %vm3173, %v3255, %v3254
        %v3257 = vsub.s32 4, %v3233
        %v3258 = vsel %vm3173, %v3257, %v3233
        %v3259 = vsel %vm3172, %v1285, %v3256
        %v3260 = vsel %vm3172, 0, %v3258
        %v3261 = vcosq.f32.pop %v3259
        %v3262 = vsinq.f32.pop %v3259
        %vm3263 = vweird.f32 %v1285
        %v3264 = vadd.s32 %v3260, 3
        %v3265 = vand.u32 %v3264, 3
        %vm3266 = vcmp.lt.s32.totalorder %v3265, 2
        %vm3267 = vcmp.eq.s32.totalorder %v3265, 0
        %v3268 = vxor.u32 %v3262, 2147483648
        %v3269 = vsel %vm3267, %v3261, %v3268
        %vm3270 = vcmp.eq.s32.totalorder %v3265, 2
        %v3271 = vxor.u32 %v3261, 2147483648
        %v3272 = vsel %vm3270, %v3271, %v3262
        %v3273 = vsel %vm3266, %v3269, %v3272
        %v3274 = vsel %vm3263, nan, %v3273
        %v3275 = vand.u32 2147483647, %v1286
        %vm3276 = vcmp.le.f32.partialorder %v3275, 0.7853982
        %vm3277 = vcmp.lt.s32.totalorder %v1286, 0
        %v3278 = vand.u32 %v1286, 2139095040
        %v3279 = vshrl.u32 %v3278, 23
        %v3280 = vsub.s32 %v3279, 127
        %v3281 = vand.u32 2147483647, %v1286
        %v3282 = vand.u32 %v3281, 8388607
        %v3283 = vor.u32 %v3282, 8388608
        %v3284 = vsub.s32 0, %v3283
        %v3285 = vadd.s32 %v3280, 1
        %vm3286 = vcmp.gt.s32.totalorder %v3285, 0
        %v3287 = vsel %vm3286, %v3285, 0
        %v3288 = vshrl.u32 %v3287, 5
        %v3289 = vand.u32 %v3287, 31
        %v3290 = vsub.s32 32, %v3289
        %v3291 = vshrl.u32 683565275, %v3290
        %v3292 = vshll.u32 683565275, %v3289
        %v3293 = vshrl.u32 2475754826, %v3290
        %v3294 = vor.u32 %v3292, %v3293
        %v3295 = vshll.u32 2475754826, %v3289
        %v3296 = vshrl.u32 2131351028, %v3290
        %v3297 = vor.u32 %v3295, %v3296
        %v3298 = vshll.u32 2131351028, %v3289
        %v3299 = vshrl.u32 2102212464, %v3290
        %v3300 = vor.u32 %v3298, %v3299
        %v3301 = vshll.u32 2102212464, %v3289
        %v3302 = vshrl.u32 920167782, %v3290
        %v3303 = vor.u32 %v3301, %v3302
        %v3304 = vshll.u32 920167782, %v3289
        %v3305 = vshrl.u32 1326507024, %v3290
        %v3306 = vor.u32 %v3304, %v3305
        %vm3307 = vcmp.lt.s32.totalorder %v3288, 1
        %vm3308 = vcmp.lt.s32.totalorder %v3288, 2
        %vm3309 = vcmp.lt.s32.totalorder %v3288, 3
        %vm3310 = vcmp.lt.s32.totalorder %v3288, 4
        %v3311 = vsel %vm3307, %v3291, %v3294
        %v3312 = vsel %vm3310, %v3300, 2102212464
        %v3313 = vsel %vm3309, %v3297, %v3312
        %v3314 = vsel %vm3308, %v3311, %v3313
        %v3315 = vsel %vm3307, %v3294, %v3297
        %v3316 = vsel %vm3310, %v3303, 920167782
        %v3317 = vsel %vm3309, %v3300, %v3316
        %v3318 = vsel %vm3308, %v3315, %v3317
        %v3319 = vsel %vm3307, %v3297, %v3300
        %v3320 = vsel %vm3310, %v3306, 1326507024
        %v3321 = vsel %vm3309, %v3303, %v3320
        %v3322 = vsel %vm3308, %v3319, %v3321
        %v3323 = vshll.u32 %v3283, 8
        %v3324 = vmul.u32.u64.compose %v3323, %v3322
        %v3325 = vextract.low.u32 %v3324
        %v3326 = vextract.high.u32 %v3324
        %v3327 = vmul.u32.u64.compose %v3323, %v3318
        %v3328 = vextract.low.u32 %v3327
        %v3329 = vextract.high.u32 %v3327
        %v3330 = vmul.u32 %v3323, %v3314
        %v3331 = vadd.s32 %v3326, %v3328
        %vm3332 = vc.u32 %v3326, %v3328
        %v3333 = vadd.s32 %v3329, 1
        %v3334 = vsel %vm3332, %v3333, %v3329
        %v3335 = vadd.s32 %v3330, %v3334
        %v3336 = vadd.s32 %v3335, 536870912
        %v3337 = vshrl.u32 %v3336, 30
        %v3338 = vshll.u32 %v3337, 30
        %v3339 = vsub.s32 %v3335, %v3338
        %vm3340 = vcmp.lt.s32.totalorder %v3339, 0
        %v3341 = vsub.s32 0, %v3339
        %v3342 = vsel %vm3340, %v3341, %v3339
        %v3343 = vclz %v3342
        %v3344 = vsub.s32 %v3343, 2
        %vm3345 = vcmp.gt.s32.totalorder 0, %v3344
        %v3346 = vsel %vm3345, 0, %v3344
        %v3347 = vsub.s32 32, %v3346
        %v3348 = vshll.u32 %v3339, %v3346
        %v3349 = vshrl.u32 %v3331, %v3347
        %v3350 = vor.u32 %v3348, %v3349
        %v3351 = vsub.s32 4294967266, %v3346
        %v3352 = vadd.s32 %v3351, 127
        %v3353 = vshll.u32 %v3352, 23
        %v3354 = vor.u32 4788187, %v3353
        %v3355 = vand.u32 2147483647, %v3354
        %v3357 = vcvt.s32.f32 %v3350
        %v3358 = vmul.f32 %v3357, %v3355
        %v3359 = vxor.u32 %v3358, 2147483648
        %v3360 = vsel %vm3277, %v3359, %v3358
        %v3361 = vsub.s32 4, %v3337
        %v3362 = vsel %vm3277, %v3361, %v3337
        %v3363 = vsel %vm3276, %v1286, %v3360
        %v3364 = vsel %vm3276, 0, %v3362
        %v3365 = vcosq.f32.pop %v3363
        %v3366 = vsinq.f32.pop %v3363
        %vm3367 = vweird.f32 %v1286
        %v3368 = vadd.s32 %v3364, 3
        %v3369 = vand.u32 %v3368, 3
        %vm3370 = vcmp.lt.s32.totalorder %v3369, 2
        %vm3371 = vcmp.eq.s32.totalorder %v3369, 0
        %v3372 = vxor.u32 %v3366, 2147483648
        %v3373 = vsel %vm3371, %v3365, %v3372
        %vm3374 = vcmp.eq.s32.totalorder %v3369, 2
        %v3375 = vxor.u32 %v3365, 2147483648
        %v3376 = vsel %vm3374, %v3375, %v3366
        %v3377 = vsel %vm3370, %v3373, %v3376
        %v3378 = vsel %vm3367, nan, %v3377
        %v3379 = vand.u32 2147483647, %v1287
        %vm3380 = vcmp.le.f32.partialorder %v3379, 0.7853982
        %vm3381 = vcmp.lt.s32.totalorder %v1287, 0
        %v3382 = vand.u32 %v1287, 2139095040
        %v3383 = vshrl.u32 %v3382, 23
        %v3384 = vsub.s32 %v3383, 127
        %v3385 = vand.u32 2147483647, %v1287
        %v3386 = vand.u32 %v3385, 8388607
        %v3387 = vor.u32 %v3386, 8388608
        %v3388 = vsub.s32 0, %v3387
        %v3389 = vadd.s32 %v3384, 1
        %vm3390 = vcmp.gt.s32.totalorder %v3389, 0
        %v3391 = vsel %vm3390, %v3389, 0
        %v3392 = vshrl.u32 %v3391, 5
        %v3393 = vand.u32 %v3391, 31
        %v3394 = vsub.s32 32, %v3393
        %v3395 = vshrl.u32 683565275, %v3394
        %v3396 = vshll.u32 683565275, %v3393
        %v3397 = vshrl.u32 2475754826, %v3394
        %v3398 = vor.u32 %v3396, %v3397
        %v3399 = vshll.u32 2475754826, %v3393
        %v3400 = vshrl.u32 2131351028, %v3394
        %v3401 = vor.u32 %v3399, %v3400
        %v3402 = vshll.u32 2131351028, %v3393
        %v3403 = vshrl.u32 2102212464, %v3394
        %v3404 = vor.u32 %v3402, %v3403
        %v3405 = vshll.u32 2102212464, %v3393
        %v3406 = vshrl.u32 920167782, %v3394
        %v3407 = vor.u32 %v3405, %v3406
        %v3408 = vshll.u32 920167782, %v3393
        %v3409 = vshrl.u32 1326507024, %v3394
        %v3410 = vor.u32 %v3408, %v3409
        %vm3411 = vcmp.lt.s32.totalorder %v3392, 1
        %vm3412 = vcmp.lt.s32.totalorder %v3392, 2
        %vm3413 = vcmp.lt.s32.totalorder %v3392, 3
        %vm3414 = vcmp.lt.s32.totalorder %v3392, 4
        %v3415 = vsel %vm3411, %v3395, %v3398
        %v3416 = vsel %vm3414, %v3404, 2102212464
        %v3417 = vsel %vm3413, %v3401, %v3416
        %v3418 = vsel %vm3412, %v3415, %v3417
        %v3419 = vsel %vm3411, %v3398, %v3401
        %v3420 = vsel %vm3414, %v3407, 920167782
        %v3421 = vsel %vm3413, %v3404, %v3420
        %v3422 = vsel %vm3412, %v3419, %v3421
        %v3423 = vsel %vm3411, %v3401, %v3404
        %v3424 = vsel %vm3414, %v3410, 1326507024
        %v3425 = vsel %vm3413, %v3407, %v3424
        %v3426 = vsel %vm3412, %v3423, %v3425
        %v3427 = vshll.u32 %v3387, 8
        %v3428 = vmul.u32.u64.compose %v3427, %v3426
        %v3429 = vextract.low.u32 %v3428
        %v3430 = vextract.high.u32 %v3428
        %v3431 = vmul.u32.u64.compose %v3427, %v3422
        %v3432 = vextract.low.u32 %v3431
        %v3433 = vextract.high.u32 %v3431
        %v3434 = vmul.u32 %v3427, %v3418
        %v3435 = vadd.s32 %v3430, %v3432
        %vm3436 = vc.u32 %v3430, %v3432
        %v3437 = vadd.s32 %v3433, 1
        %v3438 = vsel %vm3436, %v3437, %v3433
        %v3439 = vadd.s32 %v3434, %v3438
        %v3440 = vadd.s32 %v3439, 536870912
        %v3441 = vshrl.u32 %v3440, 30
        %v3442 = vshll.u32 %v3441, 30
        %v3443 = vsub.s32 %v3439, %v3442
        %vm3444 = vcmp.lt.s32.totalorder %v3443, 0
        %v3445 = vsub.s32 0, %v3443
        %v3446 = vsel %vm3444, %v3445, %v3443
        %v3447 = vclz %v3446
        %v3448 = vsub.s32 %v3447, 2
        %vm3449 = vcmp.gt.s32.totalorder 0, %v3448
        %v3450 = vsel %vm3449, 0, %v3448
        %v3451 = vsub.s32 32, %v3450
        %v3452 = vshll.u32 %v3443, %v3450
        %v3453 = vshrl.u32 %v3435, %v3451
        %v3454 = vor.u32 %v3452, %v3453
        %v3455 = vsub.s32 4294967266, %v3450
        %v3456 = vadd.s32 %v3455, 127
        %v3457 = vshll.u32 %v3456, 23
        %v3458 = vor.u32 4788187, %v3457
        %v3459 = vand.u32 2147483647, %v3458
        %v3461 = vcvt.s32.f32 %v3454
        %v3462 = vmul.f32 %v3461, %v3459
        %v3463 = vxor.u32 %v3462, 2147483648
        %v3464 = vsel %vm3381, %v3463, %v3462
        %v3465 = vsub.s32 4, %v3441
        %v3466 = vsel %vm3381, %v3465, %v3441
        %v3467 = vsel %vm3380, %v1287, %v3464
        %v3468 = vsel %vm3380, 0, %v3466
        %v3469 = vcosq.f32.pop %v3467
        %v3470 = vsinq.f32.pop %v3467
        %vm3471 = vweird.f32 %v1287
        %v3472 = vadd.s32 %v3468, 3
        %v3473 = vand.u32 %v3472, 3
        %vm3474 = vcmp.lt.s32.totalorder %v3473, 2
        %vm3475 = vcmp.eq.s32.totalorder %v3473, 0
        %v3476 = vxor.u32 %v3470, 2147483648
        %v3477 = vsel %vm3475, %v3469, %v3476
        %vm3478 = vcmp.eq.s32.totalorder %v3473, 2
        %v3479 = vxor.u32 %v3469, 2147483648
        %v3480 = vsel %vm3478, %v3479, %v3470
        %v3481 = vsel %vm3474, %v3477, %v3480
        %v3482 = vsel %vm3471, nan, %v3481
        %v3483 = vand.u32 2147483647, %v1288
        %vm3484 = vcmp.le.f32.partialorder %v3483, 0.7853982
        %vm3485 = vcmp.lt.s32.totalorder %v1288, 0
        %v3486 = vand.u32 %v1288, 2139095040
        %v3487 = vshrl.u32 %v3486, 23
        %v3488 = vsub.s32 %v3487, 127
        %v3489 = vand.u32 2147483647, %v1288
        %v3490 = vand.u32 %v3489, 8388607
        %v3491 = vor.u32 %v3490, 8388608
        %v3492 = vsub.s32 0, %v3491
        %v3493 = vadd.s32 %v3488, 1
        %vm3494 = vcmp.gt.s32.totalorder %v3493, 0
        %v3495 = vsel %vm3494, %v3493, 0
        %v3496 = vshrl.u32 %v3495, 5
        %v3497 = vand.u32 %v3495, 31
        %v3498 = vsub.s32 32, %v3497
        %v3499 = vshrl.u32 683565275, %v3498
        %v3500 = vshll.u32 683565275, %v3497
        %v3501 = vshrl.u32 2475754826, %v3498
        %v3502 = vor.u32 %v3500, %v3501
        %v3503 = vshll.u32 2475754826, %v3497
        %v3504 = vshrl.u32 2131351028, %v3498
        %v3505 = vor.u32 %v3503, %v3504
        %v3506 = vshll.u32 2131351028, %v3497
        %v3507 = vshrl.u32 2102212464, %v3498
        %v3508 = vor.u32 %v3506, %v3507
        %v3509 = vshll.u32 2102212464, %v3497
        %v3510 = vshrl.u32 920167782, %v3498
        %v3511 = vor.u32 %v3509, %v3510
        %v3512 = vshll.u32 920167782, %v3497
        %v3513 = vshrl.u32 1326507024, %v3498
        %v3514 = vor.u32 %v3512, %v3513
        %vm3515 = vcmp.lt.s32.totalorder %v3496, 1
        %vm3516 = vcmp.lt.s32.totalorder %v3496, 2
        %vm3517 = vcmp.lt.s32.totalorder %v3496, 3
        %vm3518 = vcmp.lt.s32.totalorder %v3496, 4
        %v3519 = vsel %vm3515, %v3499, %v3502
        %v3520 = vsel %vm3518, %v3508, 2102212464
        %v3521 = vsel %vm3517, %v3505, %v3520
        %v3522 = vsel %vm3516, %v3519, %v3521
        %v3523 = vsel %vm3515, %v3502, %v3505
        %v3524 = vsel %vm3518, %v3511, 920167782
        %v3525 = vsel %vm3517, %v3508, %v3524
        %v3526 = vsel %vm3516, %v3523, %v3525
        %v3527 = vsel %vm3515, %v3505, %v3508
        %v3528 = vsel %vm3518, %v3514, 1326507024
        %v3529 = vsel %vm3517, %v3511, %v3528
        %v3530 = vsel %vm3516, %v3527, %v3529
        %v3531 = vshll.u32 %v3491, 8
        %v3532 = vmul.u32.u64.compose %v3531, %v3530
        %v3533 = vextract.low.u32 %v3532
        %v3534 = vextract.high.u32 %v3532
        %v3535 = vmul.u32.u64.compose %v3531, %v3526
        %v3536 = vextract.low.u32 %v3535
        %v3537 = vextract.high.u32 %v3535
        %v3538 = vmul.u32 %v3531, %v3522
        %v3539 = vadd.s32 %v3534, %v3536
        %vm3540 = vc.u32 %v3534, %v3536
        %v3541 = vadd.s32 %v3537, 1
        %v3542 = vsel %vm3540, %v3541, %v3537
        %v3543 = vadd.s32 %v3538, %v3542
        %v3544 = vadd.s32 %v3543, 536870912
        %v3545 = vshrl.u32 %v3544, 30
        %v3546 = vshll.u32 %v3545, 30
        %v3547 = vsub.s32 %v3543, %v3546
        %vm3548 = vcmp.lt.s32.totalorder %v3547, 0
        %v3549 = vsub.s32 0, %v3547
        %v3550 = vsel %vm3548, %v3549, %v3547
        %v3551 = vclz %v3550
        %v3552 = vsub.s32 %v3551, 2
        %vm3553 = vcmp.gt.s32.totalorder 0, %v3552
        %v3554 = vsel %vm3553, 0, %v3552
        %v3555 = vsub.s32 32, %v3554
        %v3556 = vshll.u32 %v3547, %v3554
        %v3557 = vshrl.u32 %v3539, %v3555
        %v3558 = vor.u32 %v3556, %v3557
        %v3559 = vsub.s32 4294967266, %v3554
        %v3560 = vadd.s32 %v3559, 127
        %v3561 = vshll.u32 %v3560, 23
        %v3562 = vor.u32 4788187, %v3561
        %v3563 = vand.u32 2147483647, %v3562
        %v3565 = vcvt.s32.f32 %v3558
        %v3566 = vmul.f32 %v3565, %v3563
        %v3567 = vxor.u32 %v3566, 2147483648
        %v3568 = vsel %vm3485, %v3567, %v3566
        %v3569 = vsub.s32 4, %v3545
        %v3570 = vsel %vm3485, %v3569, %v3545
        %v3571 = vsel %vm3484, %v1288, %v3568
        %v3572 = vsel %vm3484, 0, %v3570
        %v3573 = vcosq.f32.pop %v3571
        %v3574 = vsinq.f32.pop %v3571
        %vm3575 = vweird.f32 %v1288
        %v3576 = vadd.s32 %v3572, 3
        %v3577 = vand.u32 %v3576, 3
        %vm3578 = vcmp.lt.s32.totalorder %v3577, 2
        %vm3579 = vcmp.eq.s32.totalorder %v3577, 0
        %v3580 = vxor.u32 %v3574, 2147483648
        %v3581 = vsel %vm3579, %v3573, %v3580
        %vm3582 = vcmp.eq.s32.totalorder %v3577, 2
        %v3583 = vxor.u32 %v3573, 2147483648
        %v3584 = vsel %vm3582, %v3583, %v3574
        %v3585 = vsel %vm3578, %v3581, %v3584
        %v3586 = vsel %vm3575, nan, %v3585
        %v3587 = vand.u32 2147483647, %v1289
        %vm3588 = vcmp.le.f32.partialorder %v3587, 0.7853982
        %vm3589 = vcmp.lt.s32.totalorder %v1289, 0
        %v3590 = vand.u32 %v1289, 2139095040
        %v3591 = vshrl.u32 %v3590, 23
        %v3592 = vsub.s32 %v3591, 127
        %v3593 = vand.u32 2147483647, %v1289
        %v3594 = vand.u32 %v3593, 8388607
        %v3595 = vor.u32 %v3594, 8388608
        %v3596 = vsub.s32 0, %v3595
        %v3597 = vadd.s32 %v3592, 1
        %vm3598 = vcmp.gt.s32.totalorder %v3597, 0
        %v3599 = vsel %vm3598, %v3597, 0
        %v3600 = vshrl.u32 %v3599, 5
        %v3601 = vand.u32 %v3599, 31
        %v3602 = vsub.s32 32, %v3601
        %v3603 = vshrl.u32 683565275, %v3602
        %v3604 = vshll.u32 683565275, %v3601
        %v3605 = vshrl.u32 2475754826, %v3602
        %v3606 = vor.u32 %v3604, %v3605
        %v3607 = vshll.u32 2475754826, %v3601
        %v3608 = vshrl.u32 2131351028, %v3602
        %v3609 = vor.u32 %v3607, %v3608
        %v3610 = vshll.u32 2131351028, %v3601
        %v3611 = vshrl.u32 2102212464, %v3602
        %v3612 = vor.u32 %v3610, %v3611
        %v3613 = vshll.u32 2102212464, %v3601
        %v3614 = vshrl.u32 920167782, %v3602
        %v3615 = vor.u32 %v3613, %v3614
        %v3616 = vshll.u32 920167782, %v3601
        %v3617 = vshrl.u32 1326507024, %v3602
        %v3618 = vor.u32 %v3616, %v3617
        %vm3619 = vcmp.lt.s32.totalorder %v3600, 1
        %vm3620 = vcmp.lt.s32.totalorder %v3600, 2
        %vm3621 = vcmp.lt.s32.totalorder %v3600, 3
        %vm3622 = vcmp.lt.s32.totalorder %v3600, 4
        %v3623 = vsel %vm3619, %v3603, %v3606
        %v3624 = vsel %vm3622, %v3612, 2102212464
        %v3625 = vsel %vm3621, %v3609, %v3624
        %v3626 = vsel %vm3620, %v3623, %v3625
        %v3627 = vsel %vm3619, %v3606, %v3609
        %v3628 = vsel %vm3622, %v3615, 920167782
        %v3629 = vsel %vm3621, %v3612, %v3628
        %v3630 = vsel %vm3620, %v3627, %v3629
        %v3631 = vsel %vm3619, %v3609, %v3612
        %v3632 = vsel %vm3622, %v3618, 1326507024
        %v3633 = vsel %vm3621, %v3615, %v3632
        %v3634 = vsel %vm3620, %v3631, %v3633
        %v3635 = vshll.u32 %v3595, 8
        %v3636 = vmul.u32.u64.compose %v3635, %v3634
        %v3637 = vextract.low.u32 %v3636
        %v3638 = vextract.high.u32 %v3636
        %v3639 = vmul.u32.u64.compose %v3635, %v3630
        %v3640 = vextract.low.u32 %v3639
        %v3641 = vextract.high.u32 %v3639
        %v3642 = vmul.u32 %v3635, %v3626
        %v3643 = vadd.s32 %v3638, %v3640
        %vm3644 = vc.u32 %v3638, %v3640
        %v3645 = vadd.s32 %v3641, 1
        %v3646 = vsel %vm3644, %v3645, %v3641
        %v3647 = vadd.s32 %v3642, %v3646
        %v3648 = vadd.s32 %v3647, 536870912
        %v3649 = vshrl.u32 %v3648, 30
        %v3650 = vshll.u32 %v3649, 30
        %v3651 = vsub.s32 %v3647, %v3650
        %vm3652 = vcmp.lt.s32.totalorder %v3651, 0
        %v3653 = vsub.s32 0, %v3651
        %v3654 = vsel %vm3652, %v3653, %v3651
        %v3655 = vclz %v3654
        %v3656 = vsub.s32 %v3655, 2
        %vm3657 = vcmp.gt.s32.totalorder 0, %v3656
        %v3658 = vsel %vm3657, 0, %v3656
        %v3659 = vsub.s32 32, %v3658
        %v3660 = vshll.u32 %v3651, %v3658
        %v3661 = vshrl.u32 %v3643, %v3659
        %v3662 = vor.u32 %v3660, %v3661
        %v3663 = vsub.s32 4294967266, %v3658
        %v3664 = vadd.s32 %v3663, 127
        %v3665 = vshll.u32 %v3664, 23
        %v3666 = vor.u32 4788187, %v3665
        %v3667 = vand.u32 2147483647, %v3666
        %v3669 = vcvt.s32.f32 %v3662
        %v3670 = vmul.f32 %v3669, %v3667
        %v3671 = vxor.u32 %v3670, 2147483648
        %v3672 = vsel %vm3589, %v3671, %v3670
        %v3673 = vsub.s32 4, %v3649
        %v3674 = vsel %vm3589, %v3673, %v3649
        %v3675 = vsel %vm3588, %v1289, %v3672
        %v3676 = vsel %vm3588, 0, %v3674
        %v3677 = vcosq.f32.pop %v3675
        %v3678 = vsinq.f32.pop %v3675
        %vm3679 = vweird.f32 %v1289
        %v3680 = vadd.s32 %v3676, 3
        %v3681 = vand.u32 %v3680, 3
        %vm3682 = vcmp.lt.s32.totalorder %v3681, 2
        %vm3683 = vcmp.eq.s32.totalorder %v3681, 0
        %v3684 = vxor.u32 %v3678, 2147483648
        %v3685 = vsel %vm3683, %v3677, %v3684
        %vm3686 = vcmp.eq.s32.totalorder %v3681, 2
        %v3687 = vxor.u32 %v3677, 2147483648
        %v3688 = vsel %vm3686, %v3687, %v3678
        %v3689 = vsel %vm3682, %v3685, %v3688
        %v3690 = vsel %vm3679, nan, %v3689
        %v3691 = vand.u32 2147483647, %v1290
        %vm3692 = vcmp.le.f32.partialorder %v3691, 0.7853982
        %vm3693 = vcmp.lt.s32.totalorder %v1290, 0
        %v3694 = vand.u32 %v1290, 2139095040
        %v3695 = vshrl.u32 %v3694, 23
        %v3696 = vsub.s32 %v3695, 127
        %v3697 = vand.u32 2147483647, %v1290
        %v3698 = vand.u32 %v3697, 8388607
        %v3699 = vor.u32 %v3698, 8388608
        %v3700 = vsub.s32 0, %v3699
        %v3701 = vadd.s32 %v3696, 1
        %vm3702 = vcmp.gt.s32.totalorder %v3701, 0
        %v3703 = vsel %vm3702, %v3701, 0
        %v3704 = vshrl.u32 %v3703, 5
        %v3705 = vand.u32 %v3703, 31
        %v3706 = vsub.s32 32, %v3705
        %v3707 = vshrl.u32 683565275, %v3706
        %v3708 = vshll.u32 683565275, %v3705
        %v3709 = vshrl.u32 2475754826, %v3706
        %v3710 = vor.u32 %v3708, %v3709
        %v3711 = vshll.u32 2475754826, %v3705
        %v3712 = vshrl.u32 2131351028, %v3706
        %v3713 = vor.u32 %v3711, %v3712
        %v3714 = vshll.u32 2131351028, %v3705
        %v3715 = vshrl.u32 2102212464, %v3706
        %v3716 = vor.u32 %v3714, %v3715
        %v3717 = vshll.u32 2102212464, %v3705
        %v3718 = vshrl.u32 920167782, %v3706
        %v3719 = vor.u32 %v3717, %v3718
        %v3720 = vshll.u32 920167782, %v3705
        %v3721 = vshrl.u32 1326507024, %v3706
        %v3722 = vor.u32 %v3720, %v3721
        %vm3723 = vcmp.lt.s32.totalorder %v3704, 1
        %vm3724 = vcmp.lt.s32.totalorder %v3704, 2
        %vm3725 = vcmp.lt.s32.totalorder %v3704, 3
        %vm3726 = vcmp.lt.s32.totalorder %v3704, 4
        %v3727 = vsel %vm3723, %v3707, %v3710
        %v3728 = vsel %vm3726, %v3716, 2102212464
        %v3729 = vsel %vm3725, %v3713, %v3728
        %v3730 = vsel %vm3724, %v3727, %v3729
        %v3731 = vsel %vm3723, %v3710, %v3713
        %v3732 = vsel %vm3726, %v3719, 920167782
        %v3733 = vsel %vm3725, %v3716, %v3732
        %v3734 = vsel %vm3724, %v3731, %v3733
        %v3735 = vsel %vm3723, %v3713, %v3716
        %v3736 = vsel %vm3726, %v3722, 1326507024
        %v3737 = vsel %vm3725, %v3719, %v3736
        %v3738 = vsel %vm3724, %v3735, %v3737
        %v3739 = vshll.u32 %v3699, 8
        %v3740 = vmul.u32.u64.compose %v3739, %v3738
        %v3741 = vextract.low.u32 %v3740
        %v3742 = vextract.high.u32 %v3740
        %v3743 = vmul.u32.u64.compose %v3739, %v3734
        %v3744 = vextract.low.u32 %v3743
        %v3745 = vextract.high.u32 %v3743
        %v3746 = vmul.u32 %v3739, %v3730
        %v3747 = vadd.s32 %v3742, %v3744
        %vm3748 = vc.u32 %v3742, %v3744
        %v3749 = vadd.s32 %v3745, 1
        %v3750 = vsel %vm3748, %v3749, %v3745
        %v3751 = vadd.s32 %v3746, %v3750
        %v3752 = vadd.s32 %v3751, 536870912
        %v3753 = vshrl.u32 %v3752, 30
        %v3754 = vshll.u32 %v3753, 30
        %v3755 = vsub.s32 %v3751, %v3754
        %vm3756 = vcmp.lt.s32.totalorder %v3755, 0
        %v3757 = vsub.s32 0, %v3755
        %v3758 = vsel %vm3756, %v3757, %v3755
        %v3759 = vclz %v3758
        %v3760 = vsub.s32 %v3759, 2
        %vm3761 = vcmp.gt.s32.totalorder 0, %v3760
        %v3762 = vsel %vm3761, 0, %v3760
        %v3763 = vsub.s32 32, %v3762
        %v3764 = vshll.u32 %v3755, %v3762
        %v3765 = vshrl.u32 %v3747, %v3763
        %v3766 = vor.u32 %v3764, %v3765
        %v3767 = vsub.s32 4294967266, %v3762
        %v3768 = vadd.s32 %v3767, 127
        %v3769 = vshll.u32 %v3768, 23
        %v3770 = vor.u32 4788187, %v3769
        %v3771 = vand.u32 2147483647, %v3770
        %v3773 = vcvt.s32.f32 %v3766
        %v3774 = vmul.f32 %v3773, %v3771
        %v3775 = vxor.u32 %v3774, 2147483648
        %v3776 = vsel %vm3693, %v3775, %v3774
        %v3777 = vsub.s32 4, %v3753
        %v3778 = vsel %vm3693, %v3777, %v3753
        %v3779 = vsel %vm3692, %v1290, %v3776
        %v3780 = vsel %vm3692, 0, %v3778
        %v3781 = vcosq.f32.pop %v3779
        %v3782 = vsinq.f32.pop %v3779
        %vm3783 = vweird.f32 %v1290
        %v3784 = vadd.s32 %v3780, 3
        %v3785 = vand.u32 %v3784, 3
        %vm3786 = vcmp.lt.s32.totalorder %v3785, 2
        %vm3787 = vcmp.eq.s32.totalorder %v3785, 0
        %v3788 = vxor.u32 %v3782, 2147483648
        %v3789 = vsel %vm3787, %v3781, %v3788
        %vm3790 = vcmp.eq.s32.totalorder %v3785, 2
        %v3791 = vxor.u32 %v3781, 2147483648
        %v3792 = vsel %vm3790, %v3791, %v3782
        %v3793 = vsel %vm3786, %v3789, %v3792
        %v3794 = vsel %vm3783, nan, %v3793
        %v3795 = vand.u32 2147483647, %v1291
        %vm3796 = vcmp.le.f32.partialorder %v3795, 0.7853982
        %vm3797 = vcmp.lt.s32.totalorder %v1291, 0
        %v3798 = vand.u32 %v1291, 2139095040
        %v3799 = vshrl.u32 %v3798, 23
        %v3800 = vsub.s32 %v3799, 127
        %v3801 = vand.u32 2147483647, %v1291
        %v3802 = vand.u32 %v3801, 8388607
        %v3803 = vor.u32 %v3802, 8388608
        %v3804 = vsub.s32 0, %v3803
        %v3805 = vadd.s32 %v3800, 1
        %vm3806 = vcmp.gt.s32.totalorder %v3805, 0
        %v3807 = vsel %vm3806, %v3805, 0
        %v3808 = vshrl.u32 %v3807, 5
        %v3809 = vand.u32 %v3807, 31
        %v3810 = vsub.s32 32, %v3809
        %v3811 = vshrl.u32 683565275, %v3810
        %v3812 = vshll.u32 683565275, %v3809
        %v3813 = vshrl.u32 2475754826, %v3810
        %v3814 = vor.u32 %v3812, %v3813
        %v3815 = vshll.u32 2475754826, %v3809
        %v3816 = vshrl.u32 2131351028, %v3810
        %v3817 = vor.u32 %v3815, %v3816
        %v3818 = vshll.u32 2131351028, %v3809
        %v3819 = vshrl.u32 2102212464, %v3810
        %v3820 = vor.u32 %v3818, %v3819
        %v3821 = vshll.u32 2102212464, %v3809
        %v3822 = vshrl.u32 920167782, %v3810
        %v3823 = vor.u32 %v3821, %v3822
        %v3824 = vshll.u32 920167782, %v3809
        %v3825 = vshrl.u32 1326507024, %v3810
        %v3826 = vor.u32 %v3824, %v3825
        %vm3827 = vcmp.lt.s32.totalorder %v3808, 1
        %vm3828 = vcmp.lt.s32.totalorder %v3808, 2
        %vm3829 = vcmp.lt.s32.totalorder %v3808, 3
        %vm3830 = vcmp.lt.s32.totalorder %v3808, 4
        %v3831 = vsel %vm3827, %v3811, %v3814
        %v3832 = vsel %vm3830, %v3820, 2102212464
        %v3833 = vsel %vm3829, %v3817, %v3832
        %v3834 = vsel %vm3828, %v3831, %v3833
        %v3835 = vsel %vm3827, %v3814, %v3817
        %v3836 = vsel %vm3830, %v3823, 920167782
        %v3837 = vsel %vm3829, %v3820, %v3836
        %v3838 = vsel %vm3828, %v3835, %v3837
        %v3839 = vsel %vm3827, %v3817, %v3820
        %v3840 = vsel %vm3830, %v3826, 1326507024
        %v3841 = vsel %vm3829, %v3823, %v3840
        %v3842 = vsel %vm3828, %v3839, %v3841
        %v3843 = vshll.u32 %v3803, 8
        %v3844 = vmul.u32.u64.compose %v3843, %v3842
        %v3845 = vextract.low.u32 %v3844
        %v3846 = vextract.high.u32 %v3844
        %v3847 = vmul.u32.u64.compose %v3843, %v3838
        %v3848 = vextract.low.u32 %v3847
        %v3849 = vextract.high.u32 %v3847
        %v3850 = vmul.u32 %v3843, %v3834
        %v3851 = vadd.s32 %v3846, %v3848
        %vm3852 = vc.u32 %v3846, %v3848
        %v3853 = vadd.s32 %v3849, 1
        %v3854 = vsel %vm3852, %v3853, %v3849
        %v3855 = vadd.s32 %v3850, %v3854
        %v3856 = vadd.s32 %v3855, 536870912
        %v3857 = vshrl.u32 %v3856, 30
        %v3858 = vshll.u32 %v3857, 30
        %v3859 = vsub.s32 %v3855, %v3858
        %vm3860 = vcmp.lt.s32.totalorder %v3859, 0
        %v3861 = vsub.s32 0, %v3859
        %v3862 = vsel %vm3860, %v3861, %v3859
        %v3863 = vclz %v3862
        %v3864 = vsub.s32 %v3863, 2
        %vm3865 = vcmp.gt.s32.totalorder 0, %v3864
        %v3866 = vsel %vm3865, 0, %v3864
        %v3867 = vsub.s32 32, %v3866
        %v3868 = vshll.u32 %v3859, %v3866
        %v3869 = vshrl.u32 %v3851, %v3867
        %v3870 = vor.u32 %v3868, %v3869
        %v3871 = vsub.s32 4294967266, %v3866
        %v3872 = vadd.s32 %v3871, 127
        %v3873 = vshll.u32 %v3872, 23
        %v3874 = vor.u32 4788187, %v3873
        %v3875 = vand.u32 2147483647, %v3874
        %v3877 = vcvt.s32.f32 %v3870
        %v3878 = vmul.f32 %v3877, %v3875
        %v3879 = vxor.u32 %v3878, 2147483648
        %v3880 = vsel %vm3797, %v3879, %v3878
        %v3881 = vsub.s32 4, %v3857
        %v3882 = vsel %vm3797, %v3881, %v3857
        %v3883 = vsel %vm3796, %v1291, %v3880
        %v3884 = vsel %vm3796, 0, %v3882
        %v3885 = vcosq.f32.pop %v3883
        %v3886 = vsinq.f32.pop %v3883
        %vm3887 = vweird.f32 %v1291
        %v3888 = vadd.s32 %v3884, 3
        %v3889 = vand.u32 %v3888, 3
        %vm3890 = vcmp.lt.s32.totalorder %v3889, 2
        %vm3891 = vcmp.eq.s32.totalorder %v3889, 0
        %v3892 = vxor.u32 %v3886, 2147483648
        %v3893 = vsel %vm3891, %v3885, %v3892
        %vm3894 = vcmp.eq.s32.totalorder %v3889, 2
        %v3895 = vxor.u32 %v3885, 2147483648
        %v3896 = vsel %vm3894, %v3895, %v3886
        %v3897 = vsel %vm3890, %v3893, %v3896
        %v3898 = vsel %vm3887, nan, %v3897
        %v3899 = vand.u32 2147483647, %v1292
        %vm3900 = vcmp.le.f32.partialorder %v3899, 0.7853982
        %vm3901 = vcmp.lt.s32.totalorder %v1292, 0
        %v3902 = vand.u32 %v1292, 2139095040
        %v3903 = vshrl.u32 %v3902, 23
        %v3904 = vsub.s32 %v3903, 127
        %v3905 = vand.u32 2147483647, %v1292
        %v3906 = vand.u32 %v3905, 8388607
        %v3907 = vor.u32 %v3906, 8388608
        %v3908 = vsub.s32 0, %v3907
        %v3909 = vadd.s32 %v3904, 1
        %vm3910 = vcmp.gt.s32.totalorder %v3909, 0
        %v3911 = vsel %vm3910, %v3909, 0
        %v3912 = vshrl.u32 %v3911, 5
        %v3913 = vand.u32 %v3911, 31
        %v3914 = vsub.s32 32, %v3913
        %v3915 = vshrl.u32 683565275, %v3914
        %v3916 = vshll.u32 683565275, %v3913
        %v3917 = vshrl.u32 2475754826, %v3914
        %v3918 = vor.u32 %v3916, %v3917
        %v3919 = vshll.u32 2475754826, %v3913
        %v3920 = vshrl.u32 2131351028, %v3914
        %v3921 = vor.u32 %v3919, %v3920
        %v3922 = vshll.u32 2131351028, %v3913
        %v3923 = vshrl.u32 2102212464, %v3914
        %v3924 = vor.u32 %v3922, %v3923
        %v3925 = vshll.u32 2102212464, %v3913
        %v3926 = vshrl.u32 920167782, %v3914
        %v3927 = vor.u32 %v3925, %v3926
        %v3928 = vshll.u32 920167782, %v3913
        %v3929 = vshrl.u32 1326507024, %v3914
        %v3930 = vor.u32 %v3928, %v3929
        %vm3931 = vcmp.lt.s32.totalorder %v3912, 1
        %vm3932 = vcmp.lt.s32.totalorder %v3912, 2
        %vm3933 = vcmp.lt.s32.totalorder %v3912, 3
        %vm3934 = vcmp.lt.s32.totalorder %v3912, 4
        %v3935 = vsel %vm3931, %v3915, %v3918
        %v3936 = vsel %vm3934, %v3924, 2102212464
        %v3937 = vsel %vm3933, %v3921, %v3936
        %v3938 = vsel %vm3932, %v3935, %v3937
        %v3939 = vsel %vm3931, %v3918, %v3921
        %v3940 = vsel %vm3934, %v3927, 920167782
        %v3941 = vsel %vm3933, %v3924, %v3940
        %v3942 = vsel %vm3932, %v3939, %v3941
        %v3943 = vsel %vm3931, %v3921, %v3924
        %v3944 = vsel %vm3934, %v3930, 1326507024
        %v3945 = vsel %vm3933, %v3927, %v3944
        %v3946 = vsel %vm3932, %v3943, %v3945
        %v3947 = vshll.u32 %v3907, 8
        %v3948 = vmul.u32.u64.compose %v3947, %v3946
        %v3949 = vextract.low.u32 %v3948
        %v3950 = vextract.high.u32 %v3948
        %v3951 = vmul.u32.u64.compose %v3947, %v3942
        %v3952 = vextract.low.u32 %v3951
        %v3953 = vextract.high.u32 %v3951
        %v3954 = vmul.u32 %v3947, %v3938
        %v3955 = vadd.s32 %v3950, %v3952
        %vm3956 = vc.u32 %v3950, %v3952
        %v3957 = vadd.s32 %v3953, 1
        %v3958 = vsel %vm3956, %v3957, %v3953
        %v3959 = vadd.s32 %v3954, %v3958
        %v3960 = vadd.s32 %v3959, 536870912
        %v3961 = vshrl.u32 %v3960, 30
        %v3962 = vshll.u32 %v3961, 30
        %v3963 = vsub.s32 %v3959, %v3962
        %vm3964 = vcmp.lt.s32.totalorder %v3963, 0
        %v3965 = vsub.s32 0, %v3963
        %v3966 = vsel %vm3964, %v3965, %v3963
        %v3967 = vclz %v3966
        %v3968 = vsub.s32 %v3967, 2
        %vm3969 = vcmp.gt.s32.totalorder 0, %v3968
        %v3970 = vsel %vm3969, 0, %v3968
        %v3971 = vsub.s32 32, %v3970
        %v3972 = vshll.u32 %v3963, %v3970
        %v3973 = vshrl.u32 %v3955, %v3971
        %v3974 = vor.u32 %v3972, %v3973
        %v3975 = vsub.s32 4294967266, %v3970
        %v3976 = vadd.s32 %v3975, 127
        %v3977 = vshll.u32 %v3976, 23
        %v3978 = vor.u32 4788187, %v3977
        %v3979 = vand.u32 2147483647, %v3978
        %v3981 = vcvt.s32.f32 %v3974
        %v3982 = vmul.f32 %v3981, %v3979
        %v3983 = vxor.u32 %v3982, 2147483648
        %v3984 = vsel %vm3901, %v3983, %v3982
        %v3985 = vsub.s32 4, %v3961
        %v3986 = vsel %vm3901, %v3985, %v3961
        %v3987 = vsel %vm3900, %v1292, %v3984
        %v3988 = vsel %vm3900, 0, %v3986
        %v3989 = vcosq.f32.pop %v3987
        %v3990 = vsinq.f32.pop %v3987
        %vm3991 = vweird.f32 %v1292
        %v3992 = vadd.s32 %v3988, 3
        %v3993 = vand.u32 %v3992, 3
        %vm3994 = vcmp.lt.s32.totalorder %v3993, 2
        %vm3995 = vcmp.eq.s32.totalorder %v3993, 0
        %v3996 = vxor.u32 %v3990, 2147483648
        %v3997 = vsel %vm3995, %v3989, %v3996
        %vm3998 = vcmp.eq.s32.totalorder %v3993, 2
        %v3999 = vxor.u32 %v3989, 2147483648
        %v4000 = vsel %vm3998, %v3999, %v3990
        %v4001 = vsel %vm3994, %v3997, %v4000
        %v4002 = vsel %vm3991, nan, %v4001
        %v4003 = vand.u32 2147483647, %v1293
        %vm4004 = vcmp.le.f32.partialorder %v4003, 0.7853982
        %vm4005 = vcmp.lt.s32.totalorder %v1293, 0
        %v4006 = vand.u32 %v1293, 2139095040
        %v4007 = vshrl.u32 %v4006, 23
        %v4008 = vsub.s32 %v4007, 127
        %v4009 = vand.u32 2147483647, %v1293
        %v4010 = vand.u32 %v4009, 8388607
        %v4011 = vor.u32 %v4010, 8388608
        %v4012 = vsub.s32 0, %v4011
        %v4013 = vadd.s32 %v4008, 1
        %vm4014 = vcmp.gt.s32.totalorder %v4013, 0
        %v4015 = vsel %vm4014, %v4013, 0
        %v4016 = vshrl.u32 %v4015, 5
        %v4017 = vand.u32 %v4015, 31
        %v4018 = vsub.s32 32, %v4017
        %v4019 = vshrl.u32 683565275, %v4018
        %v4020 = vshll.u32 683565275, %v4017
        %v4021 = vshrl.u32 2475754826, %v4018
        %v4022 = vor.u32 %v4020, %v4021
        %v4023 = vshll.u32 2475754826, %v4017
        %v4024 = vshrl.u32 2131351028, %v4018
        %v4025 = vor.u32 %v4023, %v4024
        %v4026 = vshll.u32 2131351028, %v4017
        %v4027 = vshrl.u32 2102212464, %v4018
        %v4028 = vor.u32 %v4026, %v4027
        %v4029 = vshll.u32 2102212464, %v4017
        %v4030 = vshrl.u32 920167782, %v4018
        %v4031 = vor.u32 %v4029, %v4030
        %v4032 = vshll.u32 920167782, %v4017
        %v4033 = vshrl.u32 1326507024, %v4018
        %v4034 = vor.u32 %v4032, %v4033
        %vm4035 = vcmp.lt.s32.totalorder %v4016, 1
        %vm4036 = vcmp.lt.s32.totalorder %v4016, 2
        %vm4037 = vcmp.lt.s32.totalorder %v4016, 3
        %vm4038 = vcmp.lt.s32.totalorder %v4016, 4
        %v4039 = vsel %vm4035, %v4019, %v4022
        %v4040 = vsel %vm4038, %v4028, 2102212464
        %v4041 = vsel %vm4037, %v4025, %v4040
        %v4042 = vsel %vm4036, %v4039, %v4041
        %v4043 = vsel %vm4035, %v4022, %v4025
        %v4044 = vsel %vm4038, %v4031, 920167782
        %v4045 = vsel %vm4037, %v4028, %v4044
        %v4046 = vsel %vm4036, %v4043, %v4045
        %v4047 = vsel %vm4035, %v4025, %v4028
        %v4048 = vsel %vm4038, %v4034, 1326507024
        %v4049 = vsel %vm4037, %v4031, %v4048
        %v4050 = vsel %vm4036, %v4047, %v4049
        %v4051 = vshll.u32 %v4011, 8
        %v4052 = vmul.u32.u64.compose %v4051, %v4050
        %v4053 = vextract.low.u32 %v4052
        %v4054 = vextract.high.u32 %v4052
        %v4055 = vmul.u32.u64.compose %v4051, %v4046
        %v4056 = vextract.low.u32 %v4055
        %v4057 = vextract.high.u32 %v4055
        %v4058 = vmul.u32 %v4051, %v4042
        %v4059 = vadd.s32 %v4054, %v4056
        %vm4060 = vc.u32 %v4054, %v4056
        %v4061 = vadd.s32 %v4057, 1
        %v4062 = vsel %vm4060, %v4061, %v4057
        %v4063 = vadd.s32 %v4058, %v4062
        %v4064 = vadd.s32 %v4063, 536870912
        %v4065 = vshrl.u32 %v4064, 30
        %v4066 = vshll.u32 %v4065, 30
        %v4067 = vsub.s32 %v4063, %v4066
        %vm4068 = vcmp.lt.s32.totalorder %v4067, 0
        %v4069 = vsub.s32 0, %v4067
        %v4070 = vsel %vm4068, %v4069, %v4067
        %v4071 = vclz %v4070
        %v4072 = vsub.s32 %v4071, 2
        %vm4073 = vcmp.gt.s32.totalorder 0, %v4072
        %v4074 = vsel %vm4073, 0, %v4072
        %v4075 = vsub.s32 32, %v4074
        %v4076 = vshll.u32 %v4067, %v4074
        %v4077 = vshrl.u32 %v4059, %v4075
        %v4078 = vor.u32 %v4076, %v4077
        %v4079 = vsub.s32 4294967266, %v4074
        %v4080 = vadd.s32 %v4079, 127
        %v4081 = vshll.u32 %v4080, 23
        %v4082 = vor.u32 4788187, %v4081
        %v4083 = vand.u32 2147483647, %v4082
        %v4085 = vcvt.s32.f32 %v4078
        %v4086 = vmul.f32 %v4085, %v4083
        %v4087 = vxor.u32 %v4086, 2147483648
        %v4088 = vsel %vm4005, %v4087, %v4086
        %v4089 = vsub.s32 4, %v4065
        %v4090 = vsel %vm4005, %v4089, %v4065
        %v4091 = vsel %vm4004, %v1293, %v4088
        %v4092 = vsel %vm4004, 0, %v4090
        %v4093 = vcosq.f32.pop %v4091
        %v4094 = vsinq.f32.pop %v4091
        %vm4095 = vweird.f32 %v1293
        %v4096 = vadd.s32 %v4092, 3
        %v4097 = vand.u32 %v4096, 3
        %vm4098 = vcmp.lt.s32.totalorder %v4097, 2
        %vm4099 = vcmp.eq.s32.totalorder %v4097, 0
        %v4100 = vxor.u32 %v4094, 2147483648
        %v4101 = vsel %vm4099, %v4093, %v4100
        %vm4102 = vcmp.eq.s32.totalorder %v4097, 2
        %v4103 = vxor.u32 %v4093, 2147483648
        %v4104 = vsel %vm4102, %v4103, %v4094
        %v4105 = vsel %vm4098, %v4101, %v4104
        %v4106 = vsel %vm4095, nan, %v4105
        %v4107 = vand.u32 2147483647, %v1294
        %vm4108 = vcmp.le.f32.partialorder %v4107, 0.7853982
        %vm4109 = vcmp.lt.s32.totalorder %v1294, 0
        %v4110 = vand.u32 %v1294, 2139095040
        %v4111 = vshrl.u32 %v4110, 23
        %v4112 = vsub.s32 %v4111, 127
        %v4113 = vand.u32 2147483647, %v1294
        %v4114 = vand.u32 %v4113, 8388607
        %v4115 = vor.u32 %v4114, 8388608
        %v4116 = vsub.s32 0, %v4115
        %v4117 = vadd.s32 %v4112, 1
        %vm4118 = vcmp.gt.s32.totalorder %v4117, 0
        %v4119 = vsel %vm4118, %v4117, 0
        %v4120 = vshrl.u32 %v4119, 5
        %v4121 = vand.u32 %v4119, 31
        %v4122 = vsub.s32 32, %v4121
        %v4123 = vshrl.u32 683565275, %v4122
        %v4124 = vshll.u32 683565275, %v4121
        %v4125 = vshrl.u32 2475754826, %v4122
        %v4126 = vor.u32 %v4124, %v4125
        %v4127 = vshll.u32 2475754826, %v4121
        %v4128 = vshrl.u32 2131351028, %v4122
        %v4129 = vor.u32 %v4127, %v4128
        %v4130 = vshll.u32 2131351028, %v4121
        %v4131 = vshrl.u32 2102212464, %v4122
        %v4132 = vor.u32 %v4130, %v4131
        %v4133 = vshll.u32 2102212464, %v4121
        %v4134 = vshrl.u32 920167782, %v4122
        %v4135 = vor.u32 %v4133, %v4134
        %v4136 = vshll.u32 920167782, %v4121
        %v4137 = vshrl.u32 1326507024, %v4122
        %v4138 = vor.u32 %v4136, %v4137
        %vm4139 = vcmp.lt.s32.totalorder %v4120, 1
        %vm4140 = vcmp.lt.s32.totalorder %v4120, 2
        %vm4141 = vcmp.lt.s32.totalorder %v4120, 3
        %vm4142 = vcmp.lt.s32.totalorder %v4120, 4
        %v4143 = vsel %vm4139, %v4123, %v4126
        %v4144 = vsel %vm4142, %v4132, 2102212464
        %v4145 = vsel %vm4141, %v4129, %v4144
        %v4146 = vsel %vm4140, %v4143, %v4145
        %v4147 = vsel %vm4139, %v4126, %v4129
        %v4148 = vsel %vm4142, %v4135, 920167782
        %v4149 = vsel %vm4141, %v4132, %v4148
        %v4150 = vsel %vm4140, %v4147, %v4149
        %v4151 = vsel %vm4139, %v4129, %v4132
        %v4152 = vsel %vm4142, %v4138, 1326507024
        %v4153 = vsel %vm4141, %v4135, %v4152
        %v4154 = vsel %vm4140, %v4151, %v4153
        %v4155 = vshll.u32 %v4115, 8
        %v4156 = vmul.u32.u64.compose %v4155, %v4154
        %v4157 = vextract.low.u32 %v4156
        %v4158 = vextract.high.u32 %v4156
        %v4159 = vmul.u32.u64.compose %v4155, %v4150
        %v4160 = vextract.low.u32 %v4159
        %v4161 = vextract.high.u32 %v4159
        %v4162 = vmul.u32 %v4155, %v4146
        %v4163 = vadd.s32 %v4158, %v4160
        %vm4164 = vc.u32 %v4158, %v4160
        %v4165 = vadd.s32 %v4161, 1
        %v4166 = vsel %vm4164, %v4165, %v4161
        %v4167 = vadd.s32 %v4162, %v4166
        %v4168 = vadd.s32 %v4167, 536870912
        %v4169 = vshrl.u32 %v4168, 30
        %v4170 = vshll.u32 %v4169, 30
        %v4171 = vsub.s32 %v4167, %v4170
        %vm4172 = vcmp.lt.s32.totalorder %v4171, 0
        %v4173 = vsub.s32 0, %v4171
        %v4174 = vsel %vm4172, %v4173, %v4171
        %v4175 = vclz %v4174
        %v4176 = vsub.s32 %v4175, 2
        %vm4177 = vcmp.gt.s32.totalorder 0, %v4176
        %v4178 = vsel %vm4177, 0, %v4176
        %v4179 = vsub.s32 32, %v4178
        %v4180 = vshll.u32 %v4171, %v4178
        %v4181 = vshrl.u32 %v4163, %v4179
        %v4182 = vor.u32 %v4180, %v4181
        %v4183 = vsub.s32 4294967266, %v4178
        %v4184 = vadd.s32 %v4183, 127
        %v4185 = vshll.u32 %v4184, 23
        %v4186 = vor.u32 4788187, %v4185
        %v4187 = vand.u32 2147483647, %v4186
        %v4189 = vcvt.s32.f32 %v4182
        %v4190 = vmul.f32 %v4189, %v4187
        %v4191 = vxor.u32 %v4190, 2147483648
        %v4192 = vsel %vm4109, %v4191, %v4190
        %v4193 = vsub.s32 4, %v4169
        %v4194 = vsel %vm4109, %v4193, %v4169
        %v4195 = vsel %vm4108, %v1294, %v4192
        %v4196 = vsel %vm4108, 0, %v4194
        %v4197 = vcosq.f32.pop %v4195
        %v4198 = vsinq.f32.pop %v4195
        %vm4199 = vweird.f32 %v1294
        %v4200 = vadd.s32 %v4196, 3
        %v4201 = vand.u32 %v4200, 3
        %vm4202 = vcmp.lt.s32.totalorder %v4201, 2
        %vm4203 = vcmp.eq.s32.totalorder %v4201, 0
        %v4204 = vxor.u32 %v4198, 2147483648
        %v4205 = vsel %vm4203, %v4197, %v4204
        %vm4206 = vcmp.eq.s32.totalorder %v4201, 2
        %v4207 = vxor.u32 %v4197, 2147483648
        %v4208 = vsel %vm4206, %v4207, %v4198
        %v4209 = vsel %vm4202, %v4205, %v4208
        %v4210 = vsel %vm4199, nan, %v4209
        %v4211 = vand.u32 2147483647, %v1295
        %vm4212 = vcmp.le.f32.partialorder %v4211, 0.7853982
        %vm4213 = vcmp.lt.s32.totalorder %v1295, 0
        %v4214 = vand.u32 %v1295, 2139095040
        %v4215 = vshrl.u32 %v4214, 23
        %v4216 = vsub.s32 %v4215, 127
        %v4217 = vand.u32 2147483647, %v1295
        %v4218 = vand.u32 %v4217, 8388607
        %v4219 = vor.u32 %v4218, 8388608
        %v4220 = vsub.s32 0, %v4219
        %v4221 = vadd.s32 %v4216, 1
        %vm4222 = vcmp.gt.s32.totalorder %v4221, 0
        %v4223 = vsel %vm4222, %v4221, 0
        %v4224 = vshrl.u32 %v4223, 5
        %v4225 = vand.u32 %v4223, 31
        %v4226 = vsub.s32 32, %v4225
        %v4227 = vshrl.u32 683565275, %v4226
        %v4228 = vshll.u32 683565275, %v4225
        %v4229 = vshrl.u32 2475754826, %v4226
        %v4230 = vor.u32 %v4228, %v4229
        %v4231 = vshll.u32 2475754826, %v4225
        %v4232 = vshrl.u32 2131351028, %v4226
        %v4233 = vor.u32 %v4231, %v4232
        %v4234 = vshll.u32 2131351028, %v4225
        %v4235 = vshrl.u32 2102212464, %v4226
        %v4236 = vor.u32 %v4234, %v4235
        %v4237 = vshll.u32 2102212464, %v4225
        %v4238 = vshrl.u32 920167782, %v4226
        %v4239 = vor.u32 %v4237, %v4238
        %v4240 = vshll.u32 920167782, %v4225
        %v4241 = vshrl.u32 1326507024, %v4226
        %v4242 = vor.u32 %v4240, %v4241
        %vm4243 = vcmp.lt.s32.totalorder %v4224, 1
        %vm4244 = vcmp.lt.s32.totalorder %v4224, 2
        %vm4245 = vcmp.lt.s32.totalorder %v4224, 3
        %vm4246 = vcmp.lt.s32.totalorder %v4224, 4
        %v4247 = vsel %vm4243, %v4227, %v4230
        %v4248 = vsel %vm4246, %v4236, 2102212464
        %v4249 = vsel %vm4245, %v4233, %v4248
        %v4250 = vsel %vm4244, %v4247, %v4249
        %v4251 = vsel %vm4243, %v4230, %v4233
        %v4252 = vsel %vm4246, %v4239, 920167782
        %v4253 = vsel %vm4245, %v4236, %v4252
        %v4254 = vsel %vm4244, %v4251, %v4253
        %v4255 = vsel %vm4243, %v4233, %v4236
        %v4256 = vsel %vm4246, %v4242, 1326507024
        %v4257 = vsel %vm4245, %v4239, %v4256
        %v4258 = vsel %vm4244, %v4255, %v4257
        %v4259 = vshll.u32 %v4219, 8
        %v4260 = vmul.u32.u64.compose %v4259, %v4258
        %v4261 = vextract.low.u32 %v4260
        %v4262 = vextract.high.u32 %v4260
        %v4263 = vmul.u32.u64.compose %v4259, %v4254
        %v4264 = vextract.low.u32 %v4263
        %v4265 = vextract.high.u32 %v4263
        %v4266 = vmul.u32 %v4259, %v4250
        %v4267 = vadd.s32 %v4262, %v4264
        %vm4268 = vc.u32 %v4262, %v4264
        %v4269 = vadd.s32 %v4265, 1
        %v4270 = vsel %vm4268, %v4269, %v4265
        %v4271 = vadd.s32 %v4266, %v4270
        %v4272 = vadd.s32 %v4271, 536870912
        %v4273 = vshrl.u32 %v4272, 30
        %v4274 = vshll.u32 %v4273, 30
        %v4275 = vsub.s32 %v4271, %v4274
        %vm4276 = vcmp.lt.s32.totalorder %v4275, 0
        %v4277 = vsub.s32 0, %v4275
        %v4278 = vsel %vm4276, %v4277, %v4275
        %v4279 = vclz %v4278
        %v4280 = vsub.s32 %v4279, 2
        %vm4281 = vcmp.gt.s32.totalorder 0, %v4280
        %v4282 = vsel %vm4281, 0, %v4280
        %v4283 = vsub.s32 32, %v4282
        %v4284 = vshll.u32 %v4275, %v4282
        %v4285 = vshrl.u32 %v4267, %v4283
        %v4286 = vor.u32 %v4284, %v4285
        %v4287 = vsub.s32 4294967266, %v4282
        %v4288 = vadd.s32 %v4287, 127
        %v4289 = vshll.u32 %v4288, 23
        %v4290 = vor.u32 4788187, %v4289
        %v4291 = vand.u32 2147483647, %v4290
        %v4293 = vcvt.s32.f32 %v4286
        %v4294 = vmul.f32 %v4293, %v4291
        %v4295 = vxor.u32 %v4294, 2147483648
        %v4296 = vsel %vm4213, %v4295, %v4294
        %v4297 = vsub.s32 4, %v4273
        %v4298 = vsel %vm4213, %v4297, %v4273
        %v4299 = vsel %vm4212, %v1295, %v4296
        %v4300 = vsel %vm4212, 0, %v4298
        %v4301 = vcosq.f32.pop %v4299
        %v4302 = vsinq.f32.pop %v4299
        %vm4303 = vweird.f32 %v1295
        %v4304 = vadd.s32 %v4300, 3
        %v4305 = vand.u32 %v4304, 3
        %vm4306 = vcmp.lt.s32.totalorder %v4305, 2
        %vm4307 = vcmp.eq.s32.totalorder %v4305, 0
        %v4308 = vxor.u32 %v4302, 2147483648
        %v4309 = vsel %vm4307, %v4301, %v4308
        %vm4310 = vcmp.eq.s32.totalorder %v4305, 2
        %v4311 = vxor.u32 %v4301, 2147483648
        %v4312 = vsel %vm4310, %v4311, %v4302
        %v4313 = vsel %vm4306, %v4309, %v4312
        %v4314 = vsel %vm4303, nan, %v4313
        %v4315 = vand.u32 2147483647, %v1296
        %vm4316 = vcmp.le.f32.partialorder %v4315, 0.7853982
        %vm4317 = vcmp.lt.s32.totalorder %v1296, 0
        %v4318 = vand.u32 %v1296, 2139095040
        %v4319 = vshrl.u32 %v4318, 23
        %v4320 = vsub.s32 %v4319, 127
        %v4321 = vand.u32 2147483647, %v1296
        %v4322 = vand.u32 %v4321, 8388607
        %v4323 = vor.u32 %v4322, 8388608
        %v4324 = vsub.s32 0, %v4323
        %v4325 = vadd.s32 %v4320, 1
        %vm4326 = vcmp.gt.s32.totalorder %v4325, 0
        %v4327 = vsel %vm4326, %v4325, 0
        %v4328 = vshrl.u32 %v4327, 5
        %v4329 = vand.u32 %v4327, 31
        %v4330 = vsub.s32 32, %v4329
        %v4331 = vshrl.u32 683565275, %v4330
        %v4332 = vshll.u32 683565275, %v4329
        %v4333 = vshrl.u32 2475754826, %v4330
        %v4334 = vor.u32 %v4332, %v4333
        %v4335 = vshll.u32 2475754826, %v4329
        %v4336 = vshrl.u32 2131351028, %v4330
        %v4337 = vor.u32 %v4335, %v4336
        %v4338 = vshll.u32 2131351028, %v4329
        %v4339 = vshrl.u32 2102212464, %v4330
        %v4340 = vor.u32 %v4338, %v4339
        %v4341 = vshll.u32 2102212464, %v4329
        %v4342 = vshrl.u32 920167782, %v4330
        %v4343 = vor.u32 %v4341, %v4342
        %v4344 = vshll.u32 920167782, %v4329
        %v4345 = vshrl.u32 1326507024, %v4330
        %v4346 = vor.u32 %v4344, %v4345
        %vm4347 = vcmp.lt.s32.totalorder %v4328, 1
        %vm4348 = vcmp.lt.s32.totalorder %v4328, 2
        %vm4349 = vcmp.lt.s32.totalorder %v4328, 3
        %vm4350 = vcmp.lt.s32.totalorder %v4328, 4
        %v4351 = vsel %vm4347, %v4331, %v4334
        %v4352 = vsel %vm4350, %v4340, 2102212464
        %v4353 = vsel %vm4349, %v4337, %v4352
        %v4354 = vsel %vm4348, %v4351, %v4353
        %v4355 = vsel %vm4347, %v4334, %v4337
        %v4356 = vsel %vm4350, %v4343, 920167782
        %v4357 = vsel %vm4349, %v4340, %v4356
        %v4358 = vsel %vm4348, %v4355, %v4357
        %v4359 = vsel %vm4347, %v4337, %v4340
        %v4360 = vsel %vm4350, %v4346, 1326507024
        %v4361 = vsel %vm4349, %v4343, %v4360
        %v4362 = vsel %vm4348, %v4359, %v4361
        %v4363 = vshll.u32 %v4323, 8
        %v4364 = vmul.u32.u64.compose %v4363, %v4362
        %v4365 = vextract.low.u32 %v4364
        %v4366 = vextract.high.u32 %v4364
        %v4367 = vmul.u32.u64.compose %v4363, %v4358
        %v4368 = vextract.low.u32 %v4367
        %v4369 = vextract.high.u32 %v4367
        %v4370 = vmul.u32 %v4363, %v4354
        %v4371 = vadd.s32 %v4366, %v4368
        %vm4372 = vc.u32 %v4366, %v4368
        %v4373 = vadd.s32 %v4369, 1
        %v4374 = vsel %vm4372, %v4373, %v4369
        %v4375 = vadd.s32 %v4370, %v4374
        %v4376 = vadd.s32 %v4375, 536870912
        %v4377 = vshrl.u32 %v4376, 30
        %v4378 = vshll.u32 %v4377, 30
        %v4379 = vsub.s32 %v4375, %v4378
        %vm4380 = vcmp.lt.s32.totalorder %v4379, 0
        %v4381 = vsub.s32 0, %v4379
        %v4382 = vsel %vm4380, %v4381, %v4379
        %v4383 = vclz %v4382
        %v4384 = vsub.s32 %v4383, 2
        %vm4385 = vcmp.gt.s32.totalorder 0, %v4384
        %v4386 = vsel %vm4385, 0, %v4384
        %v4387 = vsub.s32 32, %v4386
        %v4388 = vshll.u32 %v4379, %v4386
        %v4389 = vshrl.u32 %v4371, %v4387
        %v4390 = vor.u32 %v4388, %v4389
        %v4391 = vsub.s32 4294967266, %v4386
        %v4392 = vadd.s32 %v4391, 127
        %v4393 = vshll.u32 %v4392, 23
        %v4394 = vor.u32 4788187, %v4393
        %v4395 = vand.u32 2147483647, %v4394
        %v4397 = vcvt.s32.f32 %v4390
        %v4398 = vmul.f32 %v4397, %v4395
        %v4399 = vxor.u32 %v4398, 2147483648
        %v4400 = vsel %vm4317, %v4399, %v4398
        %v4401 = vsub.s32 4, %v4377
        %v4402 = vsel %vm4317, %v4401, %v4377
        %v4403 = vsel %vm4316, %v1296, %v4400
        %v4404 = vsel %vm4316, 0, %v4402
        %v4405 = vcosq.f32.pop %v4403
        %v4406 = vsinq.f32.pop %v4403
        %vm4407 = vweird.f32 %v1296
        %v4408 = vadd.s32 %v4404, 3
        %v4409 = vand.u32 %v4408, 3
        %vm4410 = vcmp.lt.s32.totalorder %v4409, 2
        %vm4411 = vcmp.eq.s32.totalorder %v4409, 0
        %v4412 = vxor.u32 %v4406, 2147483648
        %v4413 = vsel %vm4411, %v4405, %v4412
        %vm4414 = vcmp.eq.s32.totalorder %v4409, 2
        %v4415 = vxor.u32 %v4405, 2147483648
        %v4416 = vsel %vm4414, %v4415, %v4406
        %v4417 = vsel %vm4410, %v4413, %v4416
        %v4418 = vsel %vm4407, nan, %v4417
        %v4419 = vand.u32 2147483647, %v1297
        %vm4420 = vcmp.le.f32.partialorder %v4419, 0.7853982
        %vm4421 = vcmp.lt.s32.totalorder %v1297, 0
        %v4422 = vand.u32 %v1297, 2139095040
        %v4423 = vshrl.u32 %v4422, 23
        %v4424 = vsub.s32 %v4423, 127
        %v4425 = vand.u32 2147483647, %v1297
        %v4426 = vand.u32 %v4425, 8388607
        %v4427 = vor.u32 %v4426, 8388608
        %v4428 = vsub.s32 0, %v4427
        %v4429 = vadd.s32 %v4424, 1
        %vm4430 = vcmp.gt.s32.totalorder %v4429, 0
        %v4431 = vsel %vm4430, %v4429, 0
        %v4432 = vshrl.u32 %v4431, 5
        %v4433 = vand.u32 %v4431, 31
        %v4434 = vsub.s32 32, %v4433
        %v4435 = vshrl.u32 683565275, %v4434
        %v4436 = vshll.u32 683565275, %v4433
        %v4437 = vshrl.u32 2475754826, %v4434
        %v4438 = vor.u32 %v4436, %v4437
        %v4439 = vshll.u32 2475754826, %v4433
        %v4440 = vshrl.u32 2131351028, %v4434
        %v4441 = vor.u32 %v4439, %v4440
        %v4442 = vshll.u32 2131351028, %v4433
        %v4443 = vshrl.u32 2102212464, %v4434
        %v4444 = vor.u32 %v4442, %v4443
        %v4445 = vshll.u32 2102212464, %v4433
        %v4446 = vshrl.u32 920167782, %v4434
        %v4447 = vor.u32 %v4445, %v4446
        %v4448 = vshll.u32 920167782, %v4433
        %v4449 = vshrl.u32 1326507024, %v4434
        %v4450 = vor.u32 %v4448, %v4449
        %vm4451 = vcmp.lt.s32.totalorder %v4432, 1
        %vm4452 = vcmp.lt.s32.totalorder %v4432, 2
        %vm4453 = vcmp.lt.s32.totalorder %v4432, 3
        %vm4454 = vcmp.lt.s32.totalorder %v4432, 4
        %v4455 = vsel %vm4451, %v4435, %v4438
        %v4456 = vsel %vm4454, %v4444, 2102212464
        %v4457 = vsel %vm4453, %v4441, %v4456
        %v4458 = vsel %vm4452, %v4455, %v4457
        %v4459 = vsel %vm4451, %v4438, %v4441
        %v4460 = vsel %vm4454, %v4447, 920167782
        %v4461 = vsel %vm4453, %v4444, %v4460
        %v4462 = vsel %vm4452, %v4459, %v4461
        %v4463 = vsel %vm4451, %v4441, %v4444
        %v4464 = vsel %vm4454, %v4450, 1326507024
        %v4465 = vsel %vm4453, %v4447, %v4464
        %v4466 = vsel %vm4452, %v4463, %v4465
        %v4467 = vshll.u32 %v4427, 8
        %v4468 = vmul.u32.u64.compose %v4467, %v4466
        %v4469 = vextract.low.u32 %v4468
        %v4470 = vextract.high.u32 %v4468
        %v4471 = vmul.u32.u64.compose %v4467, %v4462
        %v4472 = vextract.low.u32 %v4471
        %v4473 = vextract.high.u32 %v4471
        %v4474 = vmul.u32 %v4467, %v4458
        %v4475 = vadd.s32 %v4470, %v4472
        %vm4476 = vc.u32 %v4470, %v4472
        %v4477 = vadd.s32 %v4473, 1
        %v4478 = vsel %vm4476, %v4477, %v4473
        %v4479 = vadd.s32 %v4474, %v4478
        %v4480 = vadd.s32 %v4479, 536870912
        %v4481 = vshrl.u32 %v4480, 30
        %v4482 = vshll.u32 %v4481, 30
        %v4483 = vsub.s32 %v4479, %v4482
        %vm4484 = vcmp.lt.s32.totalorder %v4483, 0
        %v4485 = vsub.s32 0, %v4483
        %v4486 = vsel %vm4484, %v4485, %v4483
        %v4487 = vclz %v4486
        %v4488 = vsub.s32 %v4487, 2
        %vm4489 = vcmp.gt.s32.totalorder 0, %v4488
        %v4490 = vsel %vm4489, 0, %v4488
        %v4491 = vsub.s32 32, %v4490
        %v4492 = vshll.u32 %v4483, %v4490
        %v4493 = vshrl.u32 %v4475, %v4491
        %v4494 = vor.u32 %v4492, %v4493
        %v4495 = vsub.s32 4294967266, %v4490
        %v4496 = vadd.s32 %v4495, 127
        %v4497 = vshll.u32 %v4496, 23
        %v4498 = vor.u32 4788187, %v4497
        %v4499 = vand.u32 2147483647, %v4498
        %v4501 = vcvt.s32.f32 %v4494
        %v4502 = vmul.f32 %v4501, %v4499
        %v4503 = vxor.u32 %v4502, 2147483648
        %v4504 = vsel %vm4421, %v4503, %v4502
        %v4505 = vsub.s32 4, %v4481
        %v4506 = vsel %vm4421, %v4505, %v4481
        %v4507 = vsel %vm4420, %v1297, %v4504
        %v4508 = vsel %vm4420, 0, %v4506
        %v4509 = vcosq.f32.pop %v4507
        %v4510 = vsinq.f32.pop %v4507
        %vm4511 = vweird.f32 %v1297
        %v4512 = vadd.s32 %v4508, 3
        %v4513 = vand.u32 %v4512, 3
        %vm4514 = vcmp.lt.s32.totalorder %v4513, 2
        %vm4515 = vcmp.eq.s32.totalorder %v4513, 0
        %v4516 = vxor.u32 %v4510, 2147483648
        %v4517 = vsel %vm4515, %v4509, %v4516
        %vm4518 = vcmp.eq.s32.totalorder %v4513, 2
        %v4519 = vxor.u32 %v4509, 2147483648
        %v4520 = vsel %vm4518, %v4519, %v4510
        %v4521 = vsel %vm4514, %v4517, %v4520
        %v4522 = vsel %vm4511, nan, %v4521
        %v4523 = vand.u32 2147483647, %v1298
        %vm4524 = vcmp.le.f32.partialorder %v4523, 0.7853982
        %vm4525 = vcmp.lt.s32.totalorder %v1298, 0
        %v4526 = vand.u32 %v1298, 2139095040
        %v4527 = vshrl.u32 %v4526, 23
        %v4528 = vsub.s32 %v4527, 127
        %v4529 = vand.u32 2147483647, %v1298
        %v4530 = vand.u32 %v4529, 8388607
        %v4531 = vor.u32 %v4530, 8388608
        %v4532 = vsub.s32 0, %v4531
        %v4533 = vadd.s32 %v4528, 1
        %vm4534 = vcmp.gt.s32.totalorder %v4533, 0
        %v4535 = vsel %vm4534, %v4533, 0
        %v4536 = vshrl.u32 %v4535, 5
        %v4537 = vand.u32 %v4535, 31
        %v4538 = vsub.s32 32, %v4537
        %v4539 = vshrl.u32 683565275, %v4538
        %v4540 = vshll.u32 683565275, %v4537
        %v4541 = vshrl.u32 2475754826, %v4538
        %v4542 = vor.u32 %v4540, %v4541
        %v4543 = vshll.u32 2475754826, %v4537
        %v4544 = vshrl.u32 2131351028, %v4538
        %v4545 = vor.u32 %v4543, %v4544
        %v4546 = vshll.u32 2131351028, %v4537
        %v4547 = vshrl.u32 2102212464, %v4538
        %v4548 = vor.u32 %v4546, %v4547
        %v4549 = vshll.u32 2102212464, %v4537
        %v4550 = vshrl.u32 920167782, %v4538
        %v4551 = vor.u32 %v4549, %v4550
        %v4552 = vshll.u32 920167782, %v4537
        %v4553 = vshrl.u32 1326507024, %v4538
        %v4554 = vor.u32 %v4552, %v4553
        %vm4555 = vcmp.lt.s32.totalorder %v4536, 1
        %vm4556 = vcmp.lt.s32.totalorder %v4536, 2
        %vm4557 = vcmp.lt.s32.totalorder %v4536, 3
        %vm4558 = vcmp.lt.s32.totalorder %v4536, 4
        %v4559 = vsel %vm4555, %v4539, %v4542
        %v4560 = vsel %vm4558, %v4548, 2102212464
        %v4561 = vsel %vm4557, %v4545, %v4560
        %v4562 = vsel %vm4556, %v4559, %v4561
        %v4563 = vsel %vm4555, %v4542, %v4545
        %v4564 = vsel %vm4558, %v4551, 920167782
        %v4565 = vsel %vm4557, %v4548, %v4564
        %v4566 = vsel %vm4556, %v4563, %v4565
        %v4567 = vsel %vm4555, %v4545, %v4548
        %v4568 = vsel %vm4558, %v4554, 1326507024
        %v4569 = vsel %vm4557, %v4551, %v4568
        %v4570 = vsel %vm4556, %v4567, %v4569
        %v4571 = vshll.u32 %v4531, 8
        %v4572 = vmul.u32.u64.compose %v4571, %v4570
        %v4573 = vextract.low.u32 %v4572
        %v4574 = vextract.high.u32 %v4572
        %v4575 = vmul.u32.u64.compose %v4571, %v4566
        %v4576 = vextract.low.u32 %v4575
        %v4577 = vextract.high.u32 %v4575
        %v4578 = vmul.u32 %v4571, %v4562
        %v4579 = vadd.s32 %v4574, %v4576
        %vm4580 = vc.u32 %v4574, %v4576
        %v4581 = vadd.s32 %v4577, 1
        %v4582 = vsel %vm4580, %v4581, %v4577
        %v4583 = vadd.s32 %v4578, %v4582
        %v4584 = vadd.s32 %v4583, 536870912
        %v4585 = vshrl.u32 %v4584, 30
        %v4586 = vshll.u32 %v4585, 30
        %v4587 = vsub.s32 %v4583, %v4586
        %vm4588 = vcmp.lt.s32.totalorder %v4587, 0
        %v4589 = vsub.s32 0, %v4587
        %v4590 = vsel %vm4588, %v4589, %v4587
        %v4591 = vclz %v4590
        %v4592 = vsub.s32 %v4591, 2
        %vm4593 = vcmp.gt.s32.totalorder 0, %v4592
        %v4594 = vsel %vm4593, 0, %v4592
        %v4595 = vsub.s32 32, %v4594
        %v4596 = vshll.u32 %v4587, %v4594
        %v4597 = vshrl.u32 %v4579, %v4595
        %v4598 = vor.u32 %v4596, %v4597
        %v4599 = vsub.s32 4294967266, %v4594
        %v4600 = vadd.s32 %v4599, 127
        %v4601 = vshll.u32 %v4600, 23
        %v4602 = vor.u32 4788187, %v4601
        %v4603 = vand.u32 2147483647, %v4602
        %v4605 = vcvt.s32.f32 %v4598
        %v4606 = vmul.f32 %v4605, %v4603
        %v4607 = vxor.u32 %v4606, 2147483648
        %v4608 = vsel %vm4525, %v4607, %v4606
        %v4609 = vsub.s32 4, %v4585
        %v4610 = vsel %vm4525, %v4609, %v4585
        %v4611 = vsel %vm4524, %v1298, %v4608
        %v4612 = vsel %vm4524, 0, %v4610
        %v4613 = vcosq.f32.pop %v4611
        %v4614 = vsinq.f32.pop %v4611
        %vm4615 = vweird.f32 %v1298
        %v4616 = vadd.s32 %v4612, 3
        %v4617 = vand.u32 %v4616, 3
        %vm4618 = vcmp.lt.s32.totalorder %v4617, 2
        %vm4619 = vcmp.eq.s32.totalorder %v4617, 0
        %v4620 = vxor.u32 %v4614, 2147483648
        %v4621 = vsel %vm4619, %v4613, %v4620
        %vm4622 = vcmp.eq.s32.totalorder %v4617, 2
        %v4623 = vxor.u32 %v4613, 2147483648
        %v4624 = vsel %vm4622, %v4623, %v4614
        %v4625 = vsel %vm4618, %v4621, %v4624
        %v4626 = vsel %vm4615, nan, %v4625
        %v4627 = vpack.c.bf16 %v1506, %v1402
        %v4628 = vpack.c.bf16 %v1714, %v1610
        %v4629 = vpack.c.bf16 %v1922, %v1818
        %v4630 = vpack.c.bf16 %v2130, %v2026
        %v4631 = vpack.c.bf16 %v2338, %v2234
        %v4632 = vpack.c.bf16 %v2546, %v2442
        %v4633 = vpack.c.bf16 %v2754, %v2650
        %v4634 = vpack.c.bf16 %v2962, %v2858
        %v4635 = vpack.c.bf16 %v3170, %v3066
        %v4636 = vpack.c.bf16 %v3378, %v3274
        %v4637 = vpack.c.bf16 %v3586, %v3482
        %v4638 = vpack.c.bf16 %v3794, %v3690
        %v4639 = vpack.c.bf16 %v4002, %v3898
        %v4640 = vpack.c.bf16 %v4210, %v4106
        %v4641 = vpack.c.bf16 %v4418, %v4314
        %v4642 = vpack.c.bf16 %v4626, %v4522
        %v4643 = vld [vmem:[#allocation7] sm:$0xf]
        %v4644 = vld [vmem:[#allocation7 + $0x4] sm:$0xf]
        %v4645 = vld [vmem:[#allocation7 + $0x8] sm:$0xf]
        %v4646 = vld [vmem:[#allocation7 + $0xc] sm:$0xf]
        %v4647 = vld [vmem:[#allocation7 + $0x10] sm:$0xf]
        %v4648 = vld [vmem:[#allocation7 + $0x14] sm:$0xf]
        %v4649 = vld [vmem:[#allocation7 + $0x18] sm:$0xf]
        %v4650 = vld [vmem:[#allocation7 + $0x1c] sm:$0xf]
        %v4651 = vld [vmem:[#allocation7 + $0x20] sm:$0xf]
        %v4652 = vld [vmem:[#allocation7 + $0x24] sm:$0xf]
        %v4653 = vld [vmem:[#allocation7 + $0x28] sm:$0xf]
        %v4654 = vld [vmem:[#allocation7 + $0x2c] sm:$0xf]
        %v4655 = vld [vmem:[#allocation7 + $0x30] sm:$0xf]
        %v4656 = vld [vmem:[#allocation7 + $0x34] sm:$0xf]
        %v4657 = vld [vmem:[#allocation7 + $0x38] sm:$0xf]
        %v4658 = vld [vmem:[#allocation7 + $0x3c] sm:$0xf]
        %v4659 = vld [vmem:[#allocation8] sm:$0x1]
        %v4661 = vlaneseq
        %v4662 = vshrl.u32 %v4661, 7
        %v4663 = vsub.s32 0, %v4662
        %v4664 = vrot.slane %v4659, %v4663
        %v4682 = vunpack.c.l.b16 %v4643
        %v4683 = vunpack.c.l.b16 %v4644
        %v4684 = vunpack.c.l.b16 %v4645
        %v4685 = vunpack.c.l.b16 %v4646
        %v4686 = vunpack.c.l.b16 %v4647
        %v4687 = vunpack.c.l.b16 %v4648
        %v4688 = vunpack.c.l.b16 %v4649
        %v4689 = vunpack.c.l.b16 %v4650
        %v4690 = vunpack.c.l.b16 %v4651
        %v4691 = vunpack.c.l.b16 %v4652
        %v4692 = vunpack.c.l.b16 %v4653
        %v4693 = vunpack.c.l.b16 %v4654
        %v4694 = vunpack.c.l.b16 %v4655
        %v4695 = vunpack.c.l.b16 %v4656
        %v4696 = vunpack.c.l.b16 %v4657
        %v4697 = vunpack.c.l.b16 %v4658
        %v4698 = vpack.c.b16 %v4683, %v4682
        %v4699 = vpack.c.b16 %v4685, %v4684
        %v4700 = vpack.c.b16 %v4687, %v4686
        %v4701 = vpack.c.b16 %v4689, %v4688
        %v4702 = vpack.c.b16 %v4691, %v4690
        %v4703 = vpack.c.b16 %v4693, %v4692
        %v4704 = vpack.c.b16 %v4695, %v4694
        %v4705 = vpack.c.b16 %v4697, %v4696
        %4714 = vmatprep.subr.bf16.mxu0 0
        %4715 = vmatpush1.bf16.msra.mxu0 %v4698
        %4716 = vmatprep.subr.bf16.mxu0 0
        %4717 = vmatpush1.bf16.msra.mxu0 %v4699
        %4718 = vmatprep.subr.bf16.mxu0 0
        %4719 = vmatpush1.bf16.msra.mxu0 %v4700
        %4720 = vmatprep.subr.bf16.mxu0 0
        %4721 = vmatpush1.bf16.msra.mxu0 %v4701
        %4722 = vmatprep.subr.bf16.mxu0 0
        %4723 = vmatpush1.bf16.msra.mxu0 %v4702
        %4724 = vmatprep.subr.bf16.mxu0 0
        %4725 = vmatpush1.bf16.msra.mxu0 %v4703
        %4726 = vmatprep.subr.bf16.mxu0 0
        %4727 = vmatpush1.bf16.msra.mxu0 %v4704
        %4728 = vmatprep.subr.bf16.mxu0 0
        %4729 = vmatpush1.bf16.msra.mxu0 %v4705
        %4730 = vmatprep.subr.bf16.mxu0 0
        %4731 = vmatpush1.bf16.msra.mxu0 0
        %4732 = vmatprep.subr.bf16.mxu0 0
        %4733 = vmatpush1.bf16.msra.mxu0 0
        %4734 = vmatprep.subr.bf16.mxu0 0
        %4735 = vmatpush1.bf16.msra.mxu0 0
        %4736 = vmatprep.subr.bf16.mxu0 0
        %4737 = vmatpush1.bf16.msra.mxu0 0
        %4738 = vmatprep.subr.bf16.mxu0 0
        %4739 = vmatpush1.bf16.msra.mxu0 0
        %4740 = vmatprep.subr.bf16.mxu0 0
        %4741 = vmatpush1.bf16.msra.mxu0 0
        %4742 = vmatprep.subr.bf16.mxu0 0
        %4743 = vmatpush1.bf16.msra.mxu0 0
        %4744 = vmatprep.subr.bf16.mxu0 0
        %4745 = vmatpush1.bf16.msra.mxu0 0
        %4746 = vmatprep.mubr.bf16.mxu0 0
        %4747 = vmatmul.mubr.bf16.gmra.mrb[0].mxu0 %v4627
        %v4748 = vpop.f32.mrb[0].mxu0
        %v4749 = vadd.f32 %v4664, %v4748
        %v4750 = vpop.f32.mrb[0].mxu0
        %v4751 = vpop.f32.mrb[0].mxu0
        %v4752 = vadd.f32 %v4664, %v4751
        %v4753 = vpop.f32.mrb[0].mxu0
        %4754 = vmatprep.mubr.bf16.mxu0 0
        %4755 = vmatmul.mubr.bf16.gmra.mrb[0].mxu0 %v4628
        %v4756 = vpop.f32.mrb[0].mxu0
        %v4757 = vadd.f32 %v4664, %v4756
        %v4758 = vpop.f32.mrb[0].mxu0
        %v4759 = vpop.f32.mrb[0].mxu0
        %v4760 = vadd.f32 %v4664, %v4759
        %v4761 = vpop.f32.mrb[0].mxu0
        %4762 = vmatprep.mubr.bf16.mxu0 0
        %4763 = vmatmul.mubr.bf16.gmra.mrb[0].mxu0 %v4629
        %v4764 = vpop.f32.mrb[0].mxu0
        %v4765 = vadd.f32 %v4664, %v4764
        %v4766 = vpop.f32.mrb[0].mxu0
        %v4767 = vpop.f32.mrb[0].mxu0
        %v4768 = vadd.f32 %v4664, %v4767
        %v4769 = vpop.f32.mrb[0].mxu0
        %4770 = vmatprep.mubr.bf16.mxu0 0
        %4771 = vmatmul.mubr.bf16.gmra.mrb[0].mxu0 %v4630
        %v4772 = vpop.f32.mrb[0].mxu0
        %v4773 = vadd.f32 %v4664, %v4772
        %v4774 = vpop.f32.mrb[0].mxu0
        %v4775 = vpop.f32.mrb[0].mxu0
        %v4776 = vadd.f32 %v4664, %v4775
        %v4777 = vpop.f32.mrb[0].mxu0
        %4778 = vmatprep.mubr.bf16.mxu0 0
        %4779 = vmatmul.mubr.bf16.gmra.mrb[0].mxu0 %v4631
        %v4780 = vpop.f32.mrb[0].mxu0
        %v4781 = vadd.f32 %v4664, %v4780
        %v4782 = vpop.f32.mrb[0].mxu0
        %v4783 = vpop.f32.mrb[0].mxu0
        %v4784 = vadd.f32 %v4664, %v4783
        %v4785 = vpop.f32.mrb[0].mxu0
        %4786 = vmatprep.mubr.bf16.mxu0 0
        %4787 = vmatmul.mubr.bf16.gmra.mrb[0].mxu0 %v4632
        %v4788 = vpop.f32.mrb[0].mxu0
        %v4789 = vadd.f32 %v4664, %v4788
        %v4790 = vpop.f32.mrb[0].mxu0
        %v4791 = vpop.f32.mrb[0].mxu0
        %v4792 = vadd.f32 %v4664, %v4791
        %v4793 = vpop.f32.mrb[0].mxu0
        %4794 = vmatprep.mubr.bf16.mxu0 0
        %4795 = vmatmul.mubr.bf16.gmra.mrb[0].mxu0 %v4633
        %v4796 = vpop.f32.mrb[0].mxu0
        %v4797 = vadd.f32 %v4664, %v4796
        %v4798 = vpop.f32.mrb[0].mxu0
        %v4799 = vpop.f32.mrb[0].mxu0
        %v4800 = vadd.f32 %v4664, %v4799
        %v4801 = vpop.f32.mrb[0].mxu0
        %4802 = vmatprep.mubr.bf16.mxu0 0
        %4803 = vmatmul.mubr.bf16.gmra.mrb[0].mxu0 %v4634
        %v4804 = vpop.f32.mrb[0].mxu0
        %v4805 = vadd.f32 %v4664, %v4804
        %v4806 = vpop.f32.mrb[0].mxu0
        %v4807 = vpop.f32.mrb[0].mxu0
        %v4808 = vadd.f32 %v4664, %v4807
        %v4809 = vpop.f32.mrb[0].mxu0
        %4810 = vmatprep.mubr.bf16.mxu0 0
        %4811 = vmatmul.mubr.bf16.gmra.mrb[0].mxu0 %v4635
        %v4812 = vpop.f32.mrb[0].mxu0
        %v4813 = vadd.f32 %v4664, %v4812
        %v4814 = vpop.f32.mrb[0].mxu0
        %v4815 = vpop.f32.mrb[0].mxu0
        %v4816 = vadd.f32 %v4664, %v4815
        %v4817 = vpop.f32.mrb[0].mxu0
        %4818 = vmatprep.mubr.bf16.mxu0 0
        %4819 = vmatmul.mubr.bf16.gmra.mrb[0].mxu0 %v4636
        %v4820 = vpop.f32.mrb[0].mxu0
        %v4821 = vadd.f32 %v4664, %v4820
        %v4822 = vpop.f32.mrb[0].mxu0
        %v4823 = vpop.f32.mrb[0].mxu0
        %v4824 = vadd.f32 %v4664, %v4823
        %v4825 = vpop.f32.mrb[0].mxu0
        %4826 = vmatprep.mubr.bf16.mxu0 0
        %4827 = vmatmul.mubr.bf16.gmra.mrb[0].mxu0 %v4637
        %v4828 = vpop.f32.mrb[0].mxu0
        %v4829 = vadd.f32 %v4664, %v4828
        %v4830 = vpop.f32.mrb[0].mxu0
        %v4831 = vpop.f32.mrb[0].mxu0
        %v4832 = vadd.f32 %v4664, %v4831
        %v4833 = vpop.f32.mrb[0].mxu0
        %4834 = vmatprep.mubr.bf16.mxu0 0
        %4835 = vmatmul.mubr.bf16.gmra.mrb[0].mxu0 %v4638
        %v4836 = vpop.f32.mrb[0].mxu0
        %v4837 = vadd.f32 %v4664, %v4836
        %v4838 = vpop.f32.mrb[0].mxu0
        %v4839 = vpop.f32.mrb[0].mxu0
        %v4840 = vadd.f32 %v4664, %v4839
        %v4841 = vpop.f32.mrb[0].mxu0
        %4842 = vmatprep.mubr.bf16.mxu0 0
        %4843 = vmatmul.mubr.bf16.gmra.mrb[0].mxu0 %v4639
        %v4844 = vpop.f32.mrb[0].mxu0
        %v4845 = vadd.f32 %v4664, %v4844
        %v4846 = vpop.f32.mrb[0].mxu0
        %v4847 = vpop.f32.mrb[0].mxu0
        %v4848 = vadd.f32 %v4664, %v4847
        %v4849 = vpop.f32.mrb[0].mxu0
        %4850 = vmatprep.mubr.bf16.mxu0 0
        %4851 = vmatmul.mubr.bf16.gmra.mrb[0].mxu0 %v4640
        %v4852 = vpop.f32.mrb[0].mxu0
        %v4853 = vadd.f32 %v4664, %v4852
        %v4854 = vpop.f32.mrb[0].mxu0
        %v4855 = vpop.f32.mrb[0].mxu0
        %v4856 = vadd.f32 %v4664, %v4855
        %v4857 = vpop.f32.mrb[0].mxu0
        %4858 = vmatprep.mubr.bf16.mxu0 0
        %4859 = vmatmul.mubr.bf16.gmra.mrb[0].mxu0 %v4641
        %v4860 = vpop.f32.mrb[0].mxu0
        %v4861 = vadd.f32 %v4664, %v4860
        %v4862 = vpop.f32.mrb[0].mxu0
        %v4863 = vpop.f32.mrb[0].mxu0
        %v4864 = vadd.f32 %v4664, %v4863
        %v4865 = vpop.f32.mrb[0].mxu0
        %4866 = vmatprep.mubr.bf16.mxu0 0
        %4867 = vmatmul.mubr.bf16.gmra.mrb[0].mxu0 %v4642
        %v4868 = vpop.f32.mrb[0].mxu0
        %v4869 = vadd.f32 %v4664, %v4868
        %v4870 = vpop.f32.mrb[0].mxu0
        %v4871 = vpop.f32.mrb[0].mxu0
        %v4872 = vadd.f32 %v4664, %v4871
        %v4873 = vpop.f32.mrb[0].mxu0
        %4874 = vdwg.mxu0
        %4875 = vadd.xlane.f32.xlu0 %v4749
        %v4876 = vpop.xlane.xlu0 %4875
        %4877 = vadd.xlane.f32.xlu0 %v4752
        %v4878 = vpop.xlane.xlu0 %4877
        %4879 = vadd.xlane.f32.xlu0 %v4757
        %v4880 = vpop.xlane.xlu0 %4879
        %4881 = vadd.xlane.f32.xlu0 %v4760
        %v4882 = vpop.xlane.xlu0 %4881
        %4883 = vadd.xlane.f32.xlu0 %v4765
        %v4884 = vpop.xlane.xlu0 %4883
        %4885 = vadd.xlane.f32.xlu0 %v4768
        %v4886 = vpop.xlane.xlu0 %4885
        %4887 = vadd.xlane.f32.xlu0 %v4773
        %v4888 = vpop.xlane.xlu0 %4887
        %4889 = vadd.xlane.f32.xlu0 %v4776
        %v4890 = vpop.xlane.xlu0 %4889
        %4891 = vadd.xlane.f32.xlu0 %v4781
        %v4892 = vpop.xlane.xlu0 %4891
        %4893 = vadd.xlane.f32.xlu0 %v4784
        %v4894 = vpop.xlane.xlu0 %4893
        %4895 = vadd.xlane.f32.xlu0 %v4789
        %v4896 = vpop.xlane.xlu0 %4895
        %4897 = vadd.xlane.f32.xlu0 %v4792
        %v4898 = vpop.xlane.xlu0 %4897
        %4899 = vadd.xlane.f32.xlu0 %v4797
        %v4900 = vpop.xlane.xlu0 %4899
        %4901 = vadd.xlane.f32.xlu0 %v4800
        %v4902 = vpop.xlane.xlu0 %4901
        %4903 = vadd.xlane.f32.xlu0 %v4805
        %v4904 = vpop.xlane.xlu0 %4903
        %4905 = vadd.xlane.f32.xlu0 %v4808
        %v4906 = vpop.xlane.xlu0 %4905
        %4907 = vadd.xlane.f32.xlu0 %v4813
        %v4908 = vpop.xlane.xlu0 %4907
        %4909 = vadd.xlane.f32.xlu0 %v4816
        %v4910 = vpop.xlane.xlu0 %4909
        %4911 = vadd.xlane.f32.xlu0 %v4821
        %v4912 = vpop.xlane.xlu0 %4911
        %4913 = vadd.xlane.f32.xlu0 %v4824
        %v4914 = vpop.xlane.xlu0 %4913
        %4915 = vadd.xlane.f32.xlu0 %v4829
        %v4916 = vpop.xlane.xlu0 %4915
        %4917 = vadd.xlane.f32.xlu0 %v4832
        %v4918 = vpop.xlane.xlu0 %4917
        %4919 = vadd.xlane.f32.xlu0 %v4837
        %v4920 = vpop.xlane.xlu0 %4919
        %4921 = vadd.xlane.f32.xlu0 %v4840
        %v4922 = vpop.xlane.xlu0 %4921
        %4923 = vadd.xlane.f32.xlu0 %v4845
        %v4924 = vpop.xlane.xlu0 %4923
        %4925 = vadd.xlane.f32.xlu0 %v4848
        %v4926 = vpop.xlane.xlu0 %4925
        %4927 = vadd.xlane.f32.xlu0 %v4853
        %v4928 = vpop.xlane.xlu0 %4927
        %4929 = vadd.xlane.f32.xlu0 %v4856
        %v4930 = vpop.xlane.xlu0 %4929
        %4931 = vadd.xlane.f32.xlu0 %v4861
        %v4932 = vpop.xlane.xlu0 %4931
        %4933 = vadd.xlane.f32.xlu0 %v4864
        %v4934 = vpop.xlane.xlu0 %4933
        %4935 = vadd.xlane.f32.xlu0 %v4869
        %v4936 = vpop.xlane.xlu0 %4935
        %4937 = vadd.xlane.f32.xlu0 %v4872
        %v4938 = vpop.xlane.xlu0 %4937
        %v4939 = vrcp.pop 128.0
        %v4940 = vmul.f32 %v4876, %v4939
        %v4941 = vmul.f32 %v4878, %v4939
        %v4942 = vmul.f32 %v4880, %v4939
        %v4943 = vmul.f32 %v4882, %v4939
        %v4944 = vmul.f32 %v4884, %v4939
        %v4945 = vmul.f32 %v4886, %v4939
        %v4946 = vmul.f32 %v4888, %v4939
        %v4947 = vmul.f32 %v4890, %v4939
        %v4948 = vmul.f32 %v4892, %v4939
        %v4949 = vmul.f32 %v4894, %v4939
        %v4950 = vmul.f32 %v4896, %v4939
        %v4951 = vmul.f32 %v4898, %v4939
        %v4952 = vmul.f32 %v4900, %v4939
        %v4953 = vmul.f32 %v4902, %v4939
        %v4954 = vmul.f32 %v4904, %v4939
        %v4955 = vmul.f32 %v4906, %v4939
        %v4956 = vmul.f32 %v4908, %v4939
        %v4957 = vmul.f32 %v4910, %v4939
        %v4958 = vmul.f32 %v4912, %v4939
        %v4959 = vmul.f32 %v4914, %v4939
        %v4960 = vmul.f32 %v4916, %v4939
        %v4961 = vmul.f32 %v4918, %v4939
        %v4962 = vmul.f32 %v4920, %v4939
        %v4963 = vmul.f32 %v4922, %v4939
        %v4964 = vmul.f32 %v4924, %v4939
        %v4965 = vmul.f32 %v4926, %v4939
        %v4966 = vmul.f32 %v4928, %v4939
        %v4967 = vmul.f32 %v4930, %v4939
        %v4968 = vmul.f32 %v4932, %v4939
        %v4969 = vmul.f32 %v4934, %v4939
        %v4970 = vmul.f32 %v4936, %v4939
        %v4971 = vmul.f32 %v4938, %v4939
        %v4972 = vsub.f32 %v4749, %v4940
        %v4973 = vsub.f32 %v4752, %v4941
        %v4974 = vsub.f32 %v4757, %v4942
        %v4975 = vsub.f32 %v4760, %v4943
        %v4976 = vsub.f32 %v4765, %v4944
        %v4977 = vsub.f32 %v4768, %v4945
        %v4978 = vsub.f32 %v4773, %v4946
        %v4979 = vsub.f32 %v4776, %v4947
        %v4980 = vsub.f32 %v4781, %v4948
        %v4981 = vsub.f32 %v4784, %v4949
        %v4982 = vsub.f32 %v4789, %v4950
        %v4983 = vsub.f32 %v4792, %v4951
        %v4984 = vsub.f32 %v4797, %v4952
        %v4985 = vsub.f32 %v4800, %v4953
        %v4986 = vsub.f32 %v4805, %v4954
        %v4987 = vsub.f32 %v4808, %v4955
        %v4988 = vsub.f32 %v4813, %v4956
        %v4989 = vsub.f32 %v4816, %v4957
        %v4990 = vsub.f32 %v4821, %v4958
        %v4991 = vsub.f32 %v4824, %v4959
        %v4992 = vsub.f32 %v4829, %v4960
        %v4993 = vsub.f32 %v4832, %v4961
        %v4994 = vsub.f32 %v4837, %v4962
        %v4995 = vsub.f32 %v4840, %v4963
        %v4996 = vsub.f32 %v4845, %v4964
        %v4997 = vsub.f32 %v4848, %v4965
        %v4998 = vsub.f32 %v4853, %v4966
        %v4999 = vsub.f32 %v4856, %v4967
        %v5000 = vsub.f32 %v4861, %v4968
        %v5001 = vsub.f32 %v4864, %v4969
        %v5002 = vsub.f32 %v4869, %v4970
        %v5003 = vsub.f32 %v4872, %v4971
        %v5004 = vmul.f32 %v4972, %v4972
        %v5005 = vmul.f32 %v4973, %v4973
        %v5006 = vmul.f32 %v4974, %v4974
        %v5007 = vmul.f32 %v4975, %v4975
        %v5008 = vmul.f32 %v4976, %v4976
        %v5009 = vmul.f32 %v4977, %v4977
        %v5010 = vmul.f32 %v4978, %v4978
        %v5011 = vmul.f32 %v4979, %v4979
        %v5012 = vmul.f32 %v4980, %v4980
        %v5013 = vmul.f32 %v4981, %v4981
        %v5014 = vmul.f32 %v4982, %v4982
        %v5015 = vmul.f32 %v4983, %v4983
        %v5016 = vmul.f32 %v4984, %v4984
        %v5017 = vmul.f32 %v4985, %v4985
        %v5018 = vmul.f32 %v4986, %v4986
        %v5019 = vmul.f32 %v4987, %v4987
        %v5020 = vmul.f32 %v4988, %v4988
        %v5021 = vmul.f32 %v4989, %v4989
        %v5022 = vmul.f32 %v4990, %v4990
        %v5023 = vmul.f32 %v4991, %v4991
        %v5024 = vmul.f32 %v4992, %v4992
        %v5025 = vmul.f32 %v4993, %v4993
        %v5026 = vmul.f32 %v4994, %v4994
        %v5027 = vmul.f32 %v4995, %v4995
        %v5028 = vmul.f32 %v4996, %v4996
        %v5029 = vmul.f32 %v4997, %v4997
        %v5030 = vmul.f32 %v4998, %v4998
        %v5031 = vmul.f32 %v4999, %v4999
        %v5032 = vmul.f32 %v5000, %v5000
        %v5033 = vmul.f32 %v5001, %v5001
        %v5034 = vmul.f32 %v5002, %v5002
        %v5035 = vmul.f32 %v5003, %v5003
        %5036 = vadd.xlane.f32.xlu0 %v5004
        %v5037 = vpop.xlane.xlu0 %5036
        %5038 = vadd.xlane.f32.xlu0 %v5005
        %v5039 = vpop.xlane.xlu0 %5038
        %5040 = vadd.xlane.f32.xlu0 %v5006
        %v5041 = vpop.xlane.xlu0 %5040
        %5042 = vadd.xlane.f32.xlu0 %v5007
        %v5043 = vpop.xlane.xlu0 %5042
        %5044 = vadd.xlane.f32.xlu0 %v5008
        %v5045 = vpop.xlane.xlu0 %5044
        %5046 = vadd.xlane.f32.xlu0 %v5009
        %v5047 = vpop.xlane.xlu0 %5046
        %5048 = vadd.xlane.f32.xlu0 %v5010
        %v5049 = vpop.xlane.xlu0 %5048
        %5050 = vadd.xlane.f32.xlu0 %v5011
        %v5051 = vpop.xlane.xlu0 %5050
        %5052 = vadd.xlane.f32.xlu0 %v5012
        %v5053 = vpop.xlane.xlu0 %5052
        %5054 = vadd.xlane.f32.xlu0 %v5013
        %v5055 = vpop.xlane.xlu0 %5054
        %5056 = vadd.xlane.f32.xlu0 %v5014
        %v5057 = vpop.xlane.xlu0 %5056
        %5058 = vadd.xlane.f32.xlu0 %v5015
        %v5059 = vpop.xlane.xlu0 %5058
        %5060 = vadd.xlane.f32.xlu0 %v5016
        %v5061 = vpop.xlane.xlu0 %5060
        %5062 = vadd.xlane.f32.xlu0 %v5017
        %v5063 = vpop.xlane.xlu0 %5062
        %5064 = vadd.xlane.f32.xlu0 %v5018
        %v5065 = vpop.xlane.xlu0 %5064
        %5066 = vadd.xlane.f32.xlu0 %v5019
        %v5067 = vpop.xlane.xlu0 %5066
        %5068 = vadd.xlane.f32.xlu0 %v5020
        %v5069 = vpop.xlane.xlu0 %5068
        %5070 = vadd.xlane.f32.xlu0 %v5021
        %v5071 = vpop.xlane.xlu0 %5070
        %5072 = vadd.xlane.f32.xlu0 %v5022
        %v5073 = vpop.xlane.xlu0 %5072
        %5074 = vadd.xlane.f32.xlu0 %v5023
        %v5075 = vpop.xlane.xlu0 %5074
        %5076 = vadd.xlane.f32.xlu0 %v5024
        %v5077 = vpop.xlane.xlu0 %5076
        %5078 = vadd.xlane.f32.xlu0 %v5025
        %v5079 = vpop.xlane.xlu0 %5078
        %5080 = vadd.xlane.f32.xlu0 %v5026
        %v5081 = vpop.xlane.xlu0 %5080
        %5082 = vadd.xlane.f32.xlu0 %v5027
        %v5083 = vpop.xlane.xlu0 %5082
        %5084 = vadd.xlane.f32.xlu0 %v5028
        %v5085 = vpop.xlane.xlu0 %5084
        %5086 = vadd.xlane.f32.xlu0 %v5029
        %v5087 = vpop.xlane.xlu0 %5086
        %5088 = vadd.xlane.f32.xlu0 %v5030
        %v5089 = vpop.xlane.xlu0 %5088
        %5090 = vadd.xlane.f32.xlu0 %v5031
        %v5091 = vpop.xlane.xlu0 %5090
        %5092 = vadd.xlane.f32.xlu0 %v5032
        %v5093 = vpop.xlane.xlu0 %5092
        %5094 = vadd.xlane.f32.xlu0 %v5033
        %v5095 = vpop.xlane.xlu0 %5094
        %5096 = vadd.xlane.f32.xlu0 %v5034
        %v5097 = vpop.xlane.xlu0 %5096
        %5098 = vadd.xlane.f32.xlu0 %v5035
        %v5099 = vpop.xlane.xlu0 %5098
        %v5100 = vmul.f32 %v5037, %v4939
        %v5101 = vmul.f32 %v5039, %v4939
        %v5102 = vmul.f32 %v5041, %v4939
        %v5103 = vmul.f32 %v5043, %v4939
        %v5104 = vmul.f32 %v5045, %v4939
        %v5105 = vmul.f32 %v5047, %v4939
        %v5106 = vmul.f32 %v5049, %v4939
        %v5107 = vmul.f32 %v5051, %v4939
        %v5108 = vmul.f32 %v5053, %v4939
        %v5109 = vmul.f32 %v5055, %v4939
        %v5110 = vmul.f32 %v5057, %v4939
        %v5111 = vmul.f32 %v5059, %v4939
        %v5112 = vmul.f32 %v5061, %v4939
        %v5113 = vmul.f32 %v5063, %v4939
        %v5114 = vmul.f32 %v5065, %v4939
        %v5115 = vmul.f32 %v5067, %v4939
        %v5116 = vmul.f32 %v5069, %v4939
        %v5117 = vmul.f32 %v5071, %v4939
        %v5118 = vmul.f32 %v5073, %v4939
        %v5119 = vmul.f32 %v5075, %v4939
        %v5120 = vmul.f32 %v5077, %v4939
        %v5121 = vmul.f32 %v5079, %v4939
        %v5122 = vmul.f32 %v5081, %v4939
        %v5123 = vmul.f32 %v5083, %v4939
        %v5124 = vmul.f32 %v5085, %v4939
        %v5125 = vmul.f32 %v5087, %v4939
        %v5126 = vmul.f32 %v5089, %v4939
        %v5127 = vmul.f32 %v5091, %v4939
        %v5128 = vmul.f32 %v5093, %v4939
        %v5129 = vmul.f32 %v5095, %v4939
        %v5130 = vmul.f32 %v5097, %v4939
        %v5131 = vmul.f32 %v5099, %v4939
        %v5132 = vadd.f32 %v5100, 1e-05
        %v5133 = vadd.f32 %v5101, 1e-05
        %v5134 = vadd.f32 %v5102, 1e-05
        %v5135 = vadd.f32 %v5103, 1e-05
        %v5136 = vadd.f32 %v5104, 1e-05
        %v5137 = vadd.f32 %v5105, 1e-05
        %v5138 = vadd.f32 %v5106, 1e-05
        %v5139 = vadd.f32 %v5107, 1e-05
        %v5140 = vadd.f32 %v5108, 1e-05
        %v5141 = vadd.f32 %v5109, 1e-05
        %v5142 = vadd.f32 %v5110, 1e-05
        %v5143 = vadd.f32 %v5111, 1e-05
        %v5144 = vadd.f32 %v5112, 1e-05
        %v5145 = vadd.f32 %v5113, 1e-05
        %v5146 = vadd.f32 %v5114, 1e-05
        %v5147 = vadd.f32 %v5115, 1e-05
        %v5148 = vadd.f32 %v5116, 1e-05
        %v5149 = vadd.f32 %v5117, 1e-05
        %v5150 = vadd.f32 %v5118, 1e-05
        %v5151 = vadd.f32 %v5119, 1e-05
        %v5152 = vadd.f32 %v5120, 1e-05
        %v5153 = vadd.f32 %v5121, 1e-05
        %v5154 = vadd.f32 %v5122, 1e-05
        %v5155 = vadd.f32 %v5123, 1e-05
        %v5156 = vadd.f32 %v5124, 1e-05
        %v5157 = vadd.f32 %v5125, 1e-05
        %v5158 = vadd.f32 %v5126, 1e-05
        %v5159 = vadd.f32 %v5127, 1e-05
        %v5160 = vadd.f32 %v5128, 1e-05
        %v5161 = vadd.f32 %v5129, 1e-05
        %v5162 = vadd.f32 %v5130, 1e-05
        %v5163 = vadd.f32 %v5131, 1e-05
        %v5164 = vrsqrt.pop %v5132
        %v5165 = vrsqrt.pop %v5133
        %v5166 = vrsqrt.pop %v5134
        %v5167 = vrsqrt.pop %v5135
        %v5168 = vrsqrt.pop %v5136
        %v5169 = vrsqrt.pop %v5137
        %v5170 = vrsqrt.pop %v5138
        %v5171 = vrsqrt.pop %v5139
        %v5172 = vrsqrt.pop %v5140
        %v5173 = vrsqrt.pop %v5141
        %v5174 = vrsqrt.pop %v5142
        %v5175 = vrsqrt.pop %v5143
        %v5176 = vrsqrt.pop %v5144
        %v5177 = vrsqrt.pop %v5145
        %v5178 = vrsqrt.pop %v5146
        %v5179 = vrsqrt.pop %v5147
        %v5180 = vrsqrt.pop %v5148
        %v5181 = vrsqrt.pop %v5149
        %v5182 = vrsqrt.pop %v5150
        %v5183 = vrsqrt.pop %v5151
        %v5184 = vrsqrt.pop %v5152
        %v5185 = vrsqrt.pop %v5153
        %v5186 = vrsqrt.pop %v5154
        %v5187 = vrsqrt.pop %v5155
        %v5188 = vrsqrt.pop %v5156
        %v5189 = vrsqrt.pop %v5157
        %v5190 = vrsqrt.pop %v5158
        %v5191 = vrsqrt.pop %v5159
        %v5192 = vrsqrt.pop %v5160
        %v5193 = vrsqrt.pop %v5161
        %v5194 = vrsqrt.pop %v5162
        %v5195 = vrsqrt.pop %v5163
        %v5196 = vmul.f32 %v4972, %v5164
        %v5197 = vmul.f32 %v4973, %v5165
        %v5198 = vmul.f32 %v4974, %v5166
        %v5199 = vmul.f32 %v4975, %v5167
        %v5200 = vmul.f32 %v4976, %v5168
        %v5201 = vmul.f32 %v4977, %v5169
        %v5202 = vmul.f32 %v4978, %v5170
        %v5203 = vmul.f32 %v4979, %v5171
        %v5204 = vmul.f32 %v4980, %v5172
        %v5205 = vmul.f32 %v4981, %v5173
        %v5206 = vmul.f32 %v4982, %v5174
        %v5207 = vmul.f32 %v4983, %v5175
        %v5208 = vmul.f32 %v4984, %v5176
        %v5209 = vmul.f32 %v4985, %v5177
        %v5210 = vmul.f32 %v4986, %v5178
        %v5211 = vmul.f32 %v4987, %v5179
        %v5212 = vmul.f32 %v4988, %v5180
        %v5213 = vmul.f32 %v4989, %v5181
        %v5214 = vmul.f32 %v4990, %v5182
        %v5215 = vmul.f32 %v4991, %v5183
        %v5216 = vmul.f32 %v4992, %v5184
        %v5217 = vmul.f32 %v4993, %v5185
        %v5218 = vmul.f32 %v4994, %v5186
        %v5219 = vmul.f32 %v4995, %v5187
        %v5220 = vmul.f32 %v4996, %v5188
        %v5221 = vmul.f32 %v4997, %v5189
        %v5222 = vmul.f32 %v4998, %v5190
        %v5223 = vmul.f32 %v4999, %v5191
        %v5224 = vmul.f32 %v5000, %v5192
        %v5225 = vmul.f32 %v5001, %v5193
        %v5226 = vmul.f32 %v5002, %v5194
        %v5227 = vmul.f32 %v5003, %v5195
        %v5228 = vld [vmem:[#allocation10] sm:$0x1]
        %v5230 = vlaneseq
        %v5231 = vshrl.u32 %v5230, 7
        %v5232 = vsub.s32 0, %v5231
        %v5233 = vrot.slane %v5228, %v5232
        %v5235 = vmul.f32 %v5196, %v5233
        %v5236 = vmul.f32 %v5197, %v5233
        %v5237 = vmul.f32 %v5198, %v5233
        %v5238 = vmul.f32 %v5199, %v5233
        %v5239 = vmul.f32 %v5200, %v5233
        %v5240 = vmul.f32 %v5201, %v5233
        %v5241 = vmul.f32 %v5202, %v5233
        %v5242 = vmul.f32 %v5203, %v5233
        %v5243 = vmul.f32 %v5204, %v5233
        %v5244 = vmul.f32 %v5205, %v5233
        %v5245 = vmul.f32 %v5206, %v5233
        %v5246 = vmul.f32 %v5207, %v5233
        %v5247 = vmul.f32 %v5208, %v5233
        %v5248 = vmul.f32 %v5209, %v5233
        %v5249 = vmul.f32 %v5210, %v5233
        %v5250 = vmul.f32 %v5211, %v5233
        %v5251 = vmul.f32 %v5212, %v5233
        %v5252 = vmul.f32 %v5213, %v5233
        %v5253 = vmul.f32 %v5214, %v5233
        %v5254 = vmul.f32 %v5215, %v5233
        %v5255 = vmul.f32 %v5216, %v5233
        %v5256 = vmul.f32 %v5217, %v5233
        %v5257 = vmul.f32 %v5218, %v5233
        %v5258 = vmul.f32 %v5219, %v5233
        %v5259 = vmul.f32 %v5220, %v5233
        %v5260 = vmul.f32 %v5221, %v5233
        %v5261 = vmul.f32 %v5222, %v5233
        %v5262 = vmul.f32 %v5223, %v5233
        %v5263 = vmul.f32 %v5224, %v5233
        %v5264 = vmul.f32 %v5225, %v5233
        %v5265 = vmul.f32 %v5226, %v5233
        %v5266 = vmul.f32 %v5227, %v5233
        %v5267 = vld [vmem:[#allocation11] sm:$0x1]
        %v5269 = vlaneseq
        %v5270 = vshrl.u32 %v5269, 7
        %v5271 = vsub.s32 0, %v5270
        %v5272 = vrot.slane %v5267, %v5271
        %v5274 = vadd.f32 %v5235, %v5272
        %v5275 = vadd.f32 %v5236, %v5272
        %v5276 = vadd.f32 %v5237, %v5272
        %v5277 = vadd.f32 %v5238, %v5272
        %v5278 = vadd.f32 %v5239, %v5272
        %v5279 = vadd.f32 %v5240, %v5272
        %v5280 = vadd.f32 %v5241, %v5272
        %v5281 = vadd.f32 %v5242, %v5272
        %v5282 = vadd.f32 %v5243, %v5272
        %v5283 = vadd.f32 %v5244, %v5272
        %v5284 = vadd.f32 %v5245, %v5272
        %v5285 = vadd.f32 %v5246, %v5272
        %v5286 = vadd.f32 %v5247, %v5272
        %v5287 = vadd.f32 %v5248, %v5272
        %v5288 = vadd.f32 %v5249, %v5272
        %v5289 = vadd.f32 %v5250, %v5272
        %v5290 = vadd.f32 %v5251, %v5272
        %v5291 = vadd.f32 %v5252, %v5272
        %v5292 = vadd.f32 %v5253, %v5272
        %v5293 = vadd.f32 %v5254, %v5272
        %v5294 = vadd.f32 %v5255, %v5272
        %v5295 = vadd.f32 %v5256, %v5272
        %v5296 = vadd.f32 %v5257, %v5272
        %v5297 = vadd.f32 %v5258, %v5272
        %v5298 = vadd.f32 %v5259, %v5272
        %v5299 = vadd.f32 %v5260, %v5272
        %v5300 = vadd.f32 %v5261, %v5272
        %v5301 = vadd.f32 %v5262, %v5272
        %v5302 = vadd.f32 %v5263, %v5272
        %v5303 = vadd.f32 %v5264, %v5272
        %v5304 = vadd.f32 %v5265, %v5272
        %v5305 = vadd.f32 %v5266, %v5272
        %v5306 = vpack.c.bf16 %v5275, %v5274
        %v5307 = vpack.c.bf16 %v5277, %v5276
        %v5308 = vpack.c.bf16 %v5279, %v5278
        %v5309 = vpack.c.bf16 %v5281, %v5280
        %v5310 = vpack.c.bf16 %v5283, %v5282
        %v5311 = vpack.c.bf16 %v5285, %v5284
        %v5312 = vpack.c.bf16 %v5287, %v5286
        %v5313 = vpack.c.bf16 %v5289, %v5288
        %v5314 = vpack.c.bf16 %v5291, %v5290
        %v5315 = vpack.c.bf16 %v5293, %v5292
        %v5316 = vpack.c.bf16 %v5295, %v5294
        %v5317 = vpack.c.bf16 %v5297, %v5296
        %v5318 = vpack.c.bf16 %v5299, %v5298
        %v5319 = vpack.c.bf16 %v5301, %v5300
        %v5320 = vpack.c.bf16 %v5303, %v5302
        %v5321 = vpack.c.bf16 %v5305, %v5304
        %v5322 = vld [vmem:[#allocation13] sm:$0xff]
        %v5323 = vld [vmem:[#allocation13 + $0x8] sm:$0xff]
        %v5324 = vld [vmem:[#allocation13 + $0x10] sm:$0xff]
        %v5325 = vld [vmem:[#allocation13 + $0x18] sm:$0xff]
        %v5326 = vld [vmem:[#allocation13 + $0x20] sm:$0xff]
        %v5327 = vld [vmem:[#allocation13 + $0x28] sm:$0xff]
        %v5328 = vld [vmem:[#allocation13 + $0x30] sm:$0xff]
        %v5329 = vld [vmem:[#allocation13 + $0x38] sm:$0xff]
        %v5330 = vld [vmem:[#allocation13 + $0x40] sm:$0xff]
        %v5331 = vld [vmem:[#allocation13 + $0x48] sm:$0xff]
        %v5332 = vld [vmem:[#allocation13 + $0x50] sm:$0xff]
        %v5333 = vld [vmem:[#allocation13 + $0x58] sm:$0xff]
        %v5334 = vld [vmem:[#allocation13 + $0x60] sm:$0xff]
        %v5335 = vld [vmem:[#allocation13 + $0x68] sm:$0xff]
        %v5336 = vld [vmem:[#allocation13 + $0x70] sm:$0xff]
        %v5337 = vld [vmem:[#allocation13 + $0x78] sm:$0xff]
        %v5338 = vld [vmem:[#allocation13 + $0x80] sm:$0xff]
        %v5339 = vld [vmem:[#allocation13 + $0x88] sm:$0xff]
        %v5340 = vld [vmem:[#allocation13 + $0x90] sm:$0xff]
        %v5341 = vld [vmem:[#allocation13 + $0x98] sm:$0xff]
        %v5342 = vld [vmem:[#allocation13 + $0xa0] sm:$0xff]
        %v5343 = vld [vmem:[#allocation13 + $0xa8] sm:$0xff]
        %v5344 = vld [vmem:[#allocation13 + $0xb0] sm:$0xff]
        %v5345 = vld [vmem:[#allocation13 + $0xb8] sm:$0xff]
        %v5346 = vld [vmem:[#allocation13 + $0xc0] sm:$0xff]
        %v5347 = vld [vmem:[#allocation13 + $0xc8] sm:$0xff]
        %v5348 = vld [vmem:[#allocation13 + $0xd0] sm:$0xff]
        %v5349 = vld [vmem:[#allocation13 + $0xd8] sm:$0xff]
        %v5350 = vld [vmem:[#allocation13 + $0xe0] sm:$0xff]
        %v5351 = vld [vmem:[#allocation13 + $0xe8] sm:$0xff]
        %v5352 = vld [vmem:[#allocation13 + $0xf0] sm:$0xff]
        %v5353 = vld [vmem:[#allocation13 + $0xf8] sm:$0xff]
        %v5354 = vld [vmem:[#allocation14] sm:$0xf]
        %v5356 = vlaneseq
        %v5357 = vshrl.u32 %v5356, 7
        %v5358 = vsub.s32 0, %v5357
        %v5359 = vrot.slane %v5354, %v5358
        %v5360 = vlaneseq
        %v5361 = vshrl.u32 %v5360, 7
        %v5362 = vsub.s32 1, %v5361
        %v5363 = vrot.slane %v5354, %v5362
        %v5364 = vlaneseq
        %v5365 = vshrl.u32 %v5364, 7
        %v5366 = vsub.s32 2, %v5365
        %v5367 = vrot.slane %v5354, %v5366
        %v5368 = vlaneseq
        %v5369 = vshrl.u32 %v5368, 7
        %v5370 = vsub.s32 3, %v5369
        %v5371 = vrot.slane %v5354, %v5370
        %v5408 = vunpack.c.l.b16 %v5322
        %v5409 = vunpack.c.h.b16 %v5322
        %v5410 = vunpack.c.l.b16 %v5323
        %v5411 = vunpack.c.h.b16 %v5323
        %v5412 = vunpack.c.l.b16 %v5324
        %v5413 = vunpack.c.h.b16 %v5324
        %v5414 = vunpack.c.l.b16 %v5325
        %v5415 = vunpack.c.h.b16 %v5325
        %v5416 = vunpack.c.l.b16 %v5326
        %v5417 = vunpack.c.h.b16 %v5326
        %v5418 = vunpack.c.l.b16 %v5327
        %v5419 = vunpack.c.h.b16 %v5327
        %v5420 = vunpack.c.l.b16 %v5328
        %v5421 = vunpack.c.h.b16 %v5328
        %v5422 = vunpack.c.l.b16 %v5329
        %v5423 = vunpack.c.h.b16 %v5329
        %v5424 = vunpack.c.l.b16 %v5330
        %v5425 = vunpack.c.h.b16 %v5330
        %v5426 = vunpack.c.l.b16 %v5331
        %v5427 = vunpack.c.h.b16 %v5331
        %v5428 = vunpack.c.l.b16 %v5332
        %v5429 = vunpack.c.h.b16 %v5332
        %v5430 = vunpack.c.l.b16 %v5333
        %v5431 = vunpack.c.h.b16 %v5333
        %v5432 = vunpack.c.l.b16 %v5334
        %v5433 = vunpack.c.h.b16 %v5334
        %v5434 = vunpack.c.l.b16 %v5335
        %v5435 = vunpack.c.h.b16 %v5335
        %v5436 = vunpack.c.l.b16 %v5336
        %v5437 = vunpack.c.h.b16 %v5336
        %v5438 = vunpack.c.l.b16 %v5337
        %v5439 = vunpack.c.h.b16 %v5337
        %v5440 = vunpack.c.l.b16 %v5338
        %v5441 = vunpack.c.h.b16 %v5338
        %v5442 = vunpack.c.l.b16 %v5339
        %v5443 = vunpack.c.h.b16 %v5339
        %v5444 = vunpack.c.l.b16 %v5340
        %v5445 = vunpack.c.h.b16 %v5340
        %v5446 = vunpack.c.l.b16 %v5341
        %v5447 = vunpack.c.h.b16 %v5341
        %v5448 = vunpack.c.l.b16 %v5342
        %v5449 = vunpack.c.h.b16 %v5342
        %v5450 = vunpack.c.l.b16 %v5343
        %v5451 = vunpack.c.h.b16 %v5343
        %v5452 = vunpack.c.l.b16 %v5344
        %v5453 = vunpack.c.h.b16 %v5344
        %v5454 = vunpack.c.l.b16 %v5345
        %v5455 = vunpack.c.h.b16 %v5345
        %v5456 = vunpack.c.l.b16 %v5346
        %v5457 = vunpack.c.h.b16 %v5346
        %v5458 = vunpack.c.l.b16 %v5347
        %v5459 = vunpack.c.h.b16 %v5347
        %v5460 = vunpack.c.l.b16 %v5348
        %v5461 = vunpack.c.h.b16 %v5348
        %v5462 = vunpack.c.l.b16 %v5349
        %v5463 = vunpack.c.h.b16 %v5349
        %v5464 = vunpack.c.l.b16 %v5350
        %v5465 = vunpack.c.h.b16 %v5350
        %v5466 = vunpack.c.l.b16 %v5351
        %v5467 = vunpack.c.h.b16 %v5351
        %v5468 = vunpack.c.l.b16 %v5352
        %v5469 = vunpack.c.h.b16 %v5352
        %v5470 = vunpack.c.l.b16 %v5353
        %v5471 = vunpack.c.h.b16 %v5353
        %v5472 = vpack.c.b16 %v5412, %v5408
        %v5473 = vpack.c.b16 %v5413, %v5409
        %v5474 = vpack.c.b16 %v5414, %v5410
        %v5475 = vpack.c.b16 %v5415, %v5411
        %v5476 = vpack.c.b16 %v5420, %v5416
        %v5477 = vpack.c.b16 %v5421, %v5417
        %v5478 = vpack.c.b16 %v5422, %v5418
        %v5479 = vpack.c.b16 %v5423, %v5419
        %v5480 = vpack.c.b16 %v5428, %v5424
        %v5481 = vpack.c.b16 %v5429, %v5425
        %v5482 = vpack.c.b16 %v5430, %v5426
        %v5483 = vpack.c.b16 %v5431, %v5427
        %v5484 = vpack.c.b16 %v5436, %v5432
        %v5485 = vpack.c.b16 %v5437, %v5433
        %v5486 = vpack.c.b16 %v5438, %v5434
        %v5487 = vpack.c.b16 %v5439, %v5435
        %v5488 = vpack.c.b16 %v5444, %v5440
        %v5489 = vpack.c.b16 %v5445, %v5441
        %v5490 = vpack.c.b16 %v5446, %v5442
        %v5491 = vpack.c.b16 %v5447, %v5443
        %v5492 = vpack.c.b16 %v5452, %v5448
        %v5493 = vpack.c.b16 %v5453, %v5449
        %v5494 = vpack.c.b16 %v5454, %v5450
        %v5495 = vpack.c.b16 %v5455, %v5451
        %v5496 = vpack.c.b16 %v5460, %v5456
        %v5497 = vpack.c.b16 %v5461, %v5457
        %v5498 = vpack.c.b16 %v5462, %v5458
        %v5499 = vpack.c.b16 %v5463, %v5459
        %v5500 = vpack.c.b16 %v5468, %v5464
        %v5501 = vpack.c.b16 %v5469, %v5465
        %v5502 = vpack.c.b16 %v5470, %v5466
        %v5503 = vpack.c.b16 %v5471, %v5467
        %5536 = vmatprep.subr.bf16.mxu0 %v5473
        %5537 = vmatpush1.bf16.msra.mxu0 %v5472
        %5538 = vmatprep.subr.bf16.mxu0 %v5477
        %5539 = vmatpush1.bf16.msra.mxu0 %v5476
        %5540 = vmatprep.subr.bf16.mxu0 %v5481
        %5541 = vmatpush1.bf16.msra.mxu0 %v5480
        %5542 = vmatprep.subr.bf16.mxu0 %v5485
        %5543 = vmatpush1.bf16.msra.mxu0 %v5484
        %5544 = vmatprep.subr.bf16.mxu0 %v5489
        %5545 = vmatpush1.bf16.msra.mxu0 %v5488
        %5546 = vmatprep.subr.bf16.mxu0 %v5493
        %5547 = vmatpush1.bf16.msra.mxu0 %v5492
        %5548 = vmatprep.subr.bf16.mxu0 %v5497
        %5549 = vmatpush1.bf16.msra.mxu0 %v5496
        %5550 = vmatprep.subr.bf16.mxu0 %v5501
        %5551 = vmatpush1.bf16.msra.mxu0 %v5500
        %5552 = vmatprep.subr.bf16.mxu0 0
        %5553 = vmatpush1.bf16.msra.mxu0 0
        %5554 = vmatprep.subr.bf16.mxu0 0
        %5555 = vmatpush1.bf16.msra.mxu0 0
        %5556 = vmatprep.subr.bf16.mxu0 0
        %5557 = vmatpush1.bf16.msra.mxu0 0
        %5558 = vmatprep.subr.bf16.mxu0 0
        %5559 = vmatpush1.bf16.msra.mxu0 0
        %5560 = vmatprep.subr.bf16.mxu0 0
        %5561 = vmatpush1.bf16.msra.mxu0 0
        %5562 = vmatprep.subr.bf16.mxu0 0
        %5563 = vmatpush1.bf16.msra.mxu0 0
        %5564 = vmatprep.subr.bf16.mxu0 0
        %5565 = vmatpush1.bf16.msra.mxu0 0
        %5566 = vmatprep.subr.bf16.mxu0 0
        %5567 = vmatpush1.bf16.msra.mxu0 0
        %5568 = vmatprep.mubr.bf16.mxu0 0
        %5569 = vmatmul.mubr.bf16.gmra.mrb[0].mxu0 %v5306
        %v5570 = vpop.f32.mrb[0].mxu0
        %v5571 = vadd.f32 %v5359, %v5570
        %v5572 = vpop.f32.mrb[0].mxu0
        %v5573 = vadd.f32 %v5363, %v5572
        %v5574 = vpop.f32.mrb[0].mxu0
        %v5575 = vadd.f32 %v5359, %v5574
        %v5576 = vpop.f32.mrb[0].mxu0
        %v5577 = vadd.f32 %v5363, %v5576
        %5578 = vmatprep.mubr.bf16.mxu0 0
        %5579 = vmatmul.mubr.bf16.gmra.mrb[0].mxu0 %v5307
        %v5580 = vpop.f32.mrb[0].mxu0
        %v5581 = vadd.f32 %v5359, %v5580
        %v5582 = vpop.f32.mrb[0].mxu0
        %v5583 = vadd.f32 %v5363, %v5582
        %v5584 = vpop.f32.mrb[0].mxu0
        %v5585 = vadd.f32 %v5359, %v5584
        %v5586 = vpop.f32.mrb[0].mxu0
        %v5587 = vadd.f32 %v5363, %v5586
        %5588 = vmatprep.mubr.bf16.mxu0 0
        %5589 = vmatmul.mubr.bf16.gmra.mrb[0].mxu0 %v5308
        %v5590 = vpop.f32.mrb[0].mxu0
        %v5591 = vadd.f32 %v5359, %v5590
        %v5592 = vpop.f32.mrb[0].mxu0
        %v5593 = vadd.f32 %v5363, %v5592
        %v5594 = vpop.f32.mrb[0].mxu0
        %v5595 = vadd.f32 %v5359, %v5594
        %v5596 = vpop.f32.mrb[0].mxu0
        %v5597 = vadd.f32 %v5363, %v5596
        %5598 = vmatprep.mubr.bf16.mxu0 0
        %5599 = vmatmul.mubr.bf16.gmra.mrb[0].mxu0 %v5309
        %v5600 = vpop.f32.mrb[0].mxu0
        %v5601 = vadd.f32 %v5359, %v5600
        %v5602 = vpop.f32.mrb[0].mxu0
        %v5603 = vadd.f32 %v5363, %v5602
        %v5604 = vpop.f32.mrb[0].mxu0
        %v5605 = vadd.f32 %v5359, %v5604
        %v5606 = vpop.f32.mrb[0].mxu0
        %v5607 = vadd.f32 %v5363, %v5606
        %5608 = vmatprep.mubr.bf16.mxu0 0
        %5609 = vmatmul.mubr.bf16.gmra.mrb[0].mxu0 %v5310
        %v5610 = vpop.f32.mrb[0].mxu0
        %v5611 = vadd.f32 %v5359, %v5610
        %v5612 = vpop.f32.mrb[0].mxu0
        %v5613 = vadd.f32 %v5363, %v5612
        %v5614 = vpop.f32.mrb[0].mxu0
        %v5615 = vadd.f32 %v5359, %v5614
        %v5616 = vpop.f32.mrb[0].mxu0
        %v5617 = vadd.f32 %v5363, %v5616
        %5618 = vmatprep.mubr.bf16.mxu0 0
        %5619 = vmatmul.mubr.bf16.gmra.mrb[0].mxu0 %v5311
        %v5620 = vpop.f32.mrb[0].mxu0
        %v5621 = vadd.f32 %v5359, %v5620
        %v5622 = vpop.f32.mrb[0].mxu0
        %v5623 = vadd.f32 %v5363, %v5622
        %v5624 = vpop.f32.mrb[0].mxu0
        %v5625 = vadd.f32 %v5359, %v5624
        %v5626 = vpop.f32.mrb[0].mxu0
        %v5627 = vadd.f32 %v5363, %v5626
        %5628 = vmatprep.mubr.bf16.mxu0 0
        %5629 = vmatmul.mubr.bf16.gmra.mrb[0].mxu0 %v5312
        %v5630 = vpop.f32.mrb[0].mxu0
        %v5631 = vadd.f32 %v5359, %v5630
        %v5632 = vpop.f32.mrb[0].mxu0
        %v5633 = vadd.f32 %v5363, %v5632
        %v5634 = vpop.f32.mrb[0].mxu0
        %v5635 = vadd.f32 %v5359, %v5634
        %v5636 = vpop.f32.mrb[0].mxu0
        %v5637 = vadd.f32 %v5363, %v5636
        %5638 = vmatprep.mubr.bf16.mxu0 0
        %5639 = vmatmul.mubr.bf16.gmra.mrb[0].mxu0 %v5313
        %v5640 = vpop.f32.mrb[0].mxu0
        %v5641 = vadd.f32 %v5359, %v5640
        %v5642 = vpop.f32.mrb[0].mxu0
        %v5643 = vadd.f32 %v5363, %v5642
        %v5644 = vpop.f32.mrb[0].mxu0
        %v5645 = vadd.f32 %v5359, %v5644
        %v5646 = vpop.f32.mrb[0].mxu0
        %v5647 = vadd.f32 %v5363, %v5646
        %5648 = vmatprep.mubr.bf16.mxu0 0
        %5649 = vmatmul.mubr.bf16.gmra.mrb[0].mxu0 %v5314
        %v5650 = vpop.f32.mrb[0].mxu0
        %v5651 = vadd.f32 %v5359, %v5650
        %v5652 = vpop.f32.mrb[0].mxu0
        %v5653 = vadd.f32 %v5363, %v5652
        %v5654 = vpop.f32.mrb[0].mxu0
        %v5655 = vadd.f32 %v5359, %v5654
        %v5656 = vpop.f32.mrb[0].mxu0
        %v5657 = vadd.f32 %v5363, %v5656
        %5658 = vmatprep.mubr.bf16.mxu0 0
        %5659 = vmatmul.mubr.bf16.gmra.mrb[0].mxu0 %v5315
        %v5660 = vpop.f32.mrb[0].mxu0
        %v5661 = vadd.f32 %v5359, %v5660
        %v5662 = vpop.f32.mrb[0].mxu0
        %v5663 = vadd.f32 %v5363, %v5662
        %v5664 = vpop.f32.mrb[0].mxu0
        %v5665 = vadd.f32 %v5359, %v5664
        %v5666 = vpop.f32.mrb[0].mxu0
        %v5667 = vadd.f32 %v5363, %v5666
        %5668 = vmatprep.mubr.bf16.mxu0 0
        %5669 = vmatmul.mubr.bf16.gmra.mrb[0].mxu0 %v5316
        %v5670 = vpop.f32.mrb[0].mxu0
        %v5671 = vadd.f32 %v5359, %v5670
        %v5672 = vpop.f32.mrb[0].mxu0
        %v5673 = vadd.f32 %v5363, %v5672
        %v5674 = vpop.f32.mrb[0].mxu0
        %v5675 = vadd.f32 %v5359, %v5674
        %v5676 = vpop.f32.mrb[0].mxu0
        %v5677 = vadd.f32 %v5363, %v5676
        %5678 = vmatprep.mubr.bf16.mxu0 0
        %5679 = vmatmul.mubr.bf16.gmra.mrb[0].mxu0 %v5317
        %v5680 = vpop.f32.mrb[0].mxu0
        %v5681 = vadd.f32 %v5359, %v5680
        %v5682 = vpop.f32.mrb[0].mxu0
        %v5683 = vadd.f32 %v5363, %v5682
        %v5684 = vpop.f32.mrb[0].mxu0
        %v5685 = vadd.f32 %v5359, %v5684
        %v5686 = vpop.f32.mrb[0].mxu0
        %v5687 = vadd.f32 %v5363, %v5686
        %5688 = vmatprep.mubr.bf16.mxu0 0
        %5689 = vmatmul.mubr.bf16.gmra.mrb[0].mxu0 %v5318
        %v5690 = vpop.f32.mrb[0].mxu0
        %v5691 = vadd.f32 %v5359, %v5690
        %v5692 = vpop.f32.mrb[0].mxu0
        %v5693 = vadd.f32 %v5363, %v5692
        %v5694 = vpop.f32.mrb[0].mxu0
        %v5695 = vadd.f32 %v5359, %v5694
        %v5696 = vpop.f32.mrb[0].mxu0
        %v5697 = vadd.f32 %v5363, %v5696
        %5698 = vmatprep.mubr.bf16.mxu0 0
        %5699 = vmatmul.mubr.bf16.gmra.mrb[0].mxu0 %v5319
        %v5700 = vpop.f32.mrb[0].mxu0
        %v5701 = vadd.f32 %v5359, %v5700
        %v5702 = vpop.f32.mrb[0].mxu0
        %v5703 = vadd.f32 %v5363, %v5702
        %v5704 = vpop.f32.mrb[0].mxu0
        %v5705 = vadd.f32 %v5359, %v5704
        %v5706 = vpop.f32.mrb[0].mxu0
        %v5707 = vadd.f32 %v5363, %v5706
        %5708 = vmatprep.mubr.bf16.mxu0 0
        %5709 = vmatmul.mubr.bf16.gmra.mrb[0].mxu0 %v5320
        %v5710 = vpop.f32.mrb[0].mxu0
        %v5711 = vadd.f32 %v5359, %v5710
        %v5712 = vpop.f32.mrb[0].mxu0
        %v5713 = vadd.f32 %v5363, %v5712
        %v5714 = vpop.f32.mrb[0].mxu0
        %v5715 = vadd.f32 %v5359, %v5714
        %v5716 = vpop.f32.mrb[0].mxu0
        %v5717 = vadd.f32 %v5363, %v5716
        %5718 = vmatprep.mubr.bf16.mxu0 0
        %5719 = vmatmul.mubr.bf16.gmra.mrb[0].mxu0 %v5321
        %v5720 = vpop.f32.mrb[0].mxu0
        %v5721 = vadd.f32 %v5359, %v5720
        %v5722 = vpop.f32.mrb[0].mxu0
        %v5723 = vadd.f32 %v5363, %v5722
        %v5724 = vpop.f32.mrb[0].mxu0
        %v5725 = vadd.f32 %v5359, %v5724
        %v5726 = vpop.f32.mrb[0].mxu0
        %v5727 = vadd.f32 %v5363, %v5726
        %5728 = vdwg.mxu0
        %5729 = vmatprep.subr.bf16.mxu0 %v5475
        %5730 = vmatpush1.bf16.msra.mxu0 %v5474
        %5731 = vmatprep.subr.bf16.mxu0 %v5479
        %5732 = vmatpush1.bf16.msra.mxu0 %v5478
        %5733 = vmatprep.subr.bf16.mxu0 %v5483
        %5734 = vmatpush1.bf16.msra.mxu0 %v5482
        %5735 = vmatprep.subr.bf16.mxu0 %v5487
        %5736 = vmatpush1.bf16.msra.mxu0 %v5486
        %5737 = vmatprep.subr.bf16.mxu0 %v5491
        %5738 = vmatpush1.bf16.msra.mxu0 %v5490
        %5739 = vmatprep.subr.bf16.mxu0 %v5495
        %5740 = vmatpush1.bf16.msra.mxu0 %v5494
        %5741 = vmatprep.subr.bf16.mxu0 %v5499
        %5742 = vmatpush1.bf16.msra.mxu0 %v5498
        %5743 = vmatprep.subr.bf16.mxu0 %v5503
        %5744 = vmatpush1.bf16.msra.mxu0 %v5502
        %5745 = vmatprep.subr.bf16.mxu0 0
        %5746 = vmatpush1.bf16.msra.mxu0 0
        %5747 = vmatprep.subr.bf16.mxu0 0
        %5748 = vmatpush1.bf16.msra.mxu0 0
        %5749 = vmatprep.subr.bf16.mxu0 0
        %5750 = vmatpush1.bf16.msra.mxu0 0
        %5751 = vmatprep.subr.bf16.mxu0 0
        %5752 = vmatpush1.bf16.msra.mxu0 0
        %5753 = vmatprep.subr.bf16.mxu0 0
        %5754 = vmatpush1.bf16.msra.mxu0 0
        %5755 = vmatprep.subr.bf16.mxu0 0
        %5756 = vmatpush1.bf16.msra.mxu0 0
        %5757 = vmatprep.subr.bf16.mxu0 0
        %5758 = vmatpush1.bf16.msra.mxu0 0
        %5759 = vmatprep.subr.bf16.mxu0 0
        %5760 = vmatpush1.bf16.msra.mxu0 0
        %5761 = vmatprep.mubr.bf16.mxu0 0
        %5762 = vmatmul.mubr.bf16.gmra.mrb[0].mxu0 %v5306
        %v5763 = vpop.f32.mrb[0].mxu0
        %v5764 = vadd.f32 %v5367, %v5763
        %v5765 = vpop.f32.mrb[0].mxu0
        %v5766 = vadd.f32 %v5371, %v5765
        %v5767 = vpop.f32.mrb[0].mxu0
        %v5768 = vadd.f32 %v5367, %v5767
        %v5769 = vpop.f32.mrb[0].mxu0
        %v5770 = vadd.f32 %v5371, %v5769
        %5771 = vmatprep.mubr.bf16.mxu0 0
        %5772 = vmatmul.mubr.bf16.gmra.mrb[0].mxu0 %v5307
        %v5773 = vpop.f32.mrb[0].mxu0
        %v5774 = vadd.f32 %v5367, %v5773
        %v5775 = vpop.f32.mrb[0].mxu0
        %v5776 = vadd.f32 %v5371, %v5775
        %v5777 = vpop.f32.mrb[0].mxu0
        %v5778 = vadd.f32 %v5367, %v5777
        %v5779 = vpop.f32.mrb[0].mxu0
        %v5780 = vadd.f32 %v5371, %v5779
        %5781 = vmatprep.mubr.bf16.mxu0 0
        %5782 = vmatmul.mubr.bf16.gmra.mrb[0].mxu0 %v5308
        %v5783 = vpop.f32.mrb[0].mxu0
        %v5784 = vadd.f32 %v5367, %v5783
        %v5785 = vpop.f32.mrb[0].mxu0
        %v5786 = vadd.f32 %v5371, %v5785
        %v5787 = vpop.f32.mrb[0].mxu0
        %v5788 = vadd.f32 %v5367, %v5787
        %v5789 = vpop.f32.mrb[0].mxu0
        %v5790 = vadd.f32 %v5371, %v5789
        %5791 = vmatprep.mubr.bf16.mxu0 0
        %5792 = vmatmul.mubr.bf16.gmra.mrb[0].mxu0 %v5309
        %v5793 = vpop.f32.mrb[0].mxu0
        %v5794 = vadd.f32 %v5367, %v5793
        %v5795 = vpop.f32.mrb[0].mxu0
        %v5796 = vadd.f32 %v5371, %v5795
        %v5797 = vpop.f32.mrb[0].mxu0
        %v5798 = vadd.f32 %v5367, %v5797
        %v5799 = vpop.f32.mrb[0].mxu0
        %v5800 = vadd.f32 %v5371, %v5799
        %5801 = vmatprep.mubr.bf16.mxu0 0
        %5802 = vmatmul.mubr.bf16.gmra.mrb[0].mxu0 %v5310
        %v5803 = vpop.f32.mrb[0].mxu0
        %v5804 = vadd.f32 %v5367, %v5803
        %v5805 = vpop.f32.mrb[0].mxu0
        %v5806 = vadd.f32 %v5371, %v5805
        %v5807 = vpop.f32.mrb[0].mxu0
        %v5808 = vadd.f32 %v5367, %v5807
        %v5809 = vpop.f32.mrb[0].mxu0
        %v5810 = vadd.f32 %v5371, %v5809
        %5811 = vmatprep.mubr.bf16.mxu0 0
        %5812 = vmatmul.mubr.bf16.gmra.mrb[0].mxu0 %v5311
        %v5813 = vpop.f32.mrb[0].mxu0
        %v5814 = vadd.f32 %v5367, %v5813
        %v5815 = vpop.f32.mrb[0].mxu0
        %v5816 = vadd.f32 %v5371, %v5815
        %v5817 = vpop.f32.mrb[0].mxu0
        %v5818 = vadd.f32 %v5367, %v5817
        %v5819 = vpop.f32.mrb[0].mxu0
        %v5820 = vadd.f32 %v5371, %v5819
        %5821 = vmatprep.mubr.bf16.mxu0 0
        %5822 = vmatmul.mubr.bf16.gmra.mrb[0].mxu0 %v5312
        %v5823 = vpop.f32.mrb[0].mxu0
        %v5824 = vadd.f32 %v5367, %v5823
        %v5825 = vpop.f32.mrb[0].mxu0
        %v5826 = vadd.f32 %v5371, %v5825
        %v5827 = vpop.f32.mrb[0].mxu0
        %v5828 = vadd.f32 %v5367, %v5827
        %v5829 = vpop.f32.mrb[0].mxu0
        %v5830 = vadd.f32 %v5371, %v5829
        %5831 = vmatprep.mubr.bf16.mxu0 0
        %5832 = vmatmul.mubr.bf16.gmra.mrb[0].mxu0 %v5313
        %v5833 = vpop.f32.mrb[0].mxu0
        %v5834 = vadd.f32 %v5367, %v5833
        %v5835 = vpop.f32.mrb[0].mxu0
        %v5836 = vadd.f32 %v5371, %v5835
        %v5837 = vpop.f32.mrb[0].mxu0
        %v5838 = vadd.f32 %v5367, %v5837
        %v5839 = vpop.f32.mrb[0].mxu0
        %v5840 = vadd.f32 %v5371, %v5839
        %5841 = vmatprep.mubr.bf16.mxu0 0
        %5842 = vmatmul.mubr.bf16.gmra.mrb[0].mxu0 %v5314
        %v5843 = vpop.f32.mrb[0].mxu0
        %v5844 = vadd.f32 %v5367, %v5843
        %v5845 = vpop.f32.mrb[0].mxu0
        %v5846 = vadd.f32 %v5371, %v5845
        %v5847 = vpop.f32.mrb[0].mxu0
        %v5848 = vadd.f32 %v5367, %v5847
        %v5849 = vpop.f32.mrb[0].mxu0
        %v5850 = vadd.f32 %v5371, %v5849
        %5851 = vmatprep.mubr.bf16.mxu0 0
        %5852 = vmatmul.mubr.bf16.gmra.mrb[0].mxu0 %v5315
        %v5853 = vpop.f32.mrb[0].mxu0
        %v5854 = vadd.f32 %v5367, %v5853
        %v5855 = vpop.f32.mrb[0].mxu0
        %v5856 = vadd.f32 %v5371, %v5855
        %v5857 = vpop.f32.mrb[0].mxu0
        %v5858 = vadd.f32 %v5367, %v5857
        %v5859 = vpop.f32.mrb[0].mxu0
        %v5860 = vadd.f32 %v5371, %v5859
        %5861 = vmatprep.mubr.bf16.mxu0 0
        %5862 = vmatmul.mubr.bf16.gmra.mrb[0].mxu0 %v5316
        %v5863 = vpop.f32.mrb[0].mxu0
        %v5864 = vadd.f32 %v5367, %v5863
        %v5865 = vpop.f32.mrb[0].mxu0
        %v5866 = vadd.f32 %v5371, %v5865
        %v5867 = vpop.f32.mrb[0].mxu0
        %v5868 = vadd.f32 %v5367, %v5867
        %v5869 = vpop.f32.mrb[0].mxu0
        %v5870 = vadd.f32 %v5371, %v5869
        %5871 = vmatprep.mubr.bf16.mxu0 0
        %5872 = vmatmul.mubr.bf16.gmra.mrb[0].mxu0 %v5317
        %v5873 = vpop.f32.mrb[0].mxu0
        %v5874 = vadd.f32 %v5367, %v5873
        %v5875 = vpop.f32.mrb[0].mxu0
        %v5876 = vadd.f32 %v5371, %v5875
        %v5877 = vpop.f32.mrb[0].mxu0
        %v5878 = vadd.f32 %v5367, %v5877
        %v5879 = vpop.f32.mrb[0].mxu0
        %v5880 = vadd.f32 %v5371, %v5879
        %5881 = vmatprep.mubr.bf16.mxu0 0
        %5882 = vmatmul.mubr.bf16.gmra.mrb[0].mxu0 %v5318
        %v5883 = vpop.f32.mrb[0].mxu0
        %v5884 = vadd.f32 %v5367, %v5883
        %v5885 = vpop.f32.mrb[0].mxu0
        %v5886 = vadd.f32 %v5371, %v5885
        %v5887 = vpop.f32.mrb[0].mxu0
        %v5888 = vadd.f32 %v5367, %v5887
        %v5889 = vpop.f32.mrb[0].mxu0
        %v5890 = vadd.f32 %v5371, %v5889
        %5891 = vmatprep.mubr.bf16.mxu0 0
        %5892 = vmatmul.mubr.bf16.gmra.mrb[0].mxu0 %v5319
        %v5893 = vpop.f32.mrb[0].mxu0
        %v5894 = vadd.f32 %v5367, %v5893
        %v5895 = vpop.f32.mrb[0].mxu0
        %v5896 = vadd.f32 %v5371, %v5895
        %v5897 = vpop.f32.mrb[0].mxu0
        %v5898 = vadd.f32 %v5367, %v5897
        %v5899 = vpop.f32.mrb[0].mxu0
        %v5900 = vadd.f32 %v5371, %v5899
        %5901 = vmatprep.mubr.bf16.mxu0 0
        %5902 = vmatmul.mubr.bf16.gmra.mrb[0].mxu0 %v5320
        %v5903 = vpop.f32.mrb[0].mxu0
        %v5904 = vadd.f32 %v5367, %v5903
        %v5905 = vpop.f32.mrb[0].mxu0
        %v5906 = vadd.f32 %v5371, %v5905
        %v5907 = vpop.f32.mrb[0].mxu0
        %v5908 = vadd.f32 %v5367, %v5907
        %v5909 = vpop.f32.mrb[0].mxu0
        %v5910 = vadd.f32 %v5371, %v5909
        %5911 = vmatprep.mubr.bf16.mxu0 0
        %5912 = vmatmul.mubr.bf16.gmra.mrb[0].mxu0 %v5321
        %v5913 = vpop.f32.mrb[0].mxu0
        %v5914 = vadd.f32 %v5367, %v5913
        %v5915 = vpop.f32.mrb[0].mxu0
        %v5916 = vadd.f32 %v5371, %v5915
        %v5917 = vpop.f32.mrb[0].mxu0
        %v5918 = vadd.f32 %v5367, %v5917
        %v5919 = vpop.f32.mrb[0].mxu0
        %v5920 = vadd.f32 %v5371, %v5919
        %5921 = vdwg.mxu0
        %5922 = vst [vmem:[%s431] sm:$0xff] %v5571
        %5923 = vst [vmem:[%s431 + $0x8] sm:$0xff] %v5573
        %5924 = vst [vmem:[%s431 + $0x10] sm:$0xff] %v5764
        %5925 = vst [vmem:[%s431 + $0x18] sm:$0xff] %v5766
        %5926 = vst [vmem:[%s431 + $0x20] sm:$0xff] %v5575
        %5927 = vst [vmem:[%s431 + $0x28] sm:$0xff] %v5577
        %5928 = vst [vmem:[%s431 + $0x30] sm:$0xff] %v5768
        %5929 = vst [vmem:[%s431 + $0x38] sm:$0xff] %v5770
        %5930 = vst [vmem:[%s431 + $0x40] sm:$0xff] %v5581
        %5931 = vst [vmem:[%s431 + $0x48] sm:$0xff] %v5583
        %5932 = vst [vmem:[%s431 + $0x50] sm:$0xff] %v5774
        %5933 = vst [vmem:[%s431 + $0x58] sm:$0xff] %v5776
        %5934 = vst [vmem:[%s431 + $0x60] sm:$0xff] %v5585
        %5935 = vst [vmem:[%s431 + $0x68] sm:$0xff] %v5587
        %5936 = vst [vmem:[%s431 + $0x70] sm:$0xff] %v5778
        %5937 = vst [vmem:[%s431 + $0x78] sm:$0xff] %v5780
        %5938 = vst [vmem:[%s431 + $0x80] sm:$0xff] %v5591
        %5939 = vst [vmem:[%s431 + $0x88] sm:$0xff] %v5593
        %5940 = vst [vmem:[%s431 + $0x90] sm:$0xff] %v5784
        %5941 = vst [vmem:[%s431 + $0x98] sm:$0xff] %v5786
        %5942 = vst [vmem:[%s431 + $0xa0] sm:$0xff] %v5595
        %5943 = vst [vmem:[%s431 + $0xa8] sm:$0xff] %v5597
        %5944 = vst [vmem:[%s431 + $0xb0] sm:$0xff] %v5788
        %5945 = vst [vmem:[%s431 + $0xb8] sm:$0xff] %v5790
        %5946 = vst [vmem:[%s431 + $0xc0] sm:$0xff] %v5601
        %5947 = vst [vmem:[%s431 + $0xc8] sm:$0xff] %v5603
        %5948 = vst [vmem:[%s431 + $0xd0] sm:$0xff] %v5794
        %5949 = vst [vmem:[%s431 + $0xd8] sm:$0xff] %v5796
        %5950 = vst [vmem:[%s431 + $0xe0] sm:$0xff] %v5605
        %5951 = vst [vmem:[%s431 + $0xe8] sm:$0xff] %v5607
        %5952 = vst [vmem:[%s431 + $0xf0] sm:$0xff] %v5798
        %5953 = vst [vmem:[%s431 + $0xf8] sm:$0xff] %v5800
        %5954 = vst [vmem:[%s431 + $0x100] sm:$0xff] %v5611
        %5955 = vst [vmem:[%s431 + $0x108] sm:$0xff] %v5613
        %5956 = vst [vmem:[%s431 + $0x110] sm:$0xff] %v5804
        %5957 = vst [vmem:[%s431 + $0x118] sm:$0xff] %v5806
        %5958 = vst [vmem:[%s431 + $0x120] sm:$0xff] %v5615
        %5959 = vst [vmem:[%s431 + $0x128] sm:$0xff] %v5617
        %5960 = vst [vmem:[%s431 + $0x130] sm:$0xff] %v5808
        %5961 = vst [vmem:[%s431 + $0x138] sm:$0xff] %v5810
        %5962 = vst [vmem:[%s431 + $0x140] sm:$0xff] %v5621
        %5963 = vst [vmem:[%s431 + $0x148] sm:$0xff] %v5623
        %5964 = vst [vmem:[%s431 + $0x150] sm:$0xff] %v5814
        %5965 = vst [vmem:[%s431 + $0x158] sm:$0xff] %v5816
        %5966 = vst [vmem:[%s431 + $0x160] sm:$0xff] %v5625
        %5967 = vst [vmem:[%s431 + $0x168] sm:$0xff] %v5627
        %5968 = vst [vmem:[%s431 + $0x170] sm:$0xff] %v5818
        %5969 = vst [vmem:[%s431 + $0x178] sm:$0xff] %v5820
        %5970 = vst [vmem:[%s431 + $0x180] sm:$0xff] %v5631
        %5971 = vst [vmem:[%s431 + $0x188] sm:$0xff] %v5633
        %5972 = vst [vmem:[%s431 + $0x190] sm:$0xff] %v5824
        %5973 = vst [vmem:[%s431 + $0x198] sm:$0xff] %v5826
        %5974 = vst [vmem:[%s431 + $0x1a0] sm:$0xff] %v5635
        %5975 = vst [vmem:[%s431 + $0x1a8] sm:$0xff] %v5637
        %5976 = vst [vmem:[%s431 + $0x1b0] sm:$0xff] %v5828
        %5977 = vst [vmem:[%s431 + $0x1b8] sm:$0xff] %v5830
        %5978 = vst [vmem:[%s431 + $0x1c0] sm:$0xff] %v5641
        %5979 = vst [vmem:[%s431 + $0x1c8] sm:$0xff] %v5643
        %5980 = vst [vmem:[%s431 + $0x1d0] sm:$0xff] %v5834
        %5981 = vst [vmem:[%s431 + $0x1d8] sm:$0xff] %v5836
        %5982 = vst [vmem:[%s431 + $0x1e0] sm:$0xff] %v5645
        %5983 = vst [vmem:[%s431 + $0x1e8] sm:$0xff] %v5647
        %5984 = vst [vmem:[%s431 + $0x1f0] sm:$0xff] %v5838
        %5985 = vst [vmem:[%s431 + $0x1f8] sm:$0xff] %v5840
        %5986 = vst [vmem:[%s431 + $0x200] sm:$0xff] %v5651
        %5987 = vst [vmem:[%s431 + $0x208] sm:$0xff] %v5653
        %5988 = vst [vmem:[%s431 + $0x210] sm:$0xff] %v5844
        %5989 = vst [vmem:[%s431 + $0x218] sm:$0xff] %v5846
        %5990 = vst [vmem:[%s431 + $0x220] sm:$0xff] %v5655
        %5991 = vst [vmem:[%s431 + $0x228] sm:$0xff] %v5657
        %5992 = vst [vmem:[%s431 + $0x230] sm:$0xff] %v5848
        %5993 = vst [vmem:[%s431 + $0x238] sm:$0xff] %v5850
        %5994 = vst [vmem:[%s431 + $0x240] sm:$0xff] %v5661
        %5995 = vst [vmem:[%s431 + $0x248] sm:$0xff] %v5663
        %5996 = vst [vmem:[%s431 + $0x250] sm:$0xff] %v5854
        %5997 = vst [vmem:[%s431 + $0x258] sm:$0xff] %v5856
        %5998 = vst [vmem:[%s431 + $0x260] sm:$0xff] %v5665
        %5999 = vst [vmem:[%s431 + $0x268] sm:$0xff] %v5667
        %6000 = vst [vmem:[%s431 + $0x270] sm:$0xff] %v5858
        %6001 = vst [vmem:[%s431 + $0x278] sm:$0xff] %v5860
        %6002 = vst [vmem:[%s431 + $0x280] sm:$0xff] %v5671
        %6003 = vst [vmem:[%s431 + $0x288] sm:$0xff] %v5673
        %6004 = vst [vmem:[%s431 + $0x290] sm:$0xff] %v5864
        %6005 = vst [vmem:[%s431 + $0x298] sm:$0xff] %v5866
        %6006 = vst [vmem:[%s431 + $0x2a0] sm:$0xff] %v5675
        %6007 = vst [vmem:[%s431 + $0x2a8] sm:$0xff] %v5677
        %6008 = vst [vmem:[%s431 + $0x2b0] sm:$0xff] %v5868
        %6009 = vst [vmem:[%s431 + $0x2b8] sm:$0xff] %v5870
        %6010 = vst [vmem:[%s431 + $0x2c0] sm:$0xff] %v5681
        %6011 = vst [vmem:[%s431 + $0x2c8] sm:$0xff] %v5683
        %6012 = vst [vmem:[%s431 + $0x2d0] sm:$0xff] %v5874
        %6013 = vst [vmem:[%s431 + $0x2d8] sm:$0xff] %v5876
        %6014 = vst [vmem:[%s431 + $0x2e0] sm:$0xff] %v5685
        %6015 = vst [vmem:[%s431 + $0x2e8] sm:$0xff] %v5687
        %6016 = vst [vmem:[%s431 + $0x2f0] sm:$0xff] %v5878
        %6017 = vst [vmem:[%s431 + $0x2f8] sm:$0xff] %v5880
        %6018 = vst [vmem:[%s431 + $0x300] sm:$0xff] %v5691
        %6019 = vst [vmem:[%s431 + $0x308] sm:$0xff] %v5693
        %6020 = vst [vmem:[%s431 + $0x310] sm:$0xff] %v5884
        %6021 = vst [vmem:[%s431 + $0x318] sm:$0xff] %v5886
        %6022 = vst [vmem:[%s431 + $0x320] sm:$0xff] %v5695
        %6023 = vst [vmem:[%s431 + $0x328] sm:$0xff] %v5697
        %6024 = vst [vmem:[%s431 + $0x330] sm:$0xff] %v5888
        %6025 = vst [vmem:[%s431 + $0x338] sm:$0xff] %v5890
        %6026 = vst [vmem:[%s431 + $0x340] sm:$0xff] %v5701
        %6027 = vst [vmem:[%s431 + $0x348] sm:$0xff] %v5703
        %6028 = vst [vmem:[%s431 + $0x350] sm:$0xff] %v5894
        %6029 = vst [vmem:[%s431 + $0x358] sm:$0xff] %v5896
        %6030 = vst [vmem:[%s431 + $0x360] sm:$0xff] %v5705
        %6031 = vst [vmem:[%s431 + $0x368] sm:$0xff] %v5707
        %6032 = vst [vmem:[%s431 + $0x370] sm:$0xff] %v5898
        %6033 = vst [vmem:[%s431 + $0x378] sm:$0xff] %v5900
        %6034 = vst [vmem:[%s431 + $0x380] sm:$0xff] %v5711
        %6035 = vst [vmem:[%s431 + $0x388] sm:$0xff] %v5713
        %6036 = vst [vmem:[%s431 + $0x390] sm:$0xff] %v5904
        %6037 = vst [vmem:[%s431 + $0x398] sm:$0xff] %v5906
        %6038 = vst [vmem:[%s431 + $0x3a0] sm:$0xff] %v5715
        %6039 = vst [vmem:[%s431 + $0x3a8] sm:$0xff] %v5717
        %6040 = vst [vmem:[%s431 + $0x3b0] sm:$0xff] %v5908
        %6041 = vst [vmem:[%s431 + $0x3b8] sm:$0xff] %v5910
        %6042 = vst [vmem:[%s431 + $0x3c0] sm:$0xff] %v5721
        %6043 = vst [vmem:[%s431 + $0x3c8] sm:$0xff] %v5723
        %6044 = vst [vmem:[%s431 + $0x3d0] sm:$0xff] %v5914
        %6045 = vst [vmem:[%s431 + $0x3d8] sm:$0xff] %v5916
        %6046 = vst [vmem:[%s431 + $0x3e0] sm:$0xff] %v5725
        %6047 = vst [vmem:[%s431 + $0x3e8] sm:$0xff] %v5727
        %6048 = vst [vmem:[%s431 + $0x3f0] sm:$0xff] %v5918
        %6049 = vst [vmem:[%s431 + $0x3f8] sm:$0xff] %v5920
        %s6050 = sand.u32 %s230, 1
        %s6051 = scalar_lea.sflag [#allocation4], %s6050
        %s6052 = sand.u32 %s230, 1
        %s6053 = smul.addr %s6052, 1024
        %s6054 = scalar_lea.vmem [#allocation16], %s6053
        // Predicated region
        $region89: #{tpu_custom_call.1} parent=55 // pred_check
          %p6055 = pneg %p240
        $region90: #{tpu_custom_call.1} parent=55 // pred_check_branch
          %6057 = sbr.rel (%p6055) target = $region92
        $region91: #{tpu_custom_call.1} parent=55 // pred_region
          %s6058 = smul.u32 32, %s28
          %s6060 = ssub.s32 16384, 16384
          %6061 = vsyncadd %s6051, %s6060
          %s6062 = smul.addr %s6058, 4
          %s6063 = smul.addr %s6062, 128
          %s6064 = scalar_lea.hbm %s9, %s6063
          %s6065 = sshll.u32 %s6054, 4
          %s6066 = int_to_ptr.vmem [resolvable:$true] %s6065
          %6071 = dma.vmem_to_hbm [thread:$0]  %s6066, 16384, %s6064, %s6051, 512, 512, 32
        $region92: #{tpu_custom_call.1} parent=55 // pred_fallthru
          _
      $region56: #{tpu_custom_call.1} parent=5 // pred_fallthru
        _
      %p6072 = scmp.le.s32.totalorder 2, %s23
      // Predicated region
      $region93: #{tpu_custom_call.1} parent=5 // pred_check
        %p6073 = pneg %p6072
      $region94: #{tpu_custom_call.1} parent=5 // pred_check_branch
        %6075 = sbr.rel (%p6073) target = $region96
      $region95: #{tpu_custom_call.1} parent=5 // pred_region
        %s6076 = ssub.s32 %s23, 2
        // Predicated region
        $region97: #{tpu_custom_call.1} parent=95 // pred_check
          %p6077 = pneg %p246
        $region98: #{tpu_custom_call.1} parent=95 // pred_check_branch
          %6079 = sbr.rel (%p6077) target = $region100
        $region99: #{tpu_custom_call.1} parent=95 // pred_region
          %s6080 = sand.u32 %s231, 1
          %s6081 = scalar_lea.sflag [#allocation4], %s6080
          %s6082 = sand.u32 %s231, 1
          %s6083 = smul.addr %s6082, 1024
          %s6084 = scalar_lea.vmem [#allocation16], %s6083
          %6085 = dma.done %s6081, 16384
        $region100: #{tpu_custom_call.1} parent=95 // pred_fallthru
          _
      $region96: #{tpu_custom_call.1} parent=5 // pred_fallthru
        _
    $region6: #{tpu_custom_call.1} parent=1 // loop_footer
      %s27 = sadd.s32 1, %s23
    $region7: #{tpu_custom_call.1} parent=1 // loop_footer_branch
      %22 = sbr.rel target = $region3
    $region8: #{tpu_custom_call.1} parent=1 // loop_exit
      _
    %6086 = vsyncpa [#allocation3], 1
    %s6087 = scalar_lea.sflag [#allocation3], 1
    %6088 = vsyncpa %s6087, 1
    %6089 = vsyncpa [#allocation6], 1
    %6090 = vsyncpa [#allocation9], 1
    %6091 = vsyncpa [#allocation12], 1
    %6092 = vsyncpa [#allocation15], 1
    %6093 = vsyncpa [#allocation4], 1
    %s6094 = scalar_lea.sflag [#allocation4], 1
    %6095 = vsyncpa %s6094, 1

</llo_original>
